<compile_context>
chip_gen: v6e
topology: v6e:2x2x1
jax: 0.10.0
libtpu: 0.0.40
codegen_flags: <defaults>
</compile_context>

<pallas_src>
import functools
import math

import jax
import jax.numpy as jnp
from jax import lax
from jax.experimental import pallas as pl
from jax.experimental.pallas import tpu as pltpu


_INV_SQRT2 = 1.0 / math.sqrt(2.0)


def _layernorm_f32(v, w, b, eps=1e-5):
    # Keep LayerNorm arithmetic in f32 (upcast once); bf16 only at MXU inputs.
    v = v.astype(jnp.float32)
    mu = jnp.mean(v, axis=-1, keepdims=True)
    var = jnp.mean((v - mu) ** 2, axis=-1, keepdims=True)
    return (v - mu) * lax.rsqrt(var + eps) * w + b


def _gelu_exact(x):
    # torch.nn.GELU default: exact erf formulation (kept for semantic fidelity).
    return 0.5 * x * (1.0 + lax.erf(x * _INV_SQRT2))


def block_kernel(x_ref, ln1w_ref, ln1b_ref, qw_ref, kw_ref, vw_ref,
                 projw_ref, projb_ref, ln2w_ref, ln2b_ref,
                 fc1w_ref, fc1b_ref, fc2w_ref, fc2b_ref,
                 o_ref, *, num_heads):
    # One grid step == one batch element; the whole block is fused in VMEM.
    x = x_ref[0].astype(jnp.float32)            # (N, C)
    N, C = x.shape
    hd = C // num_heads

    # ---------------- Attention branch ----------------
    h = _layernorm_f32(x, ln1w_ref[...], ln1b_ref[...])
    h_b = h.astype(jnp.bfloat16)                 # bf16 MXU inputs, f32 accum

    # qkv weights are pre-split; the 1/sqrt(hd) scale is already folded into qw
    q = jnp.dot(h_b, qw_ref[...], preferred_element_type=jnp.float32)  # (N, C)
    k = jnp.dot(h_b, kw_ref[...], preferred_element_type=jnp.float32)
    v = jnp.dot(h_b, vw_ref[...], preferred_element_type=jnp.float32)

    qh = q.astype(jnp.bfloat16).reshape(N, num_heads, hd)
    kh = k.astype(jnp.bfloat16).reshape(N, num_heads, hd)
    vh = v.astype(jnp.bfloat16).reshape(N, num_heads, hd)

    # scores (scale pre-folded into q); softmax math in f32
    s = jnp.einsum('qhd,khd->hqk', qh, kh,
                   preferred_element_type=jnp.float32)          # (H, N, N)
    s = s - jnp.max(s, axis=-1, keepdims=True)
    p = jnp.exp(s)
    p = p * pl.reciprocal(jnp.sum(p, axis=-1, keepdims=True), approx=True)

    o = jnp.einsum('hqk,khd->qhd', p.astype(jnp.bfloat16), vh,
                   preferred_element_type=jnp.float32)          # (N, H, hd)
    o = o.reshape(N, C)
    attn_out = jnp.dot(o.astype(jnp.bfloat16), projw_ref[...],
                       preferred_element_type=jnp.float32) + projb_ref[...]

    x1 = x + attn_out                                           # residual 1

    # ---------------- MLP branch ----------------
    h2 = _layernorm_f32(x1, ln2w_ref[...], ln2b_ref[...])
    m = jnp.dot(h2.astype(jnp.bfloat16), fc1w_ref[...],
                preferred_element_type=jnp.float32) + fc1b_ref[...]
    m = _gelu_exact(m)
    m = jnp.dot(m.astype(jnp.bfloat16), fc2w_ref[...],
                preferred_element_type=jnp.float32) + fc2b_ref[...]

    o_ref[0] = (x1 + m).astype(o_ref.dtype)                     # residual 2


def _full_spec(shape, pipeline_mode=None):
    kwargs = {}
    if pipeline_mode is not None:
        kwargs["pipeline_mode"] = pipeline_mode
    return pl.BlockSpec(shape, lambda b: (0,) * len(shape), **kwargs)


def _build_call(B, N, C, H, x_dtype, num_heads, single_buffer_weights):
    # Grid-invariant weights: single-buffer them when supported so they are
    # not double-buffered across grid steps (halves weight VMEM footprint —
    # the difference between fitting and spilling on v7x's 64 MiB VMEM/TC).
    pm = pl.Buffered(1) if single_buffer_weights else None
    w = lambda shape: _full_spec(shape, pm)

    return pl.pallas_call(
        functools.partial(block_kernel, num_heads=num_heads),
        out_shape=jax.ShapeDtypeStruct((B, N, C), x_dtype),
        grid=(B,),
        in_specs=[
            pl.BlockSpec((1, N, C), lambda b: (b, 0, 0)),   # x
            w((1, C)), w((1, C)),                           # ln1 w / b
            w((C, C)), w((C, C)), w((C, C)),                # q / k / v weights
            w((C, C)), w((1, C)),                           # proj w / b
            w((1, C)), w((1, C)),                           # ln2 w / b
            w((C, H)), w((1, H)),                           # fc1 w / b
            w((H, C)), w((1, C)),                           # fc2 w / b
        ],
        out_specs=pl.BlockSpec((1, N, C), lambda b: (b, 0, 0)),
        compiler_params=pltpu.CompilerParams(
            dimension_semantics=("parallel",),
            # Scoped-VMEM default (16/32 MiB) is far below what real ViT sizes
            # need; 64 MiB fits within every current chip's physical VMEM.
            vmem_limit_bytes=64 * 1024 * 1024,
        ),
    )


def vit_block(x, params, num_heads):
    B, N, C = x.shape
    H = params['fc1_w'].shape[1]
    hd = C // num_heads
    scale = hd ** -0.5

    wdt = jnp.bfloat16
    f32 = lambda a: a.astype(jnp.float32)

    # Pre-split the fused QKV weight into three (C, C) slabs (avoids lane-
    # slicing the (N, 3C) matmul output inside the kernel) and fold the
    # attention scale into the Q columns (free at run time).
    qkv_w = params['qkv_w']
    q_w = (qkv_w[:, 0 * C:1 * C] * scale).astype(wdt)
    k_w = qkv_w[:, 1 * C:2 * C].astype(wdt)
    v_w = qkv_w[:, 2 * C:3 * C].astype(wdt)

    args = (
        x,
        f32(params['ln1_w']), f32(params['ln1_b']),
        q_w, k_w, v_w,
        params['proj_w'].astype(wdt), f32(params['proj_b']),
        f32(params['ln2_w']), f32(params['ln2_b']),
        params['fc1_w'].astype(wdt), f32(params['fc1_b']),
        params['fc2_w'].astype(wdt), f32(params['fc2_b']),
    )

    try:
        return _build_call(B, N, C, H, x.dtype, num_heads, True)(*args)
    except Exception:
        # Installed JAX/Mosaic does not accept single-buffered pipeline_mode:
        # fall back to default (double-buffered) weight pipelining.
        return _build_call(B, N, C, H, x.dtype, num_heads, False)(*args)


# ---------------- pure-JAX reference for sanity check ----------------
def vit_block_ref(x, p, num_heads):
    B, N, C = x.shape
    hd = C // num_heads
    scale = hd ** -0.5

    def ln(v, w, b):
        mu = v.mean(-1, keepdims=True)
        var = ((v - mu) ** 2).mean(-1, keepdims=True)
        return (v - mu) / jnp.sqrt(var + 1e-5) * w[0] + b[0]

    h = ln(x, p['ln1_w'], p['ln1_b'])
    qkv = h @ p['qkv_w']
    qkv = qkv.reshape(B, N, 3, num_heads, hd).transpose(2, 0, 3, 1, 4)
    q, k, v = qkv[0], qkv[1], qkv[2]                 # (B, H, N, hd)
    attn = jax.nn.softmax((q @ jnp.swapaxes(k, -2, -1)) * scale, axis=-1)
    o = (attn @ v).transpose(0, 2, 1, 3).reshape(B, N, C)
    x1 = x + (o @ p['proj_w'] + p['proj_b'][0])
    h2 = ln(x1, p['ln2_w'], p['ln2_b'])
    m = jax.nn.gelu(h2 @ p['fc1_w'] + p['fc1_b'][0], approximate=False)
    m = m @ p['fc2_w'] + p['fc2_b'][0]
    return x1 + m


if __name__ == "__main__":
    B, N, C = 2, 16, 64
    num_heads = 4
    mlp_ratio = 4
    H = int(C * mlp_ratio)

    key = jax.random.PRNGKey(0)
    ks = jax.random.split(key, 12)

    x = jax.random.normal(ks[0], (B, N, C), dtype=jnp.float32)

    params = {
        'ln1_w': 1.0 + 0.1 * jax.random.normal(ks[8], (1, C), jnp.float32),
        'ln1_b': 0.05 * jax.random.normal(ks[9], (1, C), jnp.float32),
        # nn.Linear(dim, 3*dim, bias=False) -> stored (in, out)
        'qkv_w': 0.05 * jax.random.normal(ks[1], (C, 3 * C), jnp.float32),
        'proj_w': 0.05 * jax.random.normal(ks[2], (C, C), jnp.float32),
        'proj_b': 0.01 * jax.random.normal(ks[3], (1, C), jnp.float32),
        'ln2_w': 1.0 + 0.1 * jax.random.normal(ks[10], (1, C), jnp.float32),
        'ln2_b': 0.05 * jax.random.normal(ks[11], (1, C), jnp.float32),
        'fc1_w': 0.05 * jax.random.normal(ks[4], (C, H), jnp.float32),
        'fc1_b': 0.01 * jax.random.normal(ks[5], (1, H), jnp.float32),
        'fc2_w': 0.05 * jax.random.normal(ks[6], (H, C), jnp.float32),
        'fc2_b': 0.01 * jax.random.normal(ks[7], (1, C), jnp.float32),
    }

    out = vit_block(x, params, num_heads)
    out = jax.block_until_ready(out)

    ref = vit_block_ref(x, params, num_heads)
    assert out.shape == (B, N, C)
    err = jnp.max(jnp.abs(out - ref))
    # bf16 MXU inputs + approximate reciprocal -> loosened tolerance vs f32 ref.
    assert jnp.allclose(out, ref, atol=2e-2, rtol=2e-2), f"max abs err {err}"

    print("KERNEL_OK")
</pallas_src>

<mosaic_0001>
module attributes {stable_mosaic.version = 11 : i64} {
  func.func @block_kernel(%arg0: i32, %arg1: memref<1x16x64xf32, #tpu.memory_space<vmem>>, %arg2: memref<1x64xf32, #tpu.memory_space<vmem>>, %arg3: memref<1x64xf32, #tpu.memory_space<vmem>>, %arg4: memref<64x64xbf16, #tpu.memory_space<vmem>>, %arg5: memref<64x64xbf16, #tpu.memory_space<vmem>>, %arg6: memref<64x64xbf16, #tpu.memory_space<vmem>>, %arg7: memref<64x64xbf16, #tpu.memory_space<vmem>>, %arg8: memref<1x64xf32, #tpu.memory_space<vmem>>, %arg9: memref<1x64xf32, #tpu.memory_space<vmem>>, %arg10: memref<1x64xf32, #tpu.memory_space<vmem>>, %arg11: memref<64x256xbf16, #tpu.memory_space<vmem>>, %arg12: memref<1x256xf32, #tpu.memory_space<vmem>>, %arg13: memref<256x64xbf16, #tpu.memory_space<vmem>>, %arg14: memref<1x64xf32, #tpu.memory_space<vmem>>, %arg15: memref<1x16x64xf32, #tpu.memory_space<vmem>>) attributes {dimension_semantics = [#tpu.dimension_semantics<parallel>], iteration_bounds = array<i64: 2>, scalar_prefetch = 0 : i64, scratch_operands = 0 : i64, tpu.core_type = #tpu.core_type<tc>, window_params = [{transform_indices = @transform_0, window_bounds = array<i64: 1, 16, 64>}, {pipeline_mode = #tpu.pipeline_mode<synchronous>, transform_indices = @transform_1, window_bounds = array<i64: 1, 64>}, {pipeline_mode = #tpu.pipeline_mode<synchronous>, transform_indices = @transform_2, window_bounds = array<i64: 1, 64>}, {pipeline_mode = #tpu.pipeline_mode<synchronous>, transform_indices = @transform_3, window_bounds = array<i64: 64, 64>}, {pipeline_mode = #tpu.pipeline_mode<synchronous>, transform_indices = @transform_4, window_bounds = array<i64: 64, 64>}, {pipeline_mode = #tpu.pipeline_mode<synchronous>, transform_indices = @transform_5, window_bounds = array<i64: 64, 64>}, {pipeline_mode = #tpu.pipeline_mode<synchronous>, transform_indices = @transform_6, window_bounds = array<i64: 64, 64>}, {pipeline_mode = #tpu.pipeline_mode<synchronous>, transform_indices = @transform_7, window_bounds = array<i64: 1, 64>}, {pipeline_mode = #tpu.pipeline_mode<synchronous>, transform_indices = @transform_8, window_bounds = array<i64: 1, 64>}, {pipeline_mode = #tpu.pipeline_mode<synchronous>, transform_indices = @transform_9, window_bounds = array<i64: 1, 64>}, {pipeline_mode = #tpu.pipeline_mode<synchronous>, transform_indices = @transform_10, window_bounds = array<i64: 64, 256>}, {pipeline_mode = #tpu.pipeline_mode<synchronous>, transform_indices = @transform_11, window_bounds = array<i64: 1, 256>}, {pipeline_mode = #tpu.pipeline_mode<synchronous>, transform_indices = @transform_12, window_bounds = array<i64: 256, 64>}, {pipeline_mode = #tpu.pipeline_mode<synchronous>, transform_indices = @transform_13, window_bounds = array<i64: 1, 64>}, {transform_indices = @transform_14, window_bounds = array<i64: 1, 16, 64>}]} {
    %c0 = arith.constant 0 : index
    %c0_0 = arith.constant 0 : index
    %c0_1 = arith.constant 0 : index
    %0 = vector.load %arg1[%c0, %c0_0, %c0_1] : memref<1x16x64xf32, #tpu.memory_space<vmem>>, vector<1x16x64xf32>
    %1 = vector.shape_cast %0 : vector<1x16x64xf32> to vector<16x64xf32>
    %c0_2 = arith.constant 0 : index
    %c0_3 = arith.constant 0 : index
    %2 = vector.load %arg2[%c0_2, %c0_3] : memref<1x64xf32, #tpu.memory_space<vmem>>, vector<1x64xf32>
    %c0_4 = arith.constant 0 : index
    %c0_5 = arith.constant 0 : index
    %3 = vector.load %arg3[%c0_4, %c0_5] : memref<1x64xf32, #tpu.memory_space<vmem>>, vector<1x64xf32>
    %cst = arith.constant dense<0.000000e+00> : vector<16xf32>
    %4 = vector.multi_reduction <add>, %1, %cst [1] : vector<16x64xf32> to vector<16xf32>
    %5 = vector.shape_cast %4 : vector<16xf32> to vector<16x1xf32>
    %cst_6 = arith.constant 6.400000e+01 : f32
    %6 = vector.broadcast %cst_6 : f32 to vector<16x1xf32>
    %7 = arith.divf %5, %6 : vector<16x1xf32>
    %8 = vector.broadcast %7 : vector<16x1xf32> to vector<16x64xf32>
    %9 = arith.subf %1, %8 : vector<16x64xf32>
    %10 = arith.mulf %9, %9 : vector<16x64xf32>
    %cst_7 = arith.constant dense<0.000000e+00> : vector<16xf32>
    %11 = vector.multi_reduction <add>, %10, %cst_7 [1] : vector<16x64xf32> to vector<16xf32>
    %12 = vector.shape_cast %11 : vector<16xf32> to vector<16x1xf32>
    %cst_8 = arith.constant 6.400000e+01 : f32
    %13 = vector.broadcast %cst_8 : f32 to vector<16x1xf32>
    %14 = arith.divf %12, %13 : vector<16x1xf32>
    %15 = vector.broadcast %7 : vector<16x1xf32> to vector<16x64xf32>
    %16 = arith.subf %1, %15 : vector<16x64xf32>
    %cst_9 = arith.constant 9.99999974E-6 : f32
    %17 = vector.broadcast %cst_9 : f32 to vector<16x1xf32>
    %18 = arith.addf %14, %17 : vector<16x1xf32>
    %19 = math.rsqrt %18 : vector<16x1xf32>
    %20 = vector.broadcast %19 : vector<16x1xf32> to vector<16x64xf32>
    %21 = arith.mulf %16, %20 : vector<16x64xf32>
    %22 = vector.broadcast %2 : vector<1x64xf32> to vector<16x64xf32>
    %23 = arith.mulf %21, %22 : vector<16x64xf32>
    %24 = vector.broadcast %3 : vector<1x64xf32> to vector<16x64xf32>
    %25 = arith.addf %23, %24 : vector<16x64xf32>
    %26 = arith.truncf %25 : vector<16x64xf32> to vector<16x64xbf16>
    %c0_10 = arith.constant 0 : index
    %c0_11 = arith.constant 0 : index
    %27 = vector.load %arg4[%c0_10, %c0_11] : memref<64x64xbf16, #tpu.memory_space<vmem>>, vector<64x64xbf16>
    %cst_12 = arith.constant dense<0.000000e+00> : vector<16x64xf32>
    %28 = tpu.matmul %26, %27, %cst_12 {dimension_numbers = #tpu.dot_dimension_numbers<[1], [0], [0], [1], [0, 0, 1, 1], [], []>} : vector<16x64xbf16>, vector<64x64xbf16>, vector<16x64xf32> -> vector<16x64xf32>
    %c0_13 = arith.constant 0 : index
    %c0_14 = arith.constant 0 : index
    %29 = vector.load %arg5[%c0_13, %c0_14] : memref<64x64xbf16, #tpu.memory_space<vmem>>, vector<64x64xbf16>
    %cst_15 = arith.constant dense<0.000000e+00> : vector<16x64xf32>
    %30 = tpu.matmul %26, %29, %cst_15 {dimension_numbers = #tpu.dot_dimension_numbers<[1], [0], [0], [1], [0, 0, 1, 1], [], []>} : vector<16x64xbf16>, vector<64x64xbf16>, vector<16x64xf32> -> vector<16x64xf32>
    %c0_16 = arith.constant 0 : index
    %c0_17 = arith.constant 0 : index
    %31 = vector.load %arg6[%c0_16, %c0_17] : memref<64x64xbf16, #tpu.memory_space<vmem>>, vector<64x64xbf16>
    %cst_18 = arith.constant dense<0.000000e+00> : vector<16x64xf32>
    %32 = tpu.matmul %26, %31, %cst_18 {dimension_numbers = #tpu.dot_dimension_numbers<[1], [0], [0], [1], [0, 0, 1, 1], [], []>} : vector<16x64xbf16>, vector<64x64xbf16>, vector<16x64xf32> -> vector<16x64xf32>
    %33 = arith.truncf %28 : vector<16x64xf32> to vector<16x64xbf16>
    %34 = vector.shape_cast %33 : vector<16x64xbf16> to vector<16x4x16xbf16>
    %35 = arith.truncf %30 : vector<16x64xf32> to vector<16x64xbf16>
    %36 = vector.shape_cast %35 : vector<16x64xbf16> to vector<16x4x16xbf16>
    %37 = arith.truncf %32 : vector<16x64xf32> to vector<16x64xbf16>
    %38 = vector.shape_cast %37 : vector<16x64xbf16> to vector<16x4x16xbf16>
    "tpu.trace_start"() <{level = 10 : i32, message = "qhd,khd->hqk"}> : () -> ()
    %cst_19 = arith.constant dense<0.000000e+00> : vector<4x16x16xf32>
    %39 = tpu.matmul %34, %36, %cst_19 {dimension_numbers = #tpu.dot_dimension_numbers<[2], [2], [0], [0], [0, 1, 0, 0, 1, 0], [1], [1]>} : vector<16x4x16xbf16>, vector<16x4x16xbf16>, vector<4x16x16xf32> -> vector<4x16x16xf32>
    "tpu.trace_stop"() : () -> ()
    %cst_20 = arith.constant dense<0xFF800000> : vector<4x16xf32>
    %40 = vector.multi_reduction <maximumf>, %39, %cst_20 [2] : vector<4x16x16xf32> to vector<4x16xf32>
    %41 = vector.shape_cast %40 : vector<4x16xf32> to vector<4x16x1xf32>
    %42 = vector.broadcast %41 : vector<4x16x1xf32> to vector<4x16x16xf32>
    %43 = arith.subf %39, %42 : vector<4x16x16xf32>
    %44 = math.exp %43 : vector<4x16x16xf32>
    %cst_21 = arith.constant dense<0.000000e+00> : vector<4x16xf32>
    %45 = vector.multi_reduction <add>, %44, %cst_21 [2] : vector<4x16x16xf32> to vector<4x16xf32>
    %46 = vector.shape_cast %45 : vector<4x16xf32> to vector<4x16x1xf32>
    %47 = tpu.reciprocal %46 {approx = true} : vector<4x16x1xf32> -> vector<4x16x1xf32>
    %48 = vector.broadcast %47 : vector<4x16x1xf32> to vector<4x16x16xf32>
    %49 = arith.mulf %44, %48 : vector<4x16x16xf32>
    %50 = arith.truncf %49 : vector<4x16x16xf32> to vector<4x16x16xbf16>
    "tpu.trace_start"() <{level = 10 : i32, message = "hqk,khd->qhd"}> : () -> ()
    %cst_22 = arith.constant dense<0.000000e+00> : vector<4x16x16xf32>
    %51 = tpu.matmul %38, %50, %cst_22 {dimension_numbers = #tpu.dot_dimension_numbers<[0], [2], [2], [1], [0, 1, 0, 2, 1, 1], [1], [0]>} : vector<16x4x16xbf16>, vector<4x16x16xbf16>, vector<4x16x16xf32> -> vector<4x16x16xf32>
    %52 = tpu.transpose %51, [2, 0, 1] : vector<4x16x16xf32> -> vector<16x4x16xf32>
    "tpu.trace_stop"() : () -> ()
    %53 = vector.shape_cast %52 : vector<16x4x16xf32> to vector<16x64xf32>
    %54 = arith.truncf %53 : vector<16x64xf32> to vector<16x64xbf16>
    %c0_23 = arith.constant 0 : index
    %c0_24 = arith.constant 0 : index
    %55 = vector.load %arg7[%c0_23, %c0_24] : memref<64x64xbf16, #tpu.memory_space<vmem>>, vector<64x64xbf16>
    %cst_25 = arith.constant dense<0.000000e+00> : vector<16x64xf32>
    %56 = tpu.matmul %54, %55, %cst_25 {dimension_numbers = #tpu.dot_dimension_numbers<[1], [0], [0], [1], [0, 0, 1, 1], [], []>} : vector<16x64xbf16>, vector<64x64xbf16>, vector<16x64xf32> -> vector<16x64xf32>
    %c0_26 = arith.constant 0 : index
    %c0_27 = arith.constant 0 : index
    %57 = vector.load %arg8[%c0_26, %c0_27] : memref<1x64xf32, #tpu.memory_space<vmem>>, vector<1x64xf32>
    %58 = vector.broadcast %57 : vector<1x64xf32> to vector<16x64xf32>
    %59 = arith.addf %56, %58 : vector<16x64xf32>
    %60 = arith.addf %1, %59 : vector<16x64xf32>
    %c0_28 = arith.constant 0 : index
    %c0_29 = arith.constant 0 : index
    %61 = vector.load %arg9[%c0_28, %c0_29] : memref<1x64xf32, #tpu.memory_space<vmem>>, vector<1x64xf32>
    %c0_30 = arith.constant 0 : index
    %c0_31 = arith.constant 0 : index
    %62 = vector.load %arg10[%c0_30, %c0_31] : memref<1x64xf32, #tpu.memory_space<vmem>>, vector<1x64xf32>
    %cst_32 = arith.constant dense<0.000000e+00> : vector<16xf32>
    %63 = vector.multi_reduction <add>, %60, %cst_32 [1] : vector<16x64xf32> to vector<16xf32>
    %64 = vector.shape_cast %63 : vector<16xf32> to vector<16x1xf32>
    %cst_33 = arith.constant 6.400000e+01 : f32
    %65 = vector.broadcast %cst_33 : f32 to vector<16x1xf32>
    %66 = arith.divf %64, %65 : vector<16x1xf32>
    %67 = vector.broadcast %66 : vector<16x1xf32> to vector<16x64xf32>
    %68 = arith.subf %60, %67 : vector<16x64xf32>
    %69 = arith.mulf %68, %68 : vector<16x64xf32>
    %cst_34 = arith.constant dense<0.000000e+00> : vector<16xf32>
    %70 = vector.multi_reduction <add>, %69, %cst_34 [1] : vector<16x64xf32> to vector<16xf32>
    %71 = vector.shape_cast %70 : vector<16xf32> to vector<16x1xf32>
    %cst_35 = arith.constant 6.400000e+01 : f32
    %72 = vector.broadcast %cst_35 : f32 to vector<16x1xf32>
    %73 = arith.divf %71, %72 : vector<16x1xf32>
    %74 = vector.broadcast %66 : vector<16x1xf32> to vector<16x64xf32>
    %75 = arith.subf %60, %74 : vector<16x64xf32>
    %cst_36 = arith.constant 9.99999974E-6 : f32
    %76 = vector.broadcast %cst_36 : f32 to vector<16x1xf32>
    %77 = arith.addf %73, %76 : vector<16x1xf32>
    %78 = math.rsqrt %77 : vector<16x1xf32>
    %79 = vector.broadcast %78 : vector<16x1xf32> to vector<16x64xf32>
    %80 = arith.mulf %75, %79 : vector<16x64xf32>
    %81 = vector.broadcast %61 : vector<1x64xf32> to vector<16x64xf32>
    %82 = arith.mulf %80, %81 : vector<16x64xf32>
    %83 = vector.broadcast %62 : vector<1x64xf32> to vector<16x64xf32>
    %84 = arith.addf %82, %83 : vector<16x64xf32>
    %85 = arith.truncf %84 : vector<16x64xf32> to vector<16x64xbf16>
    %c0_37 = arith.constant 0 : index
    %c0_38 = arith.constant 0 : index
    %86 = vector.load %arg11[%c0_37, %c0_38] : memref<64x256xbf16, #tpu.memory_space<vmem>>, vector<64x256xbf16>
    %cst_39 = arith.constant dense<0.000000e+00> : vector<16x256xf32>
    %87 = tpu.matmul %85, %86, %cst_39 {dimension_numbers = #tpu.dot_dimension_numbers<[1], [0], [0], [1], [0, 0, 1, 1], [], []>} : vector<16x64xbf16>, vector<64x256xbf16>, vector<16x256xf32> -> vector<16x256xf32>
    %c0_40 = arith.constant 0 : index
    %c0_41 = arith.constant 0 : index
    %88 = vector.load %arg12[%c0_40, %c0_41] : memref<1x256xf32, #tpu.memory_space<vmem>>, vector<1x256xf32>
    %89 = vector.broadcast %88 : vector<1x256xf32> to vector<16x256xf32>
    %90 = arith.addf %87, %89 : vector<16x256xf32>
    %cst_42 = arith.constant 5.000000e-01 : f32
    %91 = vector.broadcast %cst_42 : f32 to vector<16x256xf32>
    %92 = arith.mulf %91, %90 : vector<16x256xf32>
    %cst_43 = arith.constant 0.707106769 : f32
    %93 = vector.broadcast %cst_43 : f32 to vector<16x256xf32>
    %94 = arith.mulf %90, %93 : vector<16x256xf32>
    %95 = math.erf %94 : vector<16x256xf32>
    %cst_44 = arith.constant 1.000000e+00 : f32
    %96 = vector.broadcast %cst_44 : f32 to vector<16x256xf32>
    %97 = arith.addf %96, %95 : vector<16x256xf32>
    %98 = arith.mulf %92, %97 : vector<16x256xf32>
    %99 = arith.truncf %98 : vector<16x256xf32> to vector<16x256xbf16>
    %c0_45 = arith.constant 0 : index
    %c0_46 = arith.constant 0 : index
    %100 = vector.load %arg13[%c0_45, %c0_46] : memref<256x64xbf16, #tpu.memory_space<vmem>>, vector<256x64xbf16>
    %cst_47 = arith.constant dense<0.000000e+00> : vector<16x64xf32>
    %101 = tpu.matmul %99, %100, %cst_47 {dimension_numbers = #tpu.dot_dimension_numbers<[1], [0], [0], [1], [0, 0, 1, 1], [], []>} : vector<16x256xbf16>, vector<256x64xbf16>, vector<16x64xf32> -> vector<16x64xf32>
    %c0_48 = arith.constant 0 : index
    %c0_49 = arith.constant 0 : index
    %102 = vector.load %arg14[%c0_48, %c0_49] : memref<1x64xf32, #tpu.memory_space<vmem>>, vector<1x64xf32>
    %103 = vector.broadcast %102 : vector<1x64xf32> to vector<16x64xf32>
    %104 = arith.addf %101, %103 : vector<16x64xf32>
    %105 = arith.addf %60, %104 : vector<16x64xf32>
    %c0_50 = arith.constant 0 : index
    %c0_51 = arith.constant 0 : index
    %c0_52 = arith.constant 0 : index
    %106 = vector.load %arg15[%c0_50, %c0_51, %c0_52] : memref<1x16x64xf32, #tpu.memory_space<vmem>>, vector<1x16x64xf32>
    %107 = vector.shape_cast %106 : vector<1x16x64xf32> to vector<16x64xf32>
    %108 = vector.shape_cast %105 : vector<16x64xf32> to vector<1x16x64xf32>
    tpu.vector_store %arg15[%c0_50, %c0_51, %c0_52], %108 {strides = array<i32>} : memref<1x16x64xf32, #tpu.memory_space<vmem>>, vector<1x16x64xf32>,
    return
  }
  func.func @transform_0(%arg0: i32) -> (i32, i32, i32) {
    %c0_i32 = arith.constant 0 : i32
    %c0_i32_0 = arith.constant 0 : i32
    %c0_i32_1 = arith.constant 0 : i32
    return %arg0, %c0_i32, %c0_i32_0 : i32, i32, i32
  }
  func.func @transform_1(%arg0: i32) -> (i32, i32) {
    %c0_i32 = arith.constant 0 : i32
    %c0_i32_0 = arith.constant 0 : i32
    %c0_i32_1 = arith.constant 0 : i32
    return %c0_i32, %c0_i32_0 : i32, i32
  }
  func.func @transform_2(%arg0: i32) -> (i32, i32) {
    %c0_i32 = arith.constant 0 : i32
    %c0_i32_0 = arith.constant 0 : i32
    %c0_i32_1 = arith.constant 0 : i32
    return %c0_i32, %c0_i32_0 : i32, i32
  }
  func.func @transform_3(%arg0: i32) -> (i32, i32) {
    %c0_i32 = arith.constant 0 : i32
    %c0_i32_0 = arith.constant 0 : i32
    %c0_i32_1 = arith.constant 0 : i32
    return %c0_i32, %c0_i32_0 : i32, i32
  }
  func.func @transform_4(%arg0: i32) -> (i32, i32) {
    %c0_i32 = arith.constant 0 : i32
    %c0_i32_0 = arith.constant 0 : i32
    %c0_i32_1 = arith.constant 0 : i32
    return %c0_i32, %c0_i32_0 : i32, i32
  }
  func.func @transform_5(%arg0: i32) -> (i32, i32) {
    %c0_i32 = arith.constant 0 : i32
    %c0_i32_0 = arith.constant 0 : i32
    %c0_i32_1 = arith.constant 0 : i32
    return %c0_i32, %c0_i32_0 : i32, i32
  }
  func.func @transform_6(%arg0: i32) -> (i32, i32) {
    %c0_i32 = arith.constant 0 : i32
    %c0_i32_0 = arith.constant 0 : i32
    %c0_i32_1 = arith.constant 0 : i32
    return %c0_i32, %c0_i32_0 : i32, i32
  }
  func.func @transform_7(%arg0: i32) -> (i32, i32) {
    %c0_i32 = arith.constant 0 : i32
    %c0_i32_0 = arith.constant 0 : i32
    %c0_i32_1 = arith.constant 0 : i32
    return %c0_i32, %c0_i32_0 : i32, i32
  }
  func.func @transform_8(%arg0: i32) -> (i32, i32) {
    %c0_i32 = arith.constant 0 : i32
    %c0_i32_0 = arith.constant 0 : i32
    %c0_i32_1 = arith.constant 0 : i32
    return %c0_i32, %c0_i32_0 : i32, i32
  }
  func.func @transform_9(%arg0: i32) -> (i32, i32) {
    %c0_i32 = arith.constant 0 : i32
    %c0_i32_0 = arith.constant 0 : i32
    %c0_i32_1 = arith.constant 0 : i32
    return %c0_i32, %c0_i32_0 : i32, i32
  }
  func.func @transform_10(%arg0: i32) -> (i32, i32) {
    %c0_i32 = arith.constant 0 : i32
    %c0_i32_0 = arith.constant 0 : i32
    %c0_i32_1 = arith.constant 0 : i32
    return %c0_i32, %c0_i32_0 : i32, i32
  }
  func.func @transform_11(%arg0: i32) -> (i32, i32) {
    %c0_i32 = arith.constant 0 : i32
    %c0_i32_0 = arith.constant 0 : i32
    %c0_i32_1 = arith.constant 0 : i32
    return %c0_i32, %c0_i32_0 : i32, i32
  }
  func.func @transform_12(%arg0: i32) -> (i32, i32) {
    %c0_i32 = arith.constant 0 : i32
    %c0_i32_0 = arith.constant 0 : i32
    %c0_i32_1 = arith.constant 0 : i32
    return %c0_i32, %c0_i32_0 : i32, i32
  }
  func.func @transform_13(%arg0: i32) -> (i32, i32) {
    %c0_i32 = arith.constant 0 : i32
    %c0_i32_0 = arith.constant 0 : i32
    %c0_i32_1 = arith.constant 0 : i32
    return %c0_i32, %c0_i32_0 : i32, i32
  }
  func.func @transform_14(%arg0: i32) -> (i32, i32, i32) {
    %c0_i32 = arith.constant 0 : i32
    %c0_i32_0 = arith.constant 0 : i32
    %c0_i32_1 = arith.constant 0 : i32
    return %arg0, %c0_i32, %c0_i32_0 : i32, i32, i32
  }
}

module attributes {stable_mosaic.version = 11 : i64} {
  func.func @block_kernel(%arg0: i32, %arg1: memref<1x16x64xf32, #tpu.memory_space<vmem>>, %arg2: memref<1x64xf32, #tpu.memory_space<vmem>>, %arg3: memref<1x64xf32, #tpu.memory_space<vmem>>, %arg4: memref<64x64xbf16, #tpu.memory_space<vmem>>, %arg5: memref<64x64xbf16, #tpu.memory_space<vmem>>, %arg6: memref<64x64xbf16, #tpu.memory_space<vmem>>, %arg7: memref<64x64xbf16, #tpu.memory_space<vmem>>, %arg8: memref<1x64xf32, #tpu.memory_space<vmem>>, %arg9: memref<1x64xf32, #tpu.memory_space<vmem>>, %arg10: memref<1x64xf32, #tpu.memory_space<vmem>>, %arg11: memref<64x256xbf16, #tpu.memory_space<vmem>>, %arg12: memref<1x256xf32, #tpu.memory_space<vmem>>, %arg13: memref<256x64xbf16, #tpu.memory_space<vmem>>, %arg14: memref<1x64xf32, #tpu.memory_space<vmem>>, %arg15: memref<1x16x64xf32, #tpu.memory_space<vmem>>) attributes {dimension_semantics = [#tpu.dimension_semantics<parallel>], iteration_bounds = array<i64: 2>, scalar_prefetch = 0 : i64, scratch_operands = 0 : i64, tpu.core_type = #tpu.core_type<tc>, window_params = [{transform_indices = @transform_0, window_bounds = array<i64: 1, 16, 64>}, {pipeline_mode = #tpu.pipeline_mode<synchronous>, transform_indices = @transform_1, window_bounds = array<i64: 1, 64>}, {pipeline_mode = #tpu.pipeline_mode<synchronous>, transform_indices = @transform_2, window_bounds = array<i64: 1, 64>}, {pipeline_mode = #tpu.pipeline_mode<synchronous>, transform_indices = @transform_3, window_bounds = array<i64: 64, 64>}, {pipeline_mode = #tpu.pipeline_mode<synchronous>, transform_indices = @transform_4, window_bounds = array<i64: 64, 64>}, {pipeline_mode = #tpu.pipeline_mode<synchronous>, transform_indices = @transform_5, window_bounds = array<i64: 64, 64>}, {pipeline_mode = #tpu.pipeline_mode<synchronous>, transform_indices = @transform_6, window_bounds = array<i64: 64, 64>}, {pipeline_mode = #tpu.pipeline_mode<synchronous>, transform_indices = @transform_7, window_bounds = array<i64: 1, 64>}, {pipeline_mode = #tpu.pipeline_mode<synchronous>, transform_indices = @transform_8, window_bounds = array<i64: 1, 64>}, {pipeline_mode = #tpu.pipeline_mode<synchronous>, transform_indices = @transform_9, window_bounds = array<i64: 1, 64>}, {pipeline_mode = #tpu.pipeline_mode<synchronous>, transform_indices = @transform_10, window_bounds = array<i64: 64, 256>}, {pipeline_mode = #tpu.pipeline_mode<synchronous>, transform_indices = @transform_11, window_bounds = array<i64: 1, 256>}, {pipeline_mode = #tpu.pipeline_mode<synchronous>, transform_indices = @transform_12, window_bounds = array<i64: 256, 64>}, {pipeline_mode = #tpu.pipeline_mode<synchronous>, transform_indices = @transform_13, window_bounds = array<i64: 1, 64>}, {transform_indices = @transform_14, window_bounds = array<i64: 1, 16, 64>}]} {
    %c0 = arith.constant 0 : index
    %c0_0 = arith.constant 0 : index
    %c0_1 = arith.constant 0 : index
    %0 = vector.load %arg1[%c0, %c0_0, %c0_1] : memref<1x16x64xf32, #tpu.memory_space<vmem>>, vector<1x16x64xf32>
    %1 = vector.shape_cast %0 : vector<1x16x64xf32> to vector<16x64xf32>
    %c0_2 = arith.constant 0 : index
    %c0_3 = arith.constant 0 : index
    %2 = vector.load %arg2[%c0_2, %c0_3] : memref<1x64xf32, #tpu.memory_space<vmem>>, vector<1x64xf32>
    %c0_4 = arith.constant 0 : index
    %c0_5 = arith.constant 0 : index
    %3 = vector.load %arg3[%c0_4, %c0_5] : memref<1x64xf32, #tpu.memory_space<vmem>>, vector<1x64xf32>
    %cst = arith.constant dense<0.000000e+00> : vector<16xf32>
    %4 = vector.multi_reduction <add>, %1, %cst [1] : vector<16x64xf32> to vector<16xf32>
    %5 = vector.shape_cast %4 : vector<16xf32> to vector<16x1xf32>
    %cst_6 = arith.constant 6.400000e+01 : f32
    %6 = vector.broadcast %cst_6 : f32 to vector<16x1xf32>
    %7 = arith.divf %5, %6 : vector<16x1xf32>
    %8 = vector.broadcast %7 : vector<16x1xf32> to vector<16x64xf32>
    %9 = arith.subf %1, %8 : vector<16x64xf32>
    %10 = arith.mulf %9, %9 : vector<16x64xf32>
    %cst_7 = arith.constant dense<0.000000e+00> : vector<16xf32>
    %11 = vector.multi_reduction <add>, %10, %cst_7 [1] : vector<16x64xf32> to vector<16xf32>
    %12 = vector.shape_cast %11 : vector<16xf32> to vector<16x1xf32>
    %cst_8 = arith.constant 6.400000e+01 : f32
    %13 = vector.broadcast %cst_8 : f32 to vector<16x1xf32>
    %14 = arith.divf %12, %13 : vector<16x1xf32>
    %15 = vector.broadcast %7 : vector<16x1xf32> to vector<16x64xf32>
    %16 = arith.subf %1, %15 : vector<16x64xf32>
    %cst_9 = arith.constant 9.99999974E-6 : f32
    %17 = vector.broadcast %cst_9 : f32 to vector<16x1xf32>
    %18 = arith.addf %14, %17 : vector<16x1xf32>
    %19 = math.rsqrt %18 : vector<16x1xf32>
    %20 = vector.broadcast %19 : vector<16x1xf32> to vector<16x64xf32>
    %21 = arith.mulf %16, %20 : vector<16x64xf32>
    %22 = vector.broadcast %2 : vector<1x64xf32> to vector<16x64xf32>
    %23 = arith.mulf %21, %22 : vector<16x64xf32>
    %24 = vector.broadcast %3 : vector<1x64xf32> to vector<16x64xf32>
    %25 = arith.addf %23, %24 : vector<16x64xf32>
    %26 = arith.truncf %25 : vector<16x64xf32> to vector<16x64xbf16>
    %c0_10 = arith.constant 0 : index
    %c0_11 = arith.constant 0 : index
    %27 = vector.load %arg4[%c0_10, %c0_11] : memref<64x64xbf16, #tpu.memory_space<vmem>>, vector<64x64xbf16>
    %cst_12 = arith.constant dense<0.000000e+00> : vector<16x64xf32>
    %28 = tpu.matmul %26, %27, %cst_12 {dimension_numbers = #tpu.dot_dimension_numbers<[1], [0], [0], [1], [0, 0, 1, 1], [], []>} : vector<16x64xbf16>, vector<64x64xbf16>, vector<16x64xf32> -> vector<16x64xf32>
    %c0_13 = arith.constant 0 : index
    %c0_14 = arith.constant 0 : index
    %29 = vector.load %arg5[%c0_13, %c0_14] : memref<64x64xbf16, #tpu.memory_space<vmem>>, vector<64x64xbf16>
    %cst_15 = arith.constant dense<0.000000e+00> : vector<16x64xf32>
    %30 = tpu.matmul %26, %29, %cst_15 {dimension_numbers = #tpu.dot_dimension_numbers<[1], [0], [0], [1], [0, 0, 1, 1], [], []>} : vector<16x64xbf16>, vector<64x64xbf16>, vector<16x64xf32> -> vector<16x64xf32>
    %c0_16 = arith.constant 0 : index
    %c0_17 = arith.constant 0 : index
    %31 = vector.load %arg6[%c0_16, %c0_17] : memref<64x64xbf16, #tpu.memory_space<vmem>>, vector<64x64xbf16>
    %cst_18 = arith.constant dense<0.000000e+00> : vector<16x64xf32>
    %32 = tpu.matmul %26, %31, %cst_18 {dimension_numbers = #tpu.dot_dimension_numbers<[1], [0], [0], [1], [0, 0, 1, 1], [], []>} : vector<16x64xbf16>, vector<64x64xbf16>, vector<16x64xf32> -> vector<16x64xf32>
    %33 = arith.truncf %28 : vector<16x64xf32> to vector<16x64xbf16>
    %34 = vector.shape_cast %33 : vector<16x64xbf16> to vector<16x4x16xbf16>
    %35 = arith.truncf %30 : vector<16x64xf32> to vector<16x64xbf16>
    %36 = vector.shape_cast %35 : vector<16x64xbf16> to vector<16x4x16xbf16>
    %37 = arith.truncf %32 : vector<16x64xf32> to vector<16x64xbf16>
    %38 = vector.shape_cast %37 : vector<16x64xbf16> to vector<16x4x16xbf16>
    "tpu.trace_start"() <{level = 10 : i32, message = "qhd,khd->hqk"}> : () -> ()
    %cst_19 = arith.constant dense<0.000000e+00> : vector<4x16x16xf32>
    %39 = tpu.matmul %34, %36, %cst_19 {dimension_numbers = #tpu.dot_dimension_numbers<[2], [2], [0], [0], [0, 1, 0, 0, 1, 0], [1], [1]>} : vector<16x4x16xbf16>, vector<16x4x16xbf16>, vector<4x16x16xf32> -> vector<4x16x16xf32>
    "tpu.trace_stop"() : () -> ()
    %cst_20 = arith.constant dense<0xFF800000> : vector<4x16xf32>
    %40 = vector.multi_reduction <maximumf>, %39, %cst_20 [2] : vector<4x16x16xf32> to vector<4x16xf32>
    %41 = vector.shape_cast %40 : vector<4x16xf32> to vector<4x16x1xf32>
    %42 = vector.broadcast %41 : vector<4x16x1xf32> to vector<4x16x16xf32>
    %43 = arith.subf %39, %42 : vector<4x16x16xf32>
    %44 = math.exp %43 : vector<4x16x16xf32>
    %cst_21 = arith.constant dense<0.000000e+00> : vector<4x16xf32>
    %45 = vector.multi_reduction <add>, %44, %cst_21 [2] : vector<4x16x16xf32> to vector<4x16xf32>
    %46 = vector.shape_cast %45 : vector<4x16xf32> to vector<4x16x1xf32>
    %47 = tpu.reciprocal %46 {approx = true} : vector<4x16x1xf32> -> vector<4x16x1xf32>
    %48 = vector.broadcast %47 : vector<4x16x1xf32> to vector<4x16x16xf32>
    %49 = arith.mulf %44, %48 : vector<4x16x16xf32>
    %50 = arith.truncf %49 : vector<4x16x16xf32> to vector<4x16x16xbf16>
    "tpu.trace_start"() <{level = 10 : i32, message = "hqk,khd->qhd"}> : () -> ()
    %cst_22 = arith.constant dense<0.000000e+00> : vector<4x16x16xf32>
    %51 = tpu.matmul %38, %50, %cst_22 {dimension_numbers = #tpu.dot_dimension_numbers<[0], [2], [2], [1], [0, 1, 0, 2, 1, 1], [1], [0]>} : vector<16x4x16xbf16>, vector<4x16x16xbf16>, vector<4x16x16xf32> -> vector<4x16x16xf32>
    %52 = tpu.transpose %51, [2, 0, 1] : vector<4x16x16xf32> -> vector<16x4x16xf32>
    "tpu.trace_stop"() : () -> ()
    %53 = vector.shape_cast %52 : vector<16x4x16xf32> to vector<16x64xf32>
    %54 = arith.truncf %53 : vector<16x64xf32> to vector<16x64xbf16>
    %c0_23 = arith.constant 0 : index
    %c0_24 = arith.constant 0 : index
    %55 = vector.load %arg7[%c0_23, %c0_24] : memref<64x64xbf16, #tpu.memory_space<vmem>>, vector<64x64xbf16>
    %cst_25 = arith.constant dense<0.000000e+00> : vector<16x64xf32>
    %56 = tpu.matmul %54, %55, %cst_25 {dimension_numbers = #tpu.dot_dimension_numbers<[1], [0], [0], [1], [0, 0, 1, 1], [], []>} : vector<16x64xbf16>, vector<64x64xbf16>, vector<16x64xf32> -> vector<16x64xf32>
    %c0_26 = arith.constant 0 : index
    %c0_27 = arith.constant 0 : index
    %57 = vector.load %arg8[%c0_26, %c0_27] : memref<1x64xf32, #tpu.memory_space<vmem>>, vector<1x64xf32>
    %58 = vector.broadcast %57 : vector<1x64xf32> to vector<16x64xf32>
    %59 = arith.addf %56, %58 : vector<16x64xf32>
    %60 = arith.addf %1, %59 : vector<16x64xf32>
    %c0_28 = arith.constant 0 : index
    %c0_29 = arith.constant 0 : index
    %61 = vector.load %arg9[%c0_28, %c0_29] : memref<1x64xf32, #tpu.memory_space<vmem>>, vector<1x64xf32>
    %c0_30 = arith.constant 0 : index
    %c0_31 = arith.constant 0 : index
    %62 = vector.load %arg10[%c0_30, %c0_31] : memref<1x64xf32, #tpu.memory_space<vmem>>, vector<1x64xf32>
    %cst_32 = arith.constant dense<0.000000e+00> : vector<16xf32>
    %63 = vector.multi_reduction <add>, %60, %cst_32 [1] : vector<16x64xf32> to vector<16xf32>
    %64 = vector.shape_cast %63 : vector<16xf32> to vector<16x1xf32>
    %cst_33 = arith.constant 6.400000e+01 : f32
    %65 = vector.broadcast %cst_33 : f32 to vector<16x1xf32>
    %66 = arith.divf %64, %65 : vector<16x1xf32>
    %67 = vector.broadcast %66 : vector<16x1xf32> to vector<16x64xf32>
    %68 = arith.subf %60, %67 : vector<16x64xf32>
    %69 = arith.mulf %68, %68 : vector<16x64xf32>
    %cst_34 = arith.constant dense<0.000000e+00> : vector<16xf32>
    %70 = vector.multi_reduction <add>, %69, %cst_34 [1] : vector<16x64xf32> to vector<16xf32>
    %71 = vector.shape_cast %70 : vector<16xf32> to vector<16x1xf32>
    %cst_35 = arith.constant 6.400000e+01 : f32
    %72 = vector.broadcast %cst_35 : f32 to vector<16x1xf32>
    %73 = arith.divf %71, %72 : vector<16x1xf32>
    %74 = vector.broadcast %66 : vector<16x1xf32> to vector<16x64xf32>
    %75 = arith.subf %60, %74 : vector<16x64xf32>
    %cst_36 = arith.constant 9.99999974E-6 : f32
    %76 = vector.broadcast %cst_36 : f32 to vector<16x1xf32>
    %77 = arith.addf %73, %76 : vector<16x1xf32>
    %78 = math.rsqrt %77 : vector<16x1xf32>
    %79 = vector.broadcast %78 : vector<16x1xf32> to vector<16x64xf32>
    %80 = arith.mulf %75, %79 : vector<16x64xf32>
    %81 = vector.broadcast %61 : vector<1x64xf32> to vector<16x64xf32>
    %82 = arith.mulf %80, %81 : vector<16x64xf32>
    %83 = vector.broadcast %62 : vector<1x64xf32> to vector<16x64xf32>
    %84 = arith.addf %82, %83 : vector<16x64xf32>
    %85 = arith.truncf %84 : vector<16x64xf32> to vector<16x64xbf16>
    %c0_37 = arith.constant 0 : index
    %c0_38 = arith.constant 0 : index
    %86 = vector.load %arg11[%c0_37, %c0_38] : memref<64x256xbf16, #tpu.memory_space<vmem>>, vector<64x256xbf16>
    %cst_39 = arith.constant dense<0.000000e+00> : vector<16x256xf32>
    %87 = tpu.matmul %85, %86, %cst_39 {dimension_numbers = #tpu.dot_dimension_numbers<[1], [0], [0], [1], [0, 0, 1, 1], [], []>} : vector<16x64xbf16>, vector<64x256xbf16>, vector<16x256xf32> -> vector<16x256xf32>
    %c0_40 = arith.constant 0 : index
    %c0_41 = arith.constant 0 : index
    %88 = vector.load %arg12[%c0_40, %c0_41] : memref<1x256xf32, #tpu.memory_space<vmem>>, vector<1x256xf32>
    %89 = vector.broadcast %88 : vector<1x256xf32> to vector<16x256xf32>
    %90 = arith.addf %87, %89 : vector<16x256xf32>
    %cst_42 = arith.constant 5.000000e-01 : f32
    %91 = vector.broadcast %cst_42 : f32 to vector<16x256xf32>
    %92 = arith.mulf %91, %90 : vector<16x256xf32>
    %cst_43 = arith.constant 0.707106769 : f32
    %93 = vector.broadcast %cst_43 : f32 to vector<16x256xf32>
    %94 = arith.mulf %90, %93 : vector<16x256xf32>
    %95 = math.erf %94 : vector<16x256xf32>
    %cst_44 = arith.constant 1.000000e+00 : f32
    %96 = vector.broadcast %cst_44 : f32 to vector<16x256xf32>
    %97 = arith.addf %96, %95 : vector<16x256xf32>
    %98 = arith.mulf %92, %97 : vector<16x256xf32>
    %99 = arith.truncf %98 : vector<16x256xf32> to vector<16x256xbf16>
    %c0_45 = arith.constant 0 : index
    %c0_46 = arith.constant 0 : index
    %100 = vector.load %arg13[%c0_45, %c0_46] : memref<256x64xbf16, #tpu.memory_space<vmem>>, vector<256x64xbf16>
    %cst_47 = arith.constant dense<0.000000e+00> : vector<16x64xf32>
    %101 = tpu.matmul %99, %100, %cst_47 {dimension_numbers = #tpu.dot_dimension_numbers<[1], [0], [0], [1], [0, 0, 1, 1], [], []>} : vector<16x256xbf16>, vector<256x64xbf16>, vector<16x64xf32> -> vector<16x64xf32>
    %c0_48 = arith.constant 0 : index
    %c0_49 = arith.constant 0 : index
    %102 = vector.load %arg14[%c0_48, %c0_49] : memref<1x64xf32, #tpu.memory_space<vmem>>, vector<1x64xf32>
    %103 = vector.broadcast %102 : vector<1x64xf32> to vector<16x64xf32>
    %104 = arith.addf %101, %103 : vector<16x64xf32>
    %105 = arith.addf %60, %104 : vector<16x64xf32>
    %c0_50 = arith.constant 0 : index
    %c0_51 = arith.constant 0 : index
    %c0_52 = arith.constant 0 : index
    %106 = vector.load %arg15[%c0_50, %c0_51, %c0_52] : memref<1x16x64xf32, #tpu.memory_space<vmem>>, vector<1x16x64xf32>
    %107 = vector.shape_cast %106 : vector<1x16x64xf32> to vector<16x64xf32>
    %108 = vector.shape_cast %105 : vector<16x64xf32> to vector<1x16x64xf32>
    tpu.vector_store %arg15[%c0_50, %c0_51, %c0_52], %108 {strides = array<i32>} : memref<1x16x64xf32, #tpu.memory_space<vmem>>, vector<1x16x64xf32>,
    return
  }
  func.func @transform_0(%arg0: i32) -> (i32, i32, i32) {
    %c0_i32 = arith.constant 0 : i32
    %c0_i32_0 = arith.constant 0 : i32
    %c0_i32_1 = arith.constant 0 : i32
    return %arg0, %c0_i32, %c0_i32_0 : i32, i32, i32
  }
  func.func @transform_1(%arg0: i32) -> (i32, i32) {
    %c0_i32 = arith.constant 0 : i32
    %c0_i32_0 = arith.constant 0 : i32
    %c0_i32_1 = arith.constant 0 : i32
    return %c0_i32, %c0_i32_0 : i32, i32
  }
  func.func @transform_2(%arg0: i32) -> (i32, i32) {
    %c0_i32 = arith.constant 0 : i32
    %c0_i32_0 = arith.constant 0 : i32
    %c0_i32_1 = arith.constant 0 : i32
    return %c0_i32, %c0_i32_0 : i32, i32
  }
  func.func @transform_3(%arg0: i32) -> (i32, i32) {
    %c0_i32 = arith.constant 0 : i32
    %c0_i32_0 = arith.constant 0 : i32
    %c0_i32_1 = arith.constant 0 : i32
    return %c0_i32, %c0_i32_0 : i32, i32
  }
  func.func @transform_4(%arg0: i32) -> (i32, i32) {
    %c0_i32 = arith.constant 0 : i32
    %c0_i32_0 = arith.constant 0 : i32
    %c0_i32_1 = arith.constant 0 : i32
    return %c0_i32, %c0_i32_0 : i32, i32
  }
  func.func @transform_5(%arg0: i32) -> (i32, i32) {
    %c0_i32 = arith.constant 0 : i32
    %c0_i32_0 = arith.constant 0 : i32
    %c0_i32_1 = arith.constant 0 : i32
    return %c0_i32, %c0_i32_0 : i32, i32
  }
  func.func @transform_6(%arg0: i32) -> (i32, i32) {
    %c0_i32 = arith.constant 0 : i32
    %c0_i32_0 = arith.constant 0 : i32
    %c0_i32_1 = arith.constant 0 : i32
    return %c0_i32, %c0_i32_0 : i32, i32
  }
  func.func @transform_7(%arg0: i32) -> (i32, i32) {
    %c0_i32 = arith.constant 0 : i32
    %c0_i32_0 = arith.constant 0 : i32
    %c0_i32_1 = arith.constant 0 : i32
    return %c0_i32, %c0_i32_0 : i32, i32
  }
  func.func @transform_8(%arg0: i32) -> (i32, i32) {
    %c0_i32 = arith.constant 0 : i32
    %c0_i32_0 = arith.constant 0 : i32
    %c0_i32_1 = arith.constant 0 : i32
    return %c0_i32, %c0_i32_0 : i32, i32
  }
  func.func @transform_9(%arg0: i32) -> (i32, i32) {
    %c0_i32 = arith.constant 0 : i32
    %c0_i32_0 = arith.constant 0 : i32
    %c0_i32_1 = arith.constant 0 : i32
    return %c0_i32, %c0_i32_0 : i32, i32
  }
  func.func @transform_10(%arg0: i32) -> (i32, i32) {
    %c0_i32 = arith.constant 0 : i32
    %c0_i32_0 = arith.constant 0 : i32
    %c0_i32_1 = arith.constant 0 : i32
    return %c0_i32, %c0_i32_0 : i32, i32
  }
  func.func @transform_11(%arg0: i32) -> (i32, i32) {
    %c0_i32 = arith.constant 0 : i32
    %c0_i32_0 = arith.constant 0 : i32
    %c0_i32_1 = arith.constant 0 : i32
    return %c0_i32, %c0_i32_0 : i32, i32
  }
  func.func @transform_12(%arg0: i32) -> (i32, i32) {
    %c0_i32 = arith.constant 0 : i32
    %c0_i32_0 = arith.constant 0 : i32
    %c0_i32_1 = arith.constant 0 : i32
    return %c0_i32, %c0_i32_0 : i32, i32
  }
  func.func @transform_13(%arg0: i32) -> (i32, i32) {
    %c0_i32 = arith.constant 0 : i32
    %c0_i32_0 = arith.constant 0 : i32
    %c0_i32_1 = arith.constant 0 : i32
    return %c0_i32, %c0_i32_0 : i32, i32
  }
  func.func @transform_14(%arg0: i32) -> (i32, i32, i32) {
    %c0_i32 = arith.constant 0 : i32
    %c0_i32_0 = arith.constant 0 : i32
    %c0_i32_1 = arith.constant 0 : i32
    return %arg0, %c0_i32, %c0_i32_0 : i32, i32, i32
  }
}

</mosaic_0001>

<llo_original>
// kernel: tpu_custom_call.1
$region0: #{tpu_custom_call.1}
  #allocation0 [shape = 'u32[]', space=smem, size = 0x4, offset = 0x4, fixed_abs, tag = 'smem constant byte address 0x4 - core index']
  #allocation1 [shape = 'u32[144,128]{1,0:T(1,128)}', space=vmem, size = 0x12000, scoped, tag = 'internal scratch']
  %s0 = inlined_call_operand.vmem [shape: f32[2,16,64], index: 0, kind: input, shape index: {}]
  %s1 = inlined_call_operand.hbm [shape: f32[1,64], index: 1, kind: input, shape index: {}]
  %s2 = inlined_call_operand.vmem [shape: f32[1,64], index: 2, kind: input, shape index: {}]
  %s3 = inlined_call_operand.vmem [shape: bf16[64,64], index: 3, kind: input, shape index: {}]
  %s4 = inlined_call_operand.vmem [shape: bf16[64,64], index: 4, kind: input, shape index: {}]
  %s5 = inlined_call_operand.vmem [shape: bf16[64,64], index: 5, kind: input, shape index: {}]
  %s6 = inlined_call_operand.hbm [shape: bf16[64,64], index: 6, kind: input, shape index: {}]
  %s7 = inlined_call_operand.vmem [shape: f32[1,64], index: 7, kind: input, shape index: {}]
  %s8 = inlined_call_operand.vmem [shape: f32[1,64], index: 8, kind: input, shape index: {}]
  %s9 = inlined_call_operand.vmem [shape: f32[1,64], index: 9, kind: input, shape index: {}]
  %s10 = inlined_call_operand.vmem [shape: bf16[64,256], index: 10, kind: input, shape index: {}]
  %s11 = inlined_call_operand.vmem [shape: f32[1,256], index: 11, kind: input, shape index: {}]
  %s12 = inlined_call_operand.vmem [shape: bf16[256,64], index: 12, kind: input, shape index: {}]
  %s13 = inlined_call_operand.vmem [shape: f32[1,64], index: 13, kind: input, shape index: {}]
  %s14 = inlined_call_operand.hbm [shape: f32[2,16,64], index: 14, kind: output, shape index: {}]
  %s15 = sld [smem:[#allocation0]]
  $region97: #{tpu_custom_call.1} parent=0
    _
  %s17 = ssub.s32 1, %s15
  %s18 = scalar_select 0, %s17, %s15
  $region1: #{tpu_custom_call.1} parent=0
    #allocation2 [shape = 'u8[512]{0}', space=vmem, size = 0x400, scoped, tag = 'input window, operand 1, single buffered']
    #allocation3 [shape = 's32[2]{0}', space=sflag, size = 0x8, scoped, tag = 'scoped memory for tpu_custom_call.1']
    #allocation4 [shape = 's32[2]{0}', space=sflag, size = 0x8, scoped, tag = 'scoped memory for tpu_custom_call.1']
    #allocation5 [shape = 'u8[16384]{0}', space=vmem, size = 0x4000, scoped, tag = 'input window, operand 6, single buffered']
    #allocation6 [shape = 's32[1]{0}', space=sflag, size = 0x4, scoped, tag = 'scoped memory for tpu_custom_call.1']
    #allocation7 [shape = 'u8[16384]{0}', space=vmem, size = 0x4000, scoped, tag = 'output window, operand 0']
    %19 = vsyncpa [#allocation3], 0
    %20 = vsyncpa [#allocation6], 0
    %21 = vsyncpa [#allocation4], 0
    %s22 = scalar_lea.sflag [#allocation4], 1
    %23 = vsyncpa %s22, 0
    loop: start=0, step=1, limit=4
    $region2: #{tpu_custom_call.1} parent=1 // loop_pre_header
      _
    $region3: #{tpu_custom_call.1} parent=1 // loop_header
      %s25 = sphi 0, %s29
      %p26 = scmp.ge.s32.totalorder %s25, 4
      %s35 = sphi 0, %s37
      %s38 = sphi 0, %s35
      %s39 = sphi 0, %s38
      %s55 = sphi 0, %s39
      %s59 = sphi 0, %s59
      %s61 = sphi 0, %s59
      %s62 = sphi 0, %s61
      %s76 = sphi 0, %s62
      %s80 = sphi 0, %s80
      %s82 = sphi 0, %s80
      %s83 = sphi 0, %s82
      %s97 = sphi 0, %s83
      %s101 = sphi 0, %s101
      %s103 = sphi 0, %s101
      %s104 = sphi 0, %s103
      %s118 = sphi 0, %s104
      %s122 = sphi 0, %s122
      %s124 = sphi 0, %s122
      %s125 = sphi 0, %s124
      %s139 = sphi 0, %s125
      %s143 = sphi 0, %s143
      %s145 = sphi 0, %s143
      %s146 = sphi 0, %s145
      %s160 = sphi 0, %s146
      %s164 = sphi 0, %s164
      %s166 = sphi 0, %s164
      %s167 = sphi 0, %s166
      %s181 = sphi 0, %s167
      %s185 = sphi 0, %s185
      %s187 = sphi 0, %s185
      %s188 = sphi 0, %s187
      %s202 = sphi 0, %s188
      %s206 = sphi 0, %s206
      %s208 = sphi 0, %s206
      %s209 = sphi 0, %s208
      %s223 = sphi 0, %s209
      %s227 = sphi 0, %s227
      %s229 = sphi 0, %s227
      %s230 = sphi 0, %s229
      %s244 = sphi 0, %s230
      %s248 = sphi 0, %s248
      %s250 = sphi 0, %s248
      %s251 = sphi 0, %s250
      %s265 = sphi 0, %s251
      %s269 = sphi 0, %s269
      %s271 = sphi 0, %s269
      %s272 = sphi 0, %s271
      %s286 = sphi 0, %s272
      %s290 = sphi 0, %s290
      %s292 = sphi 0, %s290
      %s293 = sphi 0, %s292
      %s307 = sphi 0, %s293
      %s311 = sphi 0, %s311
      %s313 = sphi 0, %s311
      %s314 = sphi 0, %s313
      %s328 = sphi 0, %s314
      %s334 = sphi 0, %s336
      %s337 = sphi 0, %s334
      %s338 = sphi 0, %s337
      %s354 = sphi 0, %s338
    $region4: #{tpu_custom_call.1} parent=1 // loop_header_branch
      %28 = sbr.rel (%p26) target = $region8
    $region5: #{tpu_custom_call.1} parent=1 // loop_body
      %s30 = ssub.s32 %s25, 1
      %s31 = ssub.s32 %s25, 2
      %s32 = sadd.s32 %s25, 1
      %s33 = ssub.s32 %s25, %s32
      %p34 = scmp.eq.s32.totalorder %s33, 0
      %s36 = sadd.s32 %s35, 1
      %s37 = scalar_select %p34, %s35, %s36
      %p40 = pneg %p34
      %p41 = scmp.eq.s32.totalorder %s25, 1
      %p42 = por %p40, %p41
      %p43 = scmp.ne.s32.totalorder %s35, %s38
      %p44 = scmp.eq.s32.totalorder %s25, 0
      %p45 = por %p43, %p44
      %p46 = scmp.ne.s32.totalorder %s35, %s38
      %p47 = scmp.eq.s32.totalorder %s30, 1
      %p48 = por %p46, %p47
      %p49 = scmp.ne.s32.totalorder %s38, %s39
      %p50 = scmp.eq.s32.totalorder %s30, 0
      %p51 = por %p49, %p50
      %p52 = scmp.ne.s32.totalorder %s38, %s39
      %p53 = scmp.eq.s32.totalorder %s31, 1
      %p54 = por %p52, %p53
      %p56 = scmp.ne.s32.totalorder %s39, %s55
      %p57 = scmp.eq.s32.totalorder %s31, 0
      %p58 = por %p56, %p57
      %s60 = sadd.s32 %s59, 1
      %p63 = scmp.eq.s32.totalorder %s25, 1
      %p64 = scmp.ne.s32.totalorder %s59, %s61
      %p65 = scmp.eq.s32.totalorder %s25, 0
      %p66 = por %p64, %p65
      %p67 = scmp.ne.s32.totalorder %s59, %s61
      %p68 = scmp.eq.s32.totalorder %s30, 1
      %p69 = por %p67, %p68
      %p70 = scmp.ne.s32.totalorder %s61, %s62
      %p71 = scmp.eq.s32.totalorder %s30, 0
      %p72 = por %p70, %p71
      %p73 = scmp.ne.s32.totalorder %s61, %s62
      %p74 = scmp.eq.s32.totalorder %s31, 1
      %p75 = por %p73, %p74
      %p77 = scmp.ne.s32.totalorder %s62, %s76
      %p78 = scmp.eq.s32.totalorder %s31, 0
      %p79 = por %p77, %p78
      %s81 = sadd.s32 %s80, 1
      %p84 = scmp.eq.s32.totalorder %s25, 1
      %p85 = scmp.ne.s32.totalorder %s80, %s82
      %p86 = scmp.eq.s32.totalorder %s25, 0
      %p87 = por %p85, %p86
      %p88 = scmp.ne.s32.totalorder %s80, %s82
      %p89 = scmp.eq.s32.totalorder %s30, 1
      %p90 = por %p88, %p89
      %p91 = scmp.ne.s32.totalorder %s82, %s83
      %p92 = scmp.eq.s32.totalorder %s30, 0
      %p93 = por %p91, %p92
      %p94 = scmp.ne.s32.totalorder %s82, %s83
      %p95 = scmp.eq.s32.totalorder %s31, 1
      %p96 = por %p94, %p95
      %p98 = scmp.ne.s32.totalorder %s83, %s97
      %p99 = scmp.eq.s32.totalorder %s31, 0
      %p100 = por %p98, %p99
      %s102 = sadd.s32 %s101, 1
      %p105 = scmp.eq.s32.totalorder %s25, 1
      %p106 = scmp.ne.s32.totalorder %s101, %s103
      %p107 = scmp.eq.s32.totalorder %s25, 0
      %p108 = por %p106, %p107
      %p109 = scmp.ne.s32.totalorder %s101, %s103
      %p110 = scmp.eq.s32.totalorder %s30, 1
      %p111 = por %p109, %p110
      %p112 = scmp.ne.s32.totalorder %s103, %s104
      %p113 = scmp.eq.s32.totalorder %s30, 0
      %p114 = por %p112, %p113
      %p115 = scmp.ne.s32.totalorder %s103, %s104
      %p116 = scmp.eq.s32.totalorder %s31, 1
      %p117 = por %p115, %p116
      %p119 = scmp.ne.s32.totalorder %s104, %s118
      %p120 = scmp.eq.s32.totalorder %s31, 0
      %p121 = por %p119, %p120
      %s123 = sadd.s32 %s122, 1
      %p126 = scmp.eq.s32.totalorder %s25, 1
      %p127 = scmp.ne.s32.totalorder %s122, %s124
      %p128 = scmp.eq.s32.totalorder %s25, 0
      %p129 = por %p127, %p128
      %p130 = scmp.ne.s32.totalorder %s122, %s124
      %p131 = scmp.eq.s32.totalorder %s30, 1
      %p132 = por %p130, %p131
      %p133 = scmp.ne.s32.totalorder %s124, %s125
      %p134 = scmp.eq.s32.totalorder %s30, 0
      %p135 = por %p133, %p134
      %p136 = scmp.ne.s32.totalorder %s124, %s125
      %p137 = scmp.eq.s32.totalorder %s31, 1
      %p138 = por %p136, %p137
      %p140 = scmp.ne.s32.totalorder %s125, %s139
      %p141 = scmp.eq.s32.totalorder %s31, 0
      %p142 = por %p140, %p141
      %s144 = sadd.s32 %s143, 1
      %p147 = scmp.eq.s32.totalorder %s25, 1
      %p148 = scmp.ne.s32.totalorder %s143, %s145
      %p149 = scmp.eq.s32.totalorder %s25, 0
      %p150 = por %p148, %p149
      %p151 = scmp.ne.s32.totalorder %s143, %s145
      %p152 = scmp.eq.s32.totalorder %s30, 1
      %p153 = por %p151, %p152
      %p154 = scmp.ne.s32.totalorder %s145, %s146
      %p155 = scmp.eq.s32.totalorder %s30, 0
      %p156 = por %p154, %p155
      %p157 = scmp.ne.s32.totalorder %s145, %s146
      %p158 = scmp.eq.s32.totalorder %s31, 1
      %p159 = por %p157, %p158
      %p161 = scmp.ne.s32.totalorder %s146, %s160
      %p162 = scmp.eq.s32.totalorder %s31, 0
      %p163 = por %p161, %p162
      %s165 = sadd.s32 %s164, 1
      %p168 = scmp.eq.s32.totalorder %s25, 1
      %p169 = scmp.ne.s32.totalorder %s164, %s166
      %p170 = scmp.eq.s32.totalorder %s25, 0
      %p171 = por %p169, %p170
      %p172 = scmp.ne.s32.totalorder %s164, %s166
      %p173 = scmp.eq.s32.totalorder %s30, 1
      %p174 = por %p172, %p173
      %p175 = scmp.ne.s32.totalorder %s166, %s167
      %p176 = scmp.eq.s32.totalorder %s30, 0
      %p177 = por %p175, %p176
      %p178 = scmp.ne.s32.totalorder %s166, %s167
      %p179 = scmp.eq.s32.totalorder %s31, 1
      %p180 = por %p178, %p179
      %p182 = scmp.ne.s32.totalorder %s167, %s181
      %p183 = scmp.eq.s32.totalorder %s31, 0
      %p184 = por %p182, %p183
      %s186 = sadd.s32 %s185, 1
      %p189 = scmp.eq.s32.totalorder %s25, 1
      %p190 = scmp.ne.s32.totalorder %s185, %s187
      %p191 = scmp.eq.s32.totalorder %s25, 0
      %p192 = por %p190, %p191
      %p193 = scmp.ne.s32.totalorder %s185, %s187
      %p194 = scmp.eq.s32.totalorder %s30, 1
      %p195 = por %p193, %p194
      %p196 = scmp.ne.s32.totalorder %s187, %s188
      %p197 = scmp.eq.s32.totalorder %s30, 0
      %p198 = por %p196, %p197
      %p199 = scmp.ne.s32.totalorder %s187, %s188
      %p200 = scmp.eq.s32.totalorder %s31, 1
      %p201 = por %p199, %p200
      %p203 = scmp.ne.s32.totalorder %s188, %s202
      %p204 = scmp.eq.s32.totalorder %s31, 0
      %p205 = por %p203, %p204
      %s207 = sadd.s32 %s206, 1
      %p210 = scmp.eq.s32.totalorder %s25, 1
      %p211 = scmp.ne.s32.totalorder %s206, %s208
      %p212 = scmp.eq.s32.totalorder %s25, 0
      %p213 = por %p211, %p212
      %p214 = scmp.ne.s32.totalorder %s206, %s208
      %p215 = scmp.eq.s32.totalorder %s30, 1
      %p216 = por %p214, %p215
      %p217 = scmp.ne.s32.totalorder %s208, %s209
      %p218 = scmp.eq.s32.totalorder %s30, 0
      %p219 = por %p217, %p218
      %p220 = scmp.ne.s32.totalorder %s208, %s209
      %p221 = scmp.eq.s32.totalorder %s31, 1
      %p222 = por %p220, %p221
      %p224 = scmp.ne.s32.totalorder %s209, %s223
      %p225 = scmp.eq.s32.totalorder %s31, 0
      %p226 = por %p224, %p225
      %s228 = sadd.s32 %s227, 1
      %p231 = scmp.eq.s32.totalorder %s25, 1
      %p232 = scmp.ne.s32.totalorder %s227, %s229
      %p233 = scmp.eq.s32.totalorder %s25, 0
      %p234 = por %p232, %p233
      %p235 = scmp.ne.s32.totalorder %s227, %s229
      %p236 = scmp.eq.s32.totalorder %s30, 1
      %p237 = por %p235, %p236
      %p238 = scmp.ne.s32.totalorder %s229, %s230
      %p239 = scmp.eq.s32.totalorder %s30, 0
      %p240 = por %p238, %p239
      %p241 = scmp.ne.s32.totalorder %s229, %s230
      %p242 = scmp.eq.s32.totalorder %s31, 1
      %p243 = por %p241, %p242
      %p245 = scmp.ne.s32.totalorder %s230, %s244
      %p246 = scmp.eq.s32.totalorder %s31, 0
      %p247 = por %p245, %p246
      %s249 = sadd.s32 %s248, 1
      %p252 = scmp.eq.s32.totalorder %s25, 1
      %p253 = scmp.ne.s32.totalorder %s248, %s250
      %p254 = scmp.eq.s32.totalorder %s25, 0
      %p255 = por %p253, %p254
      %p256 = scmp.ne.s32.totalorder %s248, %s250
      %p257 = scmp.eq.s32.totalorder %s30, 1
      %p258 = por %p256, %p257
      %p259 = scmp.ne.s32.totalorder %s250, %s251
      %p260 = scmp.eq.s32.totalorder %s30, 0
      %p261 = por %p259, %p260
      %p262 = scmp.ne.s32.totalorder %s250, %s251
      %p263 = scmp.eq.s32.totalorder %s31, 1
      %p264 = por %p262, %p263
      %p266 = scmp.ne.s32.totalorder %s251, %s265
      %p267 = scmp.eq.s32.totalorder %s31, 0
      %p268 = por %p266, %p267
      %s270 = sadd.s32 %s269, 1
      %p273 = scmp.eq.s32.totalorder %s25, 1
      %p274 = scmp.ne.s32.totalorder %s269, %s271
      %p275 = scmp.eq.s32.totalorder %s25, 0
      %p276 = por %p274, %p275
      %p277 = scmp.ne.s32.totalorder %s269, %s271
      %p278 = scmp.eq.s32.totalorder %s30, 1
      %p279 = por %p277, %p278
      %p280 = scmp.ne.s32.totalorder %s271, %s272
      %p281 = scmp.eq.s32.totalorder %s30, 0
      %p282 = por %p280, %p281
      %p283 = scmp.ne.s32.totalorder %s271, %s272
      %p284 = scmp.eq.s32.totalorder %s31, 1
      %p285 = por %p283, %p284
      %p287 = scmp.ne.s32.totalorder %s272, %s286
      %p288 = scmp.eq.s32.totalorder %s31, 0
      %p289 = por %p287, %p288
      %s291 = sadd.s32 %s290, 1
      %p294 = scmp.eq.s32.totalorder %s25, 1
      %p295 = scmp.ne.s32.totalorder %s290, %s292
      %p296 = scmp.eq.s32.totalorder %s25, 0
      %p297 = por %p295, %p296
      %p298 = scmp.ne.s32.totalorder %s290, %s292
      %p299 = scmp.eq.s32.totalorder %s30, 1
      %p300 = por %p298, %p299
      %p301 = scmp.ne.s32.totalorder %s292, %s293
      %p302 = scmp.eq.s32.totalorder %s30, 0
      %p303 = por %p301, %p302
      %p304 = scmp.ne.s32.totalorder %s292, %s293
      %p305 = scmp.eq.s32.totalorder %s31, 1
      %p306 = por %p304, %p305
      %p308 = scmp.ne.s32.totalorder %s293, %s307
      %p309 = scmp.eq.s32.totalorder %s31, 0
      %p310 = por %p308, %p309
      %s312 = sadd.s32 %s311, 1
      %p315 = scmp.eq.s32.totalorder %s25, 1
      %p316 = scmp.ne.s32.totalorder %s311, %s313
      %p317 = scmp.eq.s32.totalorder %s25, 0
      %p318 = por %p316, %p317
      %p319 = scmp.ne.s32.totalorder %s311, %s313
      %p320 = scmp.eq.s32.totalorder %s30, 1
      %p321 = por %p319, %p320
      %p322 = scmp.ne.s32.totalorder %s313, %s314
      %p323 = scmp.eq.s32.totalorder %s30, 0
      %p324 = por %p322, %p323
      %p325 = scmp.ne.s32.totalorder %s313, %s314
      %p326 = scmp.eq.s32.totalorder %s31, 1
      %p327 = por %p325, %p326
      %p329 = scmp.ne.s32.totalorder %s314, %s328
      %p330 = scmp.eq.s32.totalorder %s31, 0
      %p331 = por %p329, %p330
      %s332 = ssub.s32 %s25, %s32
      %p333 = scmp.eq.s32.totalorder %s332, 0
      %s335 = sadd.s32 %s334, 1
      %s336 = scalar_select %p333, %s334, %s335
      %p339 = pneg %p333
      %p340 = scmp.eq.s32.totalorder %s25, 1
      %p341 = por %p339, %p340
      %p342 = scmp.ne.s32.totalorder %s334, %s337
      %p343 = scmp.eq.s32.totalorder %s25, 0
      %p344 = por %p342, %p343
      %p345 = scmp.ne.s32.totalorder %s334, %s337
      %p346 = scmp.eq.s32.totalorder %s30, 1
      %p347 = por %p345, %p346
      %p348 = scmp.ne.s32.totalorder %s337, %s338
      %p349 = scmp.eq.s32.totalorder %s30, 0
      %p350 = por %p348, %p349
      %p351 = scmp.ne.s32.totalorder %s337, %s338
      %p352 = scmp.eq.s32.totalorder %s31, 1
      %p353 = por %p351, %p352
      %p355 = scmp.ne.s32.totalorder %s338, %s354
      %p356 = scmp.eq.s32.totalorder %s31, 0
      %p357 = por %p355, %p356
      %p358 = scmp.le.s32.totalorder 1, %s25
      %p359 = scmp.lt.s32.totalorder %s25, 3
      %p360 = pnand %p358, %p359
      %p361 = pneg %p360
      // Predicated region
      $region9: #{tpu_custom_call.1} parent=5 // pred_check
        _
      $region10: #{tpu_custom_call.1} parent=5 // pred_check_branch
        %363 = sbr.rel (%p360) target = $region12
      $region11: #{tpu_custom_call.1} parent=5 // pred_region
        %s364 = ssub.s32 %s25, 1
        // Predicated region
        $region13: #{tpu_custom_call.1} parent=11 // pred_check
          %p365 = pneg %p72
        $region14: #{tpu_custom_call.1} parent=11 // pred_check_branch
          %367 = sbr.rel (%p365) target = $region16
        $region15: #{tpu_custom_call.1} parent=11 // pred_region
          %s369 = ssub.s32 16, 16
          %370 = vsyncadd [#allocation3], %s369
          %s372 = sshll.u32 [#allocation2], 4
          %s373 = int_to_ptr.vmem [resolvable:$true] %s372
          %375 = dma.hbm_to_vmem [thread:$0]  %s1, 16, %s373, [#allocation3]
        $region16: #{tpu_custom_call.1} parent=11 // pred_fallthru
          _
        // Predicated region
        $region17: #{tpu_custom_call.1} parent=11 // pred_check
          %p376 = pneg %p93
        $region18: #{tpu_custom_call.1} parent=11 // pred_check_branch
          %378 = sbr.rel (%p376) target = $region20
        $region19: #{tpu_custom_call.1} parent=11 // pred_region
          _
        $region20: #{tpu_custom_call.1} parent=11 // pred_fallthru
          _
        // Predicated region
        $region21: #{tpu_custom_call.1} parent=11 // pred_check
          %p379 = pneg %p114
        $region22: #{tpu_custom_call.1} parent=11 // pred_check_branch
          %381 = sbr.rel (%p379) target = $region24
        $region23: #{tpu_custom_call.1} parent=11 // pred_region
          _
        $region24: #{tpu_custom_call.1} parent=11 // pred_fallthru
          _
        // Predicated region
        $region25: #{tpu_custom_call.1} parent=11 // pred_check
          %p382 = pneg %p135
        $region26: #{tpu_custom_call.1} parent=11 // pred_check_branch
          %384 = sbr.rel (%p382) target = $region28
        $region27: #{tpu_custom_call.1} parent=11 // pred_region
          _
        $region28: #{tpu_custom_call.1} parent=11 // pred_fallthru
          _
        // Predicated region
        $region29: #{tpu_custom_call.1} parent=11 // pred_check
          %p385 = pneg %p156
        $region30: #{tpu_custom_call.1} parent=11 // pred_check_branch
          %387 = sbr.rel (%p385) target = $region32
        $region31: #{tpu_custom_call.1} parent=11 // pred_region
          _
        $region32: #{tpu_custom_call.1} parent=11 // pred_fallthru
          _
        // Predicated region
        $region33: #{tpu_custom_call.1} parent=11 // pred_check
          %p388 = pneg %p177
        $region34: #{tpu_custom_call.1} parent=11 // pred_check_branch
          %390 = sbr.rel (%p388) target = $region36
        $region35: #{tpu_custom_call.1} parent=11 // pred_region
          %s392 = ssub.s32 512, 512
          %393 = vsyncadd [#allocation6], %s392
          %s394 = sshll.u32 [#allocation5], 4
          %s395 = int_to_ptr.vmem [resolvable:$true] %s394
          %400 = dma.hbm_to_vmem [thread:$0]  %s6, 512, %s395, [#allocation6], 64, 64, 4
        $region36: #{tpu_custom_call.1} parent=11 // pred_fallthru
          _
        // Predicated region
        $region37: #{tpu_custom_call.1} parent=11 // pred_check
          %p401 = pneg %p198
        $region38: #{tpu_custom_call.1} parent=11 // pred_check_branch
          %403 = sbr.rel (%p401) target = $region40
        $region39: #{tpu_custom_call.1} parent=11 // pred_region
          _
        $region40: #{tpu_custom_call.1} parent=11 // pred_fallthru
          _
        // Predicated region
        $region41: #{tpu_custom_call.1} parent=11 // pred_check
          %p404 = pneg %p219
        $region42: #{tpu_custom_call.1} parent=11 // pred_check_branch
          %406 = sbr.rel (%p404) target = $region44
        $region43: #{tpu_custom_call.1} parent=11 // pred_region
          _
        $region44: #{tpu_custom_call.1} parent=11 // pred_fallthru
          _
        // Predicated region
        $region45: #{tpu_custom_call.1} parent=11 // pred_check
          %p407 = pneg %p240
        $region46: #{tpu_custom_call.1} parent=11 // pred_check_branch
          %409 = sbr.rel (%p407) target = $region48
        $region47: #{tpu_custom_call.1} parent=11 // pred_region
          _
        $region48: #{tpu_custom_call.1} parent=11 // pred_fallthru
          _
        // Predicated region
        $region49: #{tpu_custom_call.1} parent=11 // pred_check
          %p410 = pneg %p261
        $region50: #{tpu_custom_call.1} parent=11 // pred_check_branch
          %412 = sbr.rel (%p410) target = $region52
        $region51: #{tpu_custom_call.1} parent=11 // pred_region
          _
        $region52: #{tpu_custom_call.1} parent=11 // pred_fallthru
          _
        // Predicated region
        $region53: #{tpu_custom_call.1} parent=11 // pred_check
          %p413 = pneg %p282
        $region54: #{tpu_custom_call.1} parent=11 // pred_check_branch
          %415 = sbr.rel (%p413) target = $region56
        $region55: #{tpu_custom_call.1} parent=11 // pred_region
          _
        $region56: #{tpu_custom_call.1} parent=11 // pred_fallthru
          _
        // Predicated region
        $region57: #{tpu_custom_call.1} parent=11 // pred_check
          %p416 = pneg %p303
        $region58: #{tpu_custom_call.1} parent=11 // pred_check_branch
          %418 = sbr.rel (%p416) target = $region60
        $region59: #{tpu_custom_call.1} parent=11 // pred_region
          _
        $region60: #{tpu_custom_call.1} parent=11 // pred_fallthru
          _
        // Predicated region
        $region61: #{tpu_custom_call.1} parent=11 // pred_check
          %p419 = pneg %p324
        $region62: #{tpu_custom_call.1} parent=11 // pred_check_branch
          %421 = sbr.rel (%p419) target = $region64
        $region63: #{tpu_custom_call.1} parent=11 // pred_region
          _
        $region64: #{tpu_custom_call.1} parent=11 // pred_fallthru
          _
      $region12: #{tpu_custom_call.1} parent=5 // pred_fallthru
        _
      %p422 = scmp.lt.s32.totalorder %s25, 2
      // Predicated region
      $region65: #{tpu_custom_call.1} parent=5 // pred_check
        %p423 = pneg %p422
      $region66: #{tpu_custom_call.1} parent=5 // pred_check_branch
        %425 = sbr.rel (%p423) target = $region68
      $region67: #{tpu_custom_call.1} parent=5 // pred_region
        // Predicated region
        $region69: #{tpu_custom_call.1} parent=67 // pred_check
          %p426 = pneg %p45
        $region70: #{tpu_custom_call.1} parent=67 // pred_check_branch
          %428 = sbr.rel (%p426) target = $region72
        $region71: #{tpu_custom_call.1} parent=67 // pred_region
          %p429 = scmp.lt.s32.totalorder %s25, 1
          %s430 = scalar_select %p429, %s25, 1
          %s431 = smul.addr %s430, 2
          %s432 = smul.addr %s431, 8
          %s433 = scalar_lea.vmem %s0, %s432
        $region72: #{tpu_custom_call.1} parent=67 // pred_fallthru
          _
      $region68: #{tpu_custom_call.1} parent=5 // pred_fallthru
        _
      %p434 = scmp.le.s32.totalorder 1, %s25
      %p435 = scmp.lt.s32.totalorder %s25, 3
      %p436 = pnand %p434, %p435
      %p437 = pneg %p436
      // Predicated region
      $region73: #{tpu_custom_call.1} parent=5 // pred_check
        _
      $region74: #{tpu_custom_call.1} parent=5 // pred_check_branch
        %439 = sbr.rel (%p436) target = $region76
      $region75: #{tpu_custom_call.1} parent=5 // pred_region
        %s440 = ssub.s32 %s25, 1
        // Predicated region
        $region77: #{tpu_custom_call.1} parent=75 // pred_check
          %p441 = pneg %p72
        $region78: #{tpu_custom_call.1} parent=75 // pred_check_branch
          %443 = sbr.rel (%p441) target = $region80
        $region79: #{tpu_custom_call.1} parent=75 // pred_region
          %444 = dma.done [#allocation3], 16
        $region80: #{tpu_custom_call.1} parent=75 // pred_fallthru
          _
        // Predicated region
        $region81: #{tpu_custom_call.1} parent=75 // pred_check
          %p445 = pneg %p177
        $region82: #{tpu_custom_call.1} parent=75 // pred_check_branch
          %447 = sbr.rel (%p445) target = $region84
        $region83: #{tpu_custom_call.1} parent=75 // pred_region
          %448 = dma.done [#allocation6], 512
        $region84: #{tpu_custom_call.1} parent=75 // pred_fallthru
          _
        %p449 = scmp.lt.s32.totalorder %s30, 1
        %s450 = scalar_select %p449, %s30, 1
        %s451 = smul.addr %s450, 2
        %s452 = smul.addr %s451, 8
        %s453 = scalar_lea.vmem %s0, %s452
        %p454 = pneg %p51
        %p455 = pneg %p48
        %p456 = pneg %p72
        %p457 = pneg %p69
        %p458 = pneg %p93
        %p459 = pneg %p90
        %p460 = pneg %p114
        %p461 = pneg %p111
        %p462 = pneg %p135
        %p463 = pneg %p132
        %p464 = pneg %p156
        %p465 = pneg %p153
        %p466 = pneg %p177
        %p467 = pneg %p174
        %p468 = pneg %p198
        %p469 = pneg %p195
        %p470 = pneg %p219
        %p471 = pneg %p216
        %p472 = pneg %p240
        %p473 = pneg %p237
        %p474 = pneg %p261
        %p475 = pneg %p258
        %p476 = pneg %p282
        %p477 = pneg %p279
        %p478 = pneg %p303
        %p479 = pneg %p300
        %p480 = pneg %p324
        %p481 = pneg %p321
        %p482 = pneg %p350
        %p483 = pneg %p347
        %s484 = sand.u32 %s337, 1
        %s485 = scalar_lea.sflag [#allocation4], %s484
        %s486 = sand.u32 %s337, 1
        %s487 = smul.addr %s486, 16
        %s488 = scalar_lea.vmem [#allocation7], %s487
        %p489 = scmp.lt.s32.totalorder %s30, 1
        %s490 = scalar_select %p489, %s30, 1
        %s491 = smul.addr %s490, 2
        %s492 = smul.addr %s491, 8
        %s493 = scalar_lea.vmem %s0, %s492
        %v495 = vld [vmem:[%s493] sm:$0xff]
        %v496 = vld [vmem:[%s493 + $0x8] sm:$0xff]
        %v497 = vld [vmem:[#allocation2] sm:$0x1]
        %v498 = vld [vmem:[%s2] sm:$0x1]
        %vm499 = vcmask 523264
        %v500 = vsel %vm499, %v495, 0.0
        %501 = vadd.xlane.f32.xlu0 %v500
        %v502 = vpop.xlane.xlu0 %501
        %v503 = vsel %vm499, %v496, 0.0
        %504 = vadd.xlane.f32.xlu0 %v503
        %v505 = vpop.xlane.xlu0 %504
        %v506 = vrcp.pop 64.0
        %v507 = vmul.f32 %v502, %v506
        %v508 = vmul.f32 %v505, %v506
        %v509 = vsub.f32 %v495, %v507
        %v510 = vsub.f32 %v496, %v508
        %v511 = vmul.f32 %v509, %v509
        %v512 = vmul.f32 %v510, %v510
        %v513 = vsel %vm499, %v511, 0.0
        %514 = vadd.xlane.f32.xlu0 %v513
        %v515 = vpop.xlane.xlu0 %514
        %v516 = vsel %vm499, %v512, 0.0
        %517 = vadd.xlane.f32.xlu0 %v516
        %v518 = vpop.xlane.xlu0 %517
        %v519 = vmul.f32 %v515, %v506
        %v520 = vmul.f32 %v518, %v506
        %v521 = vadd.f32 %v519, 1e-05
        %v522 = vadd.f32 %v520, 1e-05
        %v523 = vrsqrt.pop %v521
        %v524 = vrsqrt.pop %v522
        %v525 = vmul.f32 %v509, %v523
        %v526 = vmul.f32 %v510, %v524
        %v528 = vlaneseq
        %v529 = vshrl.u32 %v528, 7
        %v530 = vsub.s32 0, %v529
        %v531 = vrot.slane %v497, %v530
        %v533 = vmul.f32 %v525, %v531
        %v534 = vmul.f32 %v526, %v531
        %v536 = vlaneseq
        %v537 = vshrl.u32 %v536, 7
        %v538 = vsub.s32 0, %v537
        %v539 = vrot.slane %v498, %v538
        %v541 = vadd.f32 %v533, %v539
        %v542 = vadd.f32 %v534, %v539
        %v543 = vpack.c.bf16 %v542, %v541
        %v544 = vld [vmem:[%s3] sm:$0xf]
        %v545 = vld [vmem:[%s3 + $0x4] sm:$0xf]
        %v546 = vld [vmem:[%s3 + $0x8] sm:$0xf]
        %v547 = vld [vmem:[%s3 + $0xc] sm:$0xf]
        %v548 = vld [vmem:[%s3 + $0x10] sm:$0xf]
        %v549 = vld [vmem:[%s3 + $0x14] sm:$0xf]
        %v550 = vld [vmem:[%s3 + $0x18] sm:$0xf]
        %v551 = vld [vmem:[%s3 + $0x1c] sm:$0xf]
        %v560 = vunpack.c.l.b16 %v544
        %v561 = vunpack.c.l.b16 %v545
        %v562 = vunpack.c.l.b16 %v546
        %v563 = vunpack.c.l.b16 %v547
        %v564 = vunpack.c.l.b16 %v548
        %v565 = vunpack.c.l.b16 %v549
        %v566 = vunpack.c.l.b16 %v550
        %v567 = vunpack.c.l.b16 %v551
        %v568 = vpack.c.b16 %v561, %v560
        %v569 = vpack.c.b16 %v563, %v562
        %v570 = vpack.c.b16 %v565, %v564
        %v571 = vpack.c.b16 %v567, %v566
        %v577 = vsel %vm499, %v543, 0
        %579 = vmatprep.subr.bf16.mxu0 0
        %580 = vmatpush1.bf16.msra.mxu0 0
        %581 = vmatprep.subr.bf16.mxu0 0
        %582 = vmatpush1.bf16.msra.mxu0 0
        %583 = vmatprep.subr.bf16.mxu0 0
        %584 = vmatpush1.bf16.msra.mxu0 0
        %585 = vmatprep.subr.bf16.mxu0 0
        %586 = vmatpush1.bf16.msra.mxu0 0
        %587 = vmatprep.subr.bf16.mxu0 0
        %588 = vmatpush1.bf16.msra.mxu0 %v571
        %589 = vmatprep.subr.bf16.mxu0 0
        %590 = vmatpush1.bf16.msra.mxu0 %v570
        %591 = vmatprep.subr.bf16.mxu0 0
        %592 = vmatpush1.bf16.msra.mxu0 %v569
        %593 = vmatprep.subr.bf16.mxu0 0
        %594 = vmatpush1.bf16.msra.mxu0 %v568
        %595 = vmatprep.subr.bf16.mxu0 0
        %596 = vmatpush2.bf16.msra.mxu0 0
        %597 = vmatprep.subr.bf16.mxu0 0
        %598 = vmatpush2.bf16.msra.mxu0 0
        %599 = vmatprep.subr.bf16.mxu0 0
        %600 = vmatpush2.bf16.msra.mxu0 0
        %601 = vmatprep.subr.bf16.mxu0 0
        %602 = vmatpush2.bf16.msra.mxu0 0
        %603 = vmatprep.subr.bf16.mxu0 0
        %604 = vmatpush2.bf16.msra.mxu0 0
        %605 = vmatprep.subr.bf16.mxu0 0
        %606 = vmatpush2.bf16.msra.mxu0 0
        %607 = vmatprep.subr.bf16.mxu0 0
        %608 = vmatpush2.bf16.msra.mxu0 0
        %609 = vmatprep.subr.bf16.mxu0 0
        %610 = vmatpush2.bf16.msra.mxu0 0
        %611 = vmatprep.mubr.bf16.mxu0 0
        %612 = vmatmul.mubr.bf16.gmra.mxu0 %v577
        %v613 = vpop.f32.mrf.mxu0
        %v614 = vadd.f32 0.0, %v613
        %v615 = vpop.f32.mrf.mxu0
        %v616 = vpop.f32.mrf.mxu0
        %v617 = vadd.f32 0.0, %v616
        %v618 = vpop.f32.mrf.mxu0
        %619 = vdwg.mxu0
        %v620 = vld [vmem:[%s4] sm:$0xf]
        %v621 = vld [vmem:[%s4 + $0x4] sm:$0xf]
        %v622 = vld [vmem:[%s4 + $0x8] sm:$0xf]
        %v623 = vld [vmem:[%s4 + $0xc] sm:$0xf]
        %v624 = vld [vmem:[%s4 + $0x10] sm:$0xf]
        %v625 = vld [vmem:[%s4 + $0x14] sm:$0xf]
        %v626 = vld [vmem:[%s4 + $0x18] sm:$0xf]
        %v627 = vld [vmem:[%s4 + $0x1c] sm:$0xf]
        %v636 = vunpack.c.l.b16 %v620
        %v637 = vunpack.c.l.b16 %v621
        %v638 = vunpack.c.l.b16 %v622
        %v639 = vunpack.c.l.b16 %v623
        %v640 = vunpack.c.l.b16 %v624
        %v641 = vunpack.c.l.b16 %v625
        %v642 = vunpack.c.l.b16 %v626
        %v643 = vunpack.c.l.b16 %v627
        %v644 = vpack.c.b16 %v637, %v636
        %v645 = vpack.c.b16 %v639, %v638
        %v646 = vpack.c.b16 %v641, %v640
        %v647 = vpack.c.b16 %v643, %v642
        %652 = vmatprep.subr.bf16.mxu0 0
        %653 = vmatpush1.bf16.msra.mxu0 0
        %654 = vmatprep.subr.bf16.mxu0 0
        %655 = vmatpush1.bf16.msra.mxu0 0
        %656 = vmatprep.subr.bf16.mxu0 0
        %657 = vmatpush1.bf16.msra.mxu0 0
        %658 = vmatprep.subr.bf16.mxu0 0
        %659 = vmatpush1.bf16.msra.mxu0 0
        %660 = vmatprep.subr.bf16.mxu0 0
        %661 = vmatpush1.bf16.msra.mxu0 %v647
        %662 = vmatprep.subr.bf16.mxu0 0
        %663 = vmatpush1.bf16.msra.mxu0 %v646
        %664 = vmatprep.subr.bf16.mxu0 0
        %665 = vmatpush1.bf16.msra.mxu0 %v645
        %666 = vmatprep.subr.bf16.mxu0 0
        %667 = vmatpush1.bf16.msra.mxu0 %v644
        %668 = vmatprep.subr.bf16.mxu0 0
        %669 = vmatpush2.bf16.msra.mxu0 0
        %670 = vmatprep.subr.bf16.mxu0 0
        %671 = vmatpush2.bf16.msra.mxu0 0
        %672 = vmatprep.subr.bf16.mxu0 0
        %673 = vmatpush2.bf16.msra.mxu0 0
        %674 = vmatprep.subr.bf16.mxu0 0
        %675 = vmatpush2.bf16.msra.mxu0 0
        %676 = vmatprep.subr.bf16.mxu0 0
        %677 = vmatpush2.bf16.msra.mxu0 0
        %678 = vmatprep.subr.bf16.mxu0 0
        %679 = vmatpush2.bf16.msra.mxu0 0
        %680 = vmatprep.subr.bf16.mxu0 0
        %681 = vmatpush2.bf16.msra.mxu0 0
        %682 = vmatprep.subr.bf16.mxu0 0
        %683 = vmatpush2.bf16.msra.mxu0 0
        %684 = vmatprep.mubr.bf16.mxu0 0
        %685 = vmatmul.mubr.bf16.gmra.mxu0 %v577
        %v686 = vpop.f32.mrf.mxu0
        %v687 = vadd.f32 0.0, %v686
        %v688 = vpop.f32.mrf.mxu0
        %v689 = vpop.f32.mrf.mxu0
        %v690 = vadd.f32 0.0, %v689
        %v691 = vpop.f32.mrf.mxu0
        %692 = vdwg.mxu0
        %v693 = vld [vmem:[%s5] sm:$0xf]
        %v694 = vld [vmem:[%s5 + $0x4] sm:$0xf]
        %v695 = vld [vmem:[%s5 + $0x8] sm:$0xf]
        %v696 = vld [vmem:[%s5 + $0xc] sm:$0xf]
        %v697 = vld [vmem:[%s5 + $0x10] sm:$0xf]
        %v698 = vld [vmem:[%s5 + $0x14] sm:$0xf]
        %v699 = vld [vmem:[%s5 + $0x18] sm:$0xf]
        %v700 = vld [vmem:[%s5 + $0x1c] sm:$0xf]
        %v709 = vunpack.c.l.b16 %v693
        %v710 = vunpack.c.l.b16 %v694
        %v711 = vunpack.c.l.b16 %v695
        %v712 = vunpack.c.l.b16 %v696
        %v713 = vunpack.c.l.b16 %v697
        %v714 = vunpack.c.l.b16 %v698
        %v715 = vunpack.c.l.b16 %v699
        %v716 = vunpack.c.l.b16 %v700
        %v717 = vpack.c.b16 %v710, %v709
        %v718 = vpack.c.b16 %v712, %v711
        %v719 = vpack.c.b16 %v714, %v713
        %v720 = vpack.c.b16 %v716, %v715
        %725 = vmatprep.subr.bf16.mxu0 0
        %726 = vmatpush1.bf16.msra.mxu0 0
        %727 = vmatprep.subr.bf16.mxu0 0
        %728 = vmatpush1.bf16.msra.mxu0 0
        %729 = vmatprep.subr.bf16.mxu0 0
        %730 = vmatpush1.bf16.msra.mxu0 0
        %731 = vmatprep.subr.bf16.mxu0 0
        %732 = vmatpush1.bf16.msra.mxu0 0
        %733 = vmatprep.subr.bf16.mxu0 0
        %734 = vmatpush1.bf16.msra.mxu0 %v720
        %735 = vmatprep.subr.bf16.mxu0 0
        %736 = vmatpush1.bf16.msra.mxu0 %v719
        %737 = vmatprep.subr.bf16.mxu0 0
        %738 = vmatpush1.bf16.msra.mxu0 %v718
        %739 = vmatprep.subr.bf16.mxu0 0
        %740 = vmatpush1.bf16.msra.mxu0 %v717
        %741 = vmatprep.subr.bf16.mxu0 0
        %742 = vmatpush2.bf16.msra.mxu0 0
        %743 = vmatprep.subr.bf16.mxu0 0
        %744 = vmatpush2.bf16.msra.mxu0 0
        %745 = vmatprep.subr.bf16.mxu0 0
        %746 = vmatpush2.bf16.msra.mxu0 0
        %747 = vmatprep.subr.bf16.mxu0 0
        %748 = vmatpush2.bf16.msra.mxu0 0
        %749 = vmatprep.subr.bf16.mxu0 0
        %750 = vmatpush2.bf16.msra.mxu0 0
        %751 = vmatprep.subr.bf16.mxu0 0
        %752 = vmatpush2.bf16.msra.mxu0 0
        %753 = vmatprep.subr.bf16.mxu0 0
        %754 = vmatpush2.bf16.msra.mxu0 0
        %755 = vmatprep.subr.bf16.mxu0 0
        %756 = vmatpush2.bf16.msra.mxu0 0
        %757 = vmatprep.mubr.bf16.mxu0 0
        %758 = vmatmul.mubr.bf16.gmra.mxu0 %v577
        %v759 = vpop.f32.mrf.mxu0
        %v760 = vadd.f32 0.0, %v759
        %v761 = vpop.f32.mrf.mxu0
        %v762 = vpop.f32.mrf.mxu0
        %v763 = vadd.f32 0.0, %v762
        %v764 = vpop.f32.mrf.mxu0
        %765 = vdwg.mxu0
        %v766 = vpack.c.bf16 %v617, %v614
        %768 = vrot.lane.b32.xlu0 %v766, 112
        %v769 = vpop.permute.xlu0 %768
        %770 = vrot.lane.b32.xlu0 %v766, 96
        %v771 = vpop.permute.xlu0 %770
        %772 = vrot.lane.b32.xlu0 %v766, 80
        %v773 = vpop.permute.xlu0 %772
        %v774 = vpack.c.bf16 %v690, %v687
        %776 = vrot.lane.b32.xlu0 %v774, 112
        %v777 = vpop.permute.xlu0 %776
        %779 = vrot.lane.b32.xlu0 %v774, 96
        %v780 = vpop.permute.xlu0 %779
        %782 = vrot.lane.b32.xlu0 %v774, 80
        %v783 = vpop.permute.xlu0 %782
        %v785 = vpack.c.bf16 %v763, %v760
        %787 = vrot.lane.b32.xlu0 %v785, 112
        %v788 = vpop.permute.xlu0 %787
        %790 = vrot.lane.b32.xlu0 %v785, 96
        %v791 = vpop.permute.xlu0 %790
        %793 = vrot.lane.b32.xlu0 %v785, 80
        %v794 = vpop.permute.xlu0 %793
        %796 = vxpose.xlu0.c.b16.start [1/8] %v774, 128
        %797 = vxpose.xlu0.c.b16.cont [2/8] 0, 128
        %798 = vxpose.xlu0.c.b16.cont [3/8] 0, 128
        %799 = vxpose.xlu0.c.b16.cont [4/8] 0, 128
        %800 = vxpose.xlu0.c.b16.cont [5/8] 0, 128
        %801 = vxpose.xlu0.c.b16.cont [6/8] 0, 128
        %802 = vxpose.xlu0.c.b16.cont [7/8] 0, 128
        %803 = vxpose.xlu0.c.b16.end [8/8] 0, 128
        %v804 = vpop.trf.xlu0
        %v805 = vpop.trf.xlu0
        %v806 = vpop.trf.xlu0
        %v807 = vpop.trf.xlu0
        %v808 = vpop.trf.xlu0
        %v809 = vpop.trf.xlu0
        %v810 = vpop.trf.xlu0
        %v811 = vpop.trf.xlu0
        %812 = vxpose.xlu0.c.b16.start [1/8] %v777, 128
        %813 = vxpose.xlu0.c.b16.cont [2/8] 0, 128
        %814 = vxpose.xlu0.c.b16.cont [3/8] 0, 128
        %815 = vxpose.xlu0.c.b16.cont [4/8] 0, 128
        %816 = vxpose.xlu0.c.b16.cont [5/8] 0, 128
        %817 = vxpose.xlu0.c.b16.cont [6/8] 0, 128
        %818 = vxpose.xlu0.c.b16.cont [7/8] 0, 128
        %819 = vxpose.xlu0.c.b16.end [8/8] 0, 128
        %v820 = vpop.trf.xlu0
        %v821 = vpop.trf.xlu0
        %v822 = vpop.trf.xlu0
        %v823 = vpop.trf.xlu0
        %v824 = vpop.trf.xlu0
        %v825 = vpop.trf.xlu0
        %v826 = vpop.trf.xlu0
        %v827 = vpop.trf.xlu0
        %828 = vxpose.xlu0.c.b16.start [1/8] %v780, 128
        %829 = vxpose.xlu0.c.b16.cont [2/8] 0, 128
        %830 = vxpose.xlu0.c.b16.cont [3/8] 0, 128
        %831 = vxpose.xlu0.c.b16.cont [4/8] 0, 128
        %832 = vxpose.xlu0.c.b16.cont [5/8] 0, 128
        %833 = vxpose.xlu0.c.b16.cont [6/8] 0, 128
        %834 = vxpose.xlu0.c.b16.cont [7/8] 0, 128
        %835 = vxpose.xlu0.c.b16.end [8/8] 0, 128
        %v836 = vpop.trf.xlu0
        %v837 = vpop.trf.xlu0
        %v838 = vpop.trf.xlu0
        %v839 = vpop.trf.xlu0
        %v840 = vpop.trf.xlu0
        %v841 = vpop.trf.xlu0
        %v842 = vpop.trf.xlu0
        %v843 = vpop.trf.xlu0
        %844 = vxpose.xlu0.c.b16.start [1/8] %v783, 128
        %845 = vxpose.xlu0.c.b16.cont [2/8] 0, 128
        %846 = vxpose.xlu0.c.b16.cont [3/8] 0, 128
        %847 = vxpose.xlu0.c.b16.cont [4/8] 0, 128
        %848 = vxpose.xlu0.c.b16.cont [5/8] 0, 128
        %849 = vxpose.xlu0.c.b16.cont [6/8] 0, 128
        %850 = vxpose.xlu0.c.b16.cont [7/8] 0, 128
        %851 = vxpose.xlu0.c.b16.end [8/8] 0, 128
        %v852 = vpop.trf.xlu0
        %v853 = vpop.trf.xlu0
        %v854 = vpop.trf.xlu0
        %v855 = vpop.trf.xlu0
        %v856 = vpop.trf.xlu0
        %v857 = vpop.trf.xlu0
        %v858 = vpop.trf.xlu0
        %v859 = vpop.trf.xlu0
        %vm860 = vcmask 130048
        %v862 = vsel %vm860, %v766, 0
        %864 = vmatprep.subr.bf16.mxu0 0
        %865 = vmatpush1.bf16.msra.mxu0 0
        %866 = vmatprep.subr.bf16.mxu0 0
        %867 = vmatpush1.bf16.msra.mxu0 0
        %868 = vmatprep.subr.bf16.mxu0 0
        %869 = vmatpush1.bf16.msra.mxu0 0
        %870 = vmatprep.subr.bf16.mxu0 0
        %871 = vmatpush1.bf16.msra.mxu0 0
        %872 = vmatprep.subr.bf16.mxu0 0
        %873 = vmatpush1.bf16.msra.mxu0 0
        %874 = vmatprep.subr.bf16.mxu0 0
        %875 = vmatpush1.bf16.msra.mxu0 0
        %876 = vmatprep.subr.bf16.mxu0 0
        %877 = vmatpush1.bf16.msra.mxu0 0
        %878 = vmatprep.subr.bf16.mxu0 0
        %879 = vmatpush1.bf16.msra.mxu0 %v804
        %880 = vmatprep.subr.bf16.mxu0 0
        %881 = vmatpush2.bf16.msra.mxu0 0
        %882 = vmatprep.subr.bf16.mxu0 0
        %883 = vmatpush2.bf16.msra.mxu0 0
        %884 = vmatprep.subr.bf16.mxu0 0
        %885 = vmatpush2.bf16.msra.mxu0 0
        %886 = vmatprep.subr.bf16.mxu0 0
        %887 = vmatpush2.bf16.msra.mxu0 0
        %888 = vmatprep.subr.bf16.mxu0 0
        %889 = vmatpush2.bf16.msra.mxu0 0
        %890 = vmatprep.subr.bf16.mxu0 0
        %891 = vmatpush2.bf16.msra.mxu0 0
        %892 = vmatprep.subr.bf16.mxu0 0
        %893 = vmatpush2.bf16.msra.mxu0 0
        %894 = vmatprep.subr.bf16.mxu0 0
        %895 = vmatpush2.bf16.msra.mxu0 0
        %896 = vmatprep.mubr.bf16.mxu0 0
        %897 = vmatmul.mubr.bf16.gmra.mxu0 %v862
        %v898 = vpop.f32.mrf.mxu0
        %v899 = vadd.f32 0.0, %v898
        %v900 = vpop.f32.mrf.mxu0
        %v901 = vpop.f32.mrf.mxu0
        %v902 = vadd.f32 0.0, %v901
        %v903 = vpop.f32.mrf.mxu0
        %904 = vdwg.mxu0
        %v906 = vsel %vm860, %v769, 0
        %908 = vmatprep.subr.bf16.mxu0 0
        %909 = vmatpush1.bf16.msra.mxu0 0
        %910 = vmatprep.subr.bf16.mxu0 0
        %911 = vmatpush1.bf16.msra.mxu0 0
        %912 = vmatprep.subr.bf16.mxu0 0
        %913 = vmatpush1.bf16.msra.mxu0 0
        %914 = vmatprep.subr.bf16.mxu0 0
        %915 = vmatpush1.bf16.msra.mxu0 0
        %916 = vmatprep.subr.bf16.mxu0 0
        %917 = vmatpush1.bf16.msra.mxu0 0
        %918 = vmatprep.subr.bf16.mxu0 0
        %919 = vmatpush1.bf16.msra.mxu0 0
        %920 = vmatprep.subr.bf16.mxu0 0
        %921 = vmatpush1.bf16.msra.mxu0 0
        %922 = vmatprep.subr.bf16.mxu0 0
        %923 = vmatpush1.bf16.msra.mxu0 %v820
        %924 = vmatprep.subr.bf16.mxu0 0
        %925 = vmatpush2.bf16.msra.mxu0 0
        %926 = vmatprep.subr.bf16.mxu0 0
        %927 = vmatpush2.bf16.msra.mxu0 0
        %928 = vmatprep.subr.bf16.mxu0 0
        %929 = vmatpush2.bf16.msra.mxu0 0
        %930 = vmatprep.subr.bf16.mxu0 0
        %931 = vmatpush2.bf16.msra.mxu0 0
        %932 = vmatprep.subr.bf16.mxu0 0
        %933 = vmatpush2.bf16.msra.mxu0 0
        %934 = vmatprep.subr.bf16.mxu0 0
        %935 = vmatpush2.bf16.msra.mxu0 0
        %936 = vmatprep.subr.bf16.mxu0 0
        %937 = vmatpush2.bf16.msra.mxu0 0
        %938 = vmatprep.subr.bf16.mxu0 0
        %939 = vmatpush2.bf16.msra.mxu0 0
        %940 = vmatprep.mubr.bf16.mxu0 0
        %941 = vmatmul.mubr.bf16.gmra.mxu0 %v906
        %v942 = vpop.f32.mrf.mxu0
        %v943 = vadd.f32 0.0, %v942
        %v944 = vpop.f32.mrf.mxu0
        %v945 = vpop.f32.mrf.mxu0
        %v946 = vadd.f32 0.0, %v945
        %v947 = vpop.f32.mrf.mxu0
        %948 = vdwg.mxu0
        %v950 = vsel %vm860, %v771, 0
        %952 = vmatprep.subr.bf16.mxu0 0
        %953 = vmatpush1.bf16.msra.mxu0 0
        %954 = vmatprep.subr.bf16.mxu0 0
        %955 = vmatpush1.bf16.msra.mxu0 0
        %956 = vmatprep.subr.bf16.mxu0 0
        %957 = vmatpush1.bf16.msra.mxu0 0
        %958 = vmatprep.subr.bf16.mxu0 0
        %959 = vmatpush1.bf16.msra.mxu0 0
        %960 = vmatprep.subr.bf16.mxu0 0
        %961 = vmatpush1.bf16.msra.mxu0 0
        %962 = vmatprep.subr.bf16.mxu0 0
        %963 = vmatpush1.bf16.msra.mxu0 0
        %964 = vmatprep.subr.bf16.mxu0 0
        %965 = vmatpush1.bf16.msra.mxu0 0
        %966 = vmatprep.subr.bf16.mxu0 0
        %967 = vmatpush1.bf16.msra.mxu0 %v836
        %968 = vmatprep.subr.bf16.mxu0 0
        %969 = vmatpush2.bf16.msra.mxu0 0
        %970 = vmatprep.subr.bf16.mxu0 0
        %971 = vmatpush2.bf16.msra.mxu0 0
        %972 = vmatprep.subr.bf16.mxu0 0
        %973 = vmatpush2.bf16.msra.mxu0 0
        %974 = vmatprep.subr.bf16.mxu0 0
        %975 = vmatpush2.bf16.msra.mxu0 0
        %976 = vmatprep.subr.bf16.mxu0 0
        %977 = vmatpush2.bf16.msra.mxu0 0
        %978 = vmatprep.subr.bf16.mxu0 0
        %979 = vmatpush2.bf16.msra.mxu0 0
        %980 = vmatprep.subr.bf16.mxu0 0
        %981 = vmatpush2.bf16.msra.mxu0 0
        %982 = vmatprep.subr.bf16.mxu0 0
        %983 = vmatpush2.bf16.msra.mxu0 0
        %984 = vmatprep.mubr.bf16.mxu0 0
        %985 = vmatmul.mubr.bf16.gmra.mxu0 %v950
        %v986 = vpop.f32.mrf.mxu0
        %v987 = vadd.f32 0.0, %v986
        %v988 = vpop.f32.mrf.mxu0
        %v989 = vpop.f32.mrf.mxu0
        %v990 = vadd.f32 0.0, %v989
        %v991 = vpop.f32.mrf.mxu0
        %992 = vdwg.mxu0
        %v994 = vsel %vm860, %v773, 0
        %996 = vmatprep.subr.bf16.mxu0 0
        %997 = vmatpush1.bf16.msra.mxu0 0
        %998 = vmatprep.subr.bf16.mxu0 0
        %999 = vmatpush1.bf16.msra.mxu0 0
        %1000 = vmatprep.subr.bf16.mxu0 0
        %1001 = vmatpush1.bf16.msra.mxu0 0
        %1002 = vmatprep.subr.bf16.mxu0 0
        %1003 = vmatpush1.bf16.msra.mxu0 0
        %1004 = vmatprep.subr.bf16.mxu0 0
        %1005 = vmatpush1.bf16.msra.mxu0 0
        %1006 = vmatprep.subr.bf16.mxu0 0
        %1007 = vmatpush1.bf16.msra.mxu0 0
        %1008 = vmatprep.subr.bf16.mxu0 0
        %1009 = vmatpush1.bf16.msra.mxu0 0
        %1010 = vmatprep.subr.bf16.mxu0 0
        %1011 = vmatpush1.bf16.msra.mxu0 %v852
        %1012 = vmatprep.subr.bf16.mxu0 0
        %1013 = vmatpush2.bf16.msra.mxu0 0
        %1014 = vmatprep.subr.bf16.mxu0 0
        %1015 = vmatpush2.bf16.msra.mxu0 0
        %1016 = vmatprep.subr.bf16.mxu0 0
        %1017 = vmatpush2.bf16.msra.mxu0 0
        %1018 = vmatprep.subr.bf16.mxu0 0
        %1019 = vmatpush2.bf16.msra.mxu0 0
        %1020 = vmatprep.subr.bf16.mxu0 0
        %1021 = vmatpush2.bf16.msra.mxu0 0
        %1022 = vmatprep.subr.bf16.mxu0 0
        %1023 = vmatpush2.bf16.msra.mxu0 0
        %1024 = vmatprep.subr.bf16.mxu0 0
        %1025 = vmatpush2.bf16.msra.mxu0 0
        %1026 = vmatprep.subr.bf16.mxu0 0
        %1027 = vmatpush2.bf16.msra.mxu0 0
        %1028 = vmatprep.mubr.bf16.mxu0 0
        %1029 = vmatmul.mubr.bf16.gmra.mxu0 %v994
        %v1030 = vpop.f32.mrf.mxu0
        %v1031 = vadd.f32 0.0, %v1030
        %v1032 = vpop.f32.mrf.mxu0
        %v1033 = vpop.f32.mrf.mxu0
        %v1034 = vadd.f32 0.0, %v1033
        %v1035 = vpop.f32.mrf.mxu0
        %1036 = vdwg.mxu0
        %v1037 = vsel %vm860, %v899, -inf
        %1038 = vmax.xlane.f32.xlu0 %v1037
        %v1039 = vpop.xlane.xlu0 %1038
        %v1040 = vsel %vm860, %v902, -inf
        %1041 = vmax.xlane.f32.xlu0 %v1040
        %v1042 = vpop.xlane.xlu0 %1041
        %v1043 = vsel %vm860, %v943, -inf
        %1044 = vmax.xlane.f32.xlu0 %v1043
        %v1045 = vpop.xlane.xlu0 %1044
        %v1046 = vsel %vm860, %v946, -inf
        %1047 = vmax.xlane.f32.xlu0 %v1046
        %v1048 = vpop.xlane.xlu0 %1047
        %v1049 = vsel %vm860, %v987, -inf
        %1050 = vmax.xlane.f32.xlu0 %v1049
        %v1051 = vpop.xlane.xlu0 %1050
        %v1052 = vsel %vm860, %v990, -inf
        %1053 = vmax.xlane.f32.xlu0 %v1052
        %v1054 = vpop.xlane.xlu0 %1053
        %v1055 = vsel %vm860, %v1031, -inf
        %1056 = vmax.xlane.f32.xlu0 %v1055
        %v1057 = vpop.xlane.xlu0 %1056
        %v1058 = vsel %vm860, %v1034, -inf
        %1059 = vmax.xlane.f32.xlu0 %v1058
        %v1060 = vpop.xlane.xlu0 %1059
        %v1061 = vsub.f32 %v899, %v1039
        %v1062 = vsub.f32 %v902, %v1042
        %v1063 = vsub.f32 %v943, %v1045
        %v1064 = vsub.f32 %v946, %v1048
        %v1065 = vsub.f32 %v987, %v1051
        %v1066 = vsub.f32 %v990, %v1054
        %v1067 = vsub.f32 %v1031, %v1057
        %v1068 = vsub.f32 %v1034, %v1060
        %v1069 = vmul.f32 %v1061, 1.442695
        %v1070 = vpow.pop %v1069
        %v1071 = vmul.f32 %v1062, 1.442695
        %v1072 = vpow.pop %v1071
        %v1073 = vmul.f32 %v1063, 1.442695
        %v1074 = vpow.pop %v1073
        %v1075 = vmul.f32 %v1064, 1.442695
        %v1076 = vpow.pop %v1075
        %v1077 = vmul.f32 %v1065, 1.442695
        %v1078 = vpow.pop %v1077
        %v1079 = vmul.f32 %v1066, 1.442695
        %v1080 = vpow.pop %v1079
        %v1081 = vmul.f32 %v1067, 1.442695
        %v1082 = vpow.pop %v1081
        %v1083 = vmul.f32 %v1068, 1.442695
        %v1084 = vpow.pop %v1083
        %v1085 = vsel %vm860, %v1070, 0.0
        %1086 = vadd.xlane.f32.xlu0 %v1085
        %v1087 = vpop.xlane.xlu0 %1086
        %v1088 = vsel %vm860, %v1072, 0.0
        %1089 = vadd.xlane.f32.xlu0 %v1088
        %v1090 = vpop.xlane.xlu0 %1089
        %v1091 = vsel %vm860, %v1074, 0.0
        %1092 = vadd.xlane.f32.xlu0 %v1091
        %v1093 = vpop.xlane.xlu0 %1092
        %v1094 = vsel %vm860, %v1076, 0.0
        %1095 = vadd.xlane.f32.xlu0 %v1094
        %v1096 = vpop.xlane.xlu0 %1095
        %v1097 = vsel %vm860, %v1078, 0.0
        %1098 = vadd.xlane.f32.xlu0 %v1097
        %v1099 = vpop.xlane.xlu0 %1098
        %v1100 = vsel %vm860, %v1080, 0.0
        %1101 = vadd.xlane.f32.xlu0 %v1100
        %v1102 = vpop.xlane.xlu0 %1101
        %v1103 = vsel %vm860, %v1082, 0.0
        %1104 = vadd.xlane.f32.xlu0 %v1103
        %v1105 = vpop.xlane.xlu0 %1104
        %v1106 = vsel %vm860, %v1084, 0.0
        %1107 = vadd.xlane.f32.xlu0 %v1106
        %v1108 = vpop.xlane.xlu0 %1107
        %v1109 = vrcp.pop %v1087
        %v1110 = vrcp.pop %v1090
        %v1111 = vrcp.pop %v1093
        %v1112 = vrcp.pop %v1096
        %v1113 = vrcp.pop %v1099
        %v1114 = vrcp.pop %v1102
        %v1115 = vrcp.pop %v1105
        %v1116 = vrcp.pop %v1108
        %v1117 = vmul.f32 %v1070, %v1109
        %v1118 = vmul.f32 %v1072, %v1110
        %v1119 = vmul.f32 %v1074, %v1111
        %v1120 = vmul.f32 %v1076, %v1112
        %v1121 = vmul.f32 %v1078, %v1113
        %v1122 = vmul.f32 %v1080, %v1114
        %v1123 = vmul.f32 %v1082, %v1115
        %v1124 = vmul.f32 %v1084, %v1116
        %v1125 = vpack.c.bf16 %v1118, %v1117
        %v1126 = vpack.c.bf16 %v1120, %v1119
        %v1127 = vpack.c.bf16 %v1122, %v1121
        %v1128 = vpack.c.bf16 %v1124, %v1123
        %1129 = vxpose.xlu0.c.b16.start [1/8] %v785, 128
        %1130 = vxpose.xlu0.c.b16.cont [2/8] 0, 128
        %1131 = vxpose.xlu0.c.b16.cont [3/8] 0, 128
        %1132 = vxpose.xlu0.c.b16.cont [4/8] 0, 128
        %1133 = vxpose.xlu0.c.b16.cont [5/8] 0, 128
        %1134 = vxpose.xlu0.c.b16.cont [6/8] 0, 128
        %1135 = vxpose.xlu0.c.b16.cont [7/8] 0, 128
        %1136 = vxpose.xlu0.c.b16.end [8/8] 0, 128
        %v1137 = vpop.trf.xlu0
        %v1138 = vpop.trf.xlu0
        %v1139 = vpop.trf.xlu0
        %v1140 = vpop.trf.xlu0
        %v1141 = vpop.trf.xlu0
        %v1142 = vpop.trf.xlu0
        %v1143 = vpop.trf.xlu0
        %v1144 = vpop.trf.xlu0
        %1145 = vxpose.xlu0.c.b16.start [1/8] %v788, 128
        %1146 = vxpose.xlu0.c.b16.cont [2/8] 0, 128
        %1147 = vxpose.xlu0.c.b16.cont [3/8] 0, 128
        %1148 = vxpose.xlu0.c.b16.cont [4/8] 0, 128
        %1149 = vxpose.xlu0.c.b16.cont [5/8] 0, 128
        %1150 = vxpose.xlu0.c.b16.cont [6/8] 0, 128
        %1151 = vxpose.xlu0.c.b16.cont [7/8] 0, 128
        %1152 = vxpose.xlu0.c.b16.end [8/8] 0, 128
        %v1153 = vpop.trf.xlu0
        %v1154 = vpop.trf.xlu0
        %v1155 = vpop.trf.xlu0
        %v1156 = vpop.trf.xlu0
        %v1157 = vpop.trf.xlu0
        %v1158 = vpop.trf.xlu0
        %v1159 = vpop.trf.xlu0
        %v1160 = vpop.trf.xlu0
        %1161 = vxpose.xlu0.c.b16.start [1/8] %v791, 128
        %1162 = vxpose.xlu0.c.b16.cont [2/8] 0, 128
        %1163 = vxpose.xlu0.c.b16.cont [3/8] 0, 128
        %1164 = vxpose.xlu0.c.b16.cont [4/8] 0, 128
        %1165 = vxpose.xlu0.c.b16.cont [5/8] 0, 128
        %1166 = vxpose.xlu0.c.b16.cont [6/8] 0, 128
        %1167 = vxpose.xlu0.c.b16.cont [7/8] 0, 128
        %1168 = vxpose.xlu0.c.b16.end [8/8] 0, 128
        %v1169 = vpop.trf.xlu0
        %v1170 = vpop.trf.xlu0
        %v1171 = vpop.trf.xlu0
        %v1172 = vpop.trf.xlu0
        %v1173 = vpop.trf.xlu0
        %v1174 = vpop.trf.xlu0
        %v1175 = vpop.trf.xlu0
        %v1176 = vpop.trf.xlu0
        %1177 = vxpose.xlu0.c.b16.start [1/8] %v794, 128
        %1178 = vxpose.xlu0.c.b16.cont [2/8] 0, 128
        %1179 = vxpose.xlu0.c.b16.cont [3/8] 0, 128
        %1180 = vxpose.xlu0.c.b16.cont [4/8] 0, 128
        %1181 = vxpose.xlu0.c.b16.cont [5/8] 0, 128
        %1182 = vxpose.xlu0.c.b16.cont [6/8] 0, 128
        %1183 = vxpose.xlu0.c.b16.cont [7/8] 0, 128
        %1184 = vxpose.xlu0.c.b16.end [8/8] 0, 128
        %v1185 = vpop.trf.xlu0
        %v1186 = vpop.trf.xlu0
        %v1187 = vpop.trf.xlu0
        %v1188 = vpop.trf.xlu0
        %v1189 = vpop.trf.xlu0
        %v1190 = vpop.trf.xlu0
        %v1191 = vpop.trf.xlu0
        %v1192 = vpop.trf.xlu0
        %v1194 = vsel %vm860, %v1137, 0
        %v1197 = vsel %vm860, %v1125, 0
        %1199 = vmatprep.subr.bf16.mxu0 0
        %1200 = vmatpush1.bf16.xpose.msra.mxu0 0
        %1201 = vmatprep.subr.bf16.mxu0 0
        %1202 = vmatpush1.bf16.xpose.msra.mxu0 0
        %1203 = vmatprep.subr.bf16.mxu0 0
        %1204 = vmatpush1.bf16.xpose.msra.mxu0 0
        %1205 = vmatprep.subr.bf16.mxu0 0
        %1206 = vmatpush1.bf16.xpose.msra.mxu0 0
        %1207 = vmatprep.subr.bf16.mxu0 0
        %1208 = vmatpush1.bf16.xpose.msra.mxu0 0
        %1209 = vmatprep.subr.bf16.mxu0 0
        %1210 = vmatpush1.bf16.xpose.msra.mxu0 0
        %1211 = vmatprep.subr.bf16.mxu0 0
        %1212 = vmatpush1.bf16.xpose.msra.mxu0 0
        %1213 = vmatprep.subr.bf16.mxu0 0
        %1214 = vmatpush1.bf16.xpose.msra.mxu0 %v1197
        %1215 = vmatprep.subr.bf16.mxu0 0
        %1216 = vmatpush2.bf16.xpose.msra.mxu0 0
        %1217 = vmatprep.subr.bf16.mxu0 0
        %1218 = vmatpush2.bf16.xpose.msra.mxu0 0
        %1219 = vmatprep.subr.bf16.mxu0 0
        %1220 = vmatpush2.bf16.xpose.msra.mxu0 0
        %1221 = vmatprep.subr.bf16.mxu0 0
        %1222 = vmatpush2.bf16.xpose.msra.mxu0 0
        %1223 = vmatprep.subr.bf16.mxu0 0
        %1224 = vmatpush2.bf16.xpose.msra.mxu0 0
        %1225 = vmatprep.subr.bf16.mxu0 0
        %1226 = vmatpush2.bf16.xpose.msra.mxu0 0
        %1227 = vmatprep.subr.bf16.mxu0 0
        %1228 = vmatpush2.bf16.xpose.msra.mxu0 0
        %1229 = vmatprep.subr.bf16.mxu0 0
        %1230 = vmatpush2.bf16.xpose.msra.mxu0 0
        %1231 = vmatprep.mubr.bf16.mxu0 0
        %1232 = vmatmul.mubr.bf16.gmra.mxu0 %v1194
        %v1233 = vpop.f32.mrf.mxu0
        %v1234 = vadd.f32 0.0, %v1233
        %v1235 = vpop.f32.mrf.mxu0
        %v1236 = vpop.f32.mrf.mxu0
        %v1237 = vadd.f32 0.0, %v1236
        %v1238 = vpop.f32.mrf.mxu0
        %1239 = vdwg.mxu0
        %v1241 = vsel %vm860, %v1153, 0
        %v1244 = vsel %vm860, %v1126, 0
        %1246 = vmatprep.subr.bf16.mxu0 0
        %1247 = vmatpush1.bf16.xpose.msra.mxu0 0
        %1248 = vmatprep.subr.bf16.mxu0 0
        %1249 = vmatpush1.bf16.xpose.msra.mxu0 0
        %1250 = vmatprep.subr.bf16.mxu0 0
        %1251 = vmatpush1.bf16.xpose.msra.mxu0 0
        %1252 = vmatprep.subr.bf16.mxu0 0
        %1253 = vmatpush1.bf16.xpose.msra.mxu0 0
        %1254 = vmatprep.subr.bf16.mxu0 0
        %1255 = vmatpush1.bf16.xpose.msra.mxu0 0
        %1256 = vmatprep.subr.bf16.mxu0 0
        %1257 = vmatpush1.bf16.xpose.msra.mxu0 0
        %1258 = vmatprep.subr.bf16.mxu0 0
        %1259 = vmatpush1.bf16.xpose.msra.mxu0 0
        %1260 = vmatprep.subr.bf16.mxu0 0
        %1261 = vmatpush1.bf16.xpose.msra.mxu0 %v1244
        %1262 = vmatprep.subr.bf16.mxu0 0
        %1263 = vmatpush2.bf16.xpose.msra.mxu0 0
        %1264 = vmatprep.subr.bf16.mxu0 0
        %1265 = vmatpush2.bf16.xpose.msra.mxu0 0
        %1266 = vmatprep.subr.bf16.mxu0 0
        %1267 = vmatpush2.bf16.xpose.msra.mxu0 0
        %1268 = vmatprep.subr.bf16.mxu0 0
        %1269 = vmatpush2.bf16.xpose.msra.mxu0 0
        %1270 = vmatprep.subr.bf16.mxu0 0
        %1271 = vmatpush2.bf16.xpose.msra.mxu0 0
        %1272 = vmatprep.subr.bf16.mxu0 0
        %1273 = vmatpush2.bf16.xpose.msra.mxu0 0
        %1274 = vmatprep.subr.bf16.mxu0 0
        %1275 = vmatpush2.bf16.xpose.msra.mxu0 0
        %1276 = vmatprep.subr.bf16.mxu0 0
        %1277 = vmatpush2.bf16.xpose.msra.mxu0 0
        %1278 = vmatprep.mubr.bf16.mxu0 0
        %1279 = vmatmul.mubr.bf16.gmra.mxu0 %v1241
        %v1280 = vpop.f32.mrf.mxu0
        %v1281 = vadd.f32 0.0, %v1280
        %v1282 = vpop.f32.mrf.mxu0
        %v1283 = vpop.f32.mrf.mxu0
        %v1284 = vadd.f32 0.0, %v1283
        %v1285 = vpop.f32.mrf.mxu0
        %1286 = vdwg.mxu0
        %v1288 = vsel %vm860, %v1169, 0
        %v1291 = vsel %vm860, %v1127, 0
        %1293 = vmatprep.subr.bf16.mxu0 0
        %1294 = vmatpush1.bf16.xpose.msra.mxu0 0
        %1295 = vmatprep.subr.bf16.mxu0 0
        %1296 = vmatpush1.bf16.xpose.msra.mxu0 0
        %1297 = vmatprep.subr.bf16.mxu0 0
        %1298 = vmatpush1.bf16.xpose.msra.mxu0 0
        %1299 = vmatprep.subr.bf16.mxu0 0
        %1300 = vmatpush1.bf16.xpose.msra.mxu0 0
        %1301 = vmatprep.subr.bf16.mxu0 0
        %1302 = vmatpush1.bf16.xpose.msra.mxu0 0
        %1303 = vmatprep.subr.bf16.mxu0 0
        %1304 = vmatpush1.bf16.xpose.msra.mxu0 0
        %1305 = vmatprep.subr.bf16.mxu0 0
        %1306 = vmatpush1.bf16.xpose.msra.mxu0 0
        %1307 = vmatprep.subr.bf16.mxu0 0
        %1308 = vmatpush1.bf16.xpose.msra.mxu0 %v1291
        %1309 = vmatprep.subr.bf16.mxu0 0
        %1310 = vmatpush2.bf16.xpose.msra.mxu0 0
        %1311 = vmatprep.subr.bf16.mxu0 0
        %1312 = vmatpush2.bf16.xpose.msra.mxu0 0
        %1313 = vmatprep.subr.bf16.mxu0 0
        %1314 = vmatpush2.bf16.xpose.msra.mxu0 0
        %1315 = vmatprep.subr.bf16.mxu0 0
        %1316 = vmatpush2.bf16.xpose.msra.mxu0 0
        %1317 = vmatprep.subr.bf16.mxu0 0
        %1318 = vmatpush2.bf16.xpose.msra.mxu0 0
        %1319 = vmatprep.subr.bf16.mxu0 0
        %1320 = vmatpush2.bf16.xpose.msra.mxu0 0
        %1321 = vmatprep.subr.bf16.mxu0 0
        %1322 = vmatpush2.bf16.xpose.msra.mxu0 0
        %1323 = vmatprep.subr.bf16.mxu0 0
        %1324 = vmatpush2.bf16.xpose.msra.mxu0 0
        %1325 = vmatprep.mubr.bf16.mxu0 0
        %1326 = vmatmul.mubr.bf16.gmra.mxu0 %v1288
        %v1327 = vpop.f32.mrf.mxu0
        %v1328 = vadd.f32 0.0, %v1327
        %v1329 = vpop.f32.mrf.mxu0
        %v1330 = vpop.f32.mrf.mxu0
        %v1331 = vadd.f32 0.0, %v1330
        %v1332 = vpop.f32.mrf.mxu0
        %1333 = vdwg.mxu0
        %v1335 = vsel %vm860, %v1185, 0
        %v1338 = vsel %vm860, %v1128, 0
        %1340 = vmatprep.subr.bf16.mxu0 0
        %1341 = vmatpush1.bf16.xpose.msra.mxu0 0
        %1342 = vmatprep.subr.bf16.mxu0 0
        %1343 = vmatpush1.bf16.xpose.msra.mxu0 0
        %1344 = vmatprep.subr.bf16.mxu0 0
        %1345 = vmatpush1.bf16.xpose.msra.mxu0 0
        %1346 = vmatprep.subr.bf16.mxu0 0
        %1347 = vmatpush1.bf16.xpose.msra.mxu0 0
        %1348 = vmatprep.subr.bf16.mxu0 0
        %1349 = vmatpush1.bf16.xpose.msra.mxu0 0
        %1350 = vmatprep.subr.bf16.mxu0 0
        %1351 = vmatpush1.bf16.xpose.msra.mxu0 0
        %1352 = vmatprep.subr.bf16.mxu0 0
        %1353 = vmatpush1.bf16.xpose.msra.mxu0 0
        %1354 = vmatprep.subr.bf16.mxu0 0
        %1355 = vmatpush1.bf16.xpose.msra.mxu0 %v1338
        %1356 = vmatprep.subr.bf16.mxu0 0
        %1357 = vmatpush2.bf16.xpose.msra.mxu0 0
        %1358 = vmatprep.subr.bf16.mxu0 0
        %1359 = vmatpush2.bf16.xpose.msra.mxu0 0
        %1360 = vmatprep.subr.bf16.mxu0 0
        %1361 = vmatpush2.bf16.xpose.msra.mxu0 0
        %1362 = vmatprep.subr.bf16.mxu0 0
        %1363 = vmatpush2.bf16.xpose.msra.mxu0 0
        %1364 = vmatprep.subr.bf16.mxu0 0
        %1365 = vmatpush2.bf16.xpose.msra.mxu0 0
        %1366 = vmatprep.subr.bf16.mxu0 0
        %1367 = vmatpush2.bf16.xpose.msra.mxu0 0
        %1368 = vmatprep.subr.bf16.mxu0 0
        %1369 = vmatpush2.bf16.xpose.msra.mxu0 0
        %1370 = vmatprep.subr.bf16.mxu0 0
        %1371 = vmatpush2.bf16.xpose.msra.mxu0 0
        %1372 = vmatprep.mubr.bf16.mxu0 0
        %1373 = vmatmul.mubr.bf16.gmra.mxu0 %v1335
        %v1374 = vpop.f32.mrf.mxu0
        %v1375 = vadd.f32 0.0, %v1374
        %v1376 = vpop.f32.mrf.mxu0
        %v1377 = vpop.f32.mrf.mxu0
        %v1378 = vadd.f32 0.0, %v1377
        %v1379 = vpop.f32.mrf.mxu0
        %1380 = vdwg.mxu0
        %1381 = vxpose.xlu0.b32.start [1/16] %v1234, 128
        %1382 = vxpose.xlu0.b32.cont [2/16] %v1237, 128
        %1383 = vxpose.xlu0.b32.cont [3/16] 0.0, 128
        %1384 = vxpose.xlu0.b32.cont [4/16] 0.0, 128
        %1385 = vxpose.xlu0.b32.cont [5/16] 0.0, 128
        %1386 = vxpose.xlu0.b32.cont [6/16] 0.0, 128
        %1387 = vxpose.xlu0.b32.cont [7/16] 0.0, 128
        %1388 = vxpose.xlu0.b32.cont [8/16] 0.0, 128
        %1389 = vxpose.xlu0.b32.cont [9/16] 0.0, 128
        %1390 = vxpose.xlu0.b32.cont [10/16] 0.0, 128
        %1391 = vxpose.xlu0.b32.cont [11/16] 0.0, 128
        %1392 = vxpose.xlu0.b32.cont [12/16] 0.0, 128
        %1393 = vxpose.xlu0.b32.cont [13/16] 0.0, 128
        %1394 = vxpose.xlu0.b32.cont [14/16] 0.0, 128
        %1395 = vxpose.xlu0.b32.cont [15/16] 0.0, 128
        %1396 = vxpose.xlu0.b32.end [16/16] 0.0, 128
        %v1397 = vpop.trf.xlu0
        %v1398 = vpop.trf.xlu0
        %v1399 = vpop.trf.xlu0
        %v1400 = vpop.trf.xlu0
        %v1401 = vpop.trf.xlu0
        %v1402 = vpop.trf.xlu0
        %v1403 = vpop.trf.xlu0
        %v1404 = vpop.trf.xlu0
        %v1405 = vpop.trf.xlu0
        %v1406 = vpop.trf.xlu0
        %v1407 = vpop.trf.xlu0
        %v1408 = vpop.trf.xlu0
        %v1409 = vpop.trf.xlu0
        %v1410 = vpop.trf.xlu0
        %v1411 = vpop.trf.xlu0
        %v1412 = vpop.trf.xlu0
        %1413 = vxpose.xlu0.b32.start [1/16] %v1281, 128
        %1414 = vxpose.xlu0.b32.cont [2/16] %v1284, 128
        %1415 = vxpose.xlu0.b32.cont [3/16] 0.0, 128
        %1416 = vxpose.xlu0.b32.cont [4/16] 0.0, 128
        %1417 = vxpose.xlu0.b32.cont [5/16] 0.0, 128
        %1418 = vxpose.xlu0.b32.cont [6/16] 0.0, 128
        %1419 = vxpose.xlu0.b32.cont [7/16] 0.0, 128
        %1420 = vxpose.xlu0.b32.cont [8/16] 0.0, 128
        %1421 = vxpose.xlu0.b32.cont [9/16] 0.0, 128
        %1422 = vxpose.xlu0.b32.cont [10/16] 0.0, 128
        %1423 = vxpose.xlu0.b32.cont [11/16] 0.0, 128
        %1424 = vxpose.xlu0.b32.cont [12/16] 0.0, 128
        %1425 = vxpose.xlu0.b32.cont [13/16] 0.0, 128
        %1426 = vxpose.xlu0.b32.cont [14/16] 0.0, 128
        %1427 = vxpose.xlu0.b32.cont [15/16] 0.0, 128
        %1428 = vxpose.xlu0.b32.end [16/16] 0.0, 128
        %v1429 = vpop.trf.xlu0
        %v1430 = vpop.trf.xlu0
        %v1431 = vpop.trf.xlu0
        %v1432 = vpop.trf.xlu0
        %v1433 = vpop.trf.xlu0
        %v1434 = vpop.trf.xlu0
        %v1435 = vpop.trf.xlu0
        %v1436 = vpop.trf.xlu0
        %v1437 = vpop.trf.xlu0
        %v1438 = vpop.trf.xlu0
        %v1439 = vpop.trf.xlu0
        %v1440 = vpop.trf.xlu0
        %v1441 = vpop.trf.xlu0
        %v1442 = vpop.trf.xlu0
        %v1443 = vpop.trf.xlu0
        %v1444 = vpop.trf.xlu0
        %1445 = vxpose.xlu0.b32.start [1/16] %v1328, 128
        %1446 = vxpose.xlu0.b32.cont [2/16] %v1331, 128
        %1447 = vxpose.xlu0.b32.cont [3/16] 0.0, 128
        %1448 = vxpose.xlu0.b32.cont [4/16] 0.0, 128
        %1449 = vxpose.xlu0.b32.cont [5/16] 0.0, 128
        %1450 = vxpose.xlu0.b32.cont [6/16] 0.0, 128
        %1451 = vxpose.xlu0.b32.cont [7/16] 0.0, 128
        %1452 = vxpose.xlu0.b32.cont [8/16] 0.0, 128
        %1453 = vxpose.xlu0.b32.cont [9/16] 0.0, 128
        %1454 = vxpose.xlu0.b32.cont [10/16] 0.0, 128
        %1455 = vxpose.xlu0.b32.cont [11/16] 0.0, 128
        %1456 = vxpose.xlu0.b32.cont [12/16] 0.0, 128
        %1457 = vxpose.xlu0.b32.cont [13/16] 0.0, 128
        %1458 = vxpose.xlu0.b32.cont [14/16] 0.0, 128
        %1459 = vxpose.xlu0.b32.cont [15/16] 0.0, 128
        %1460 = vxpose.xlu0.b32.end [16/16] 0.0, 128
        %v1461 = vpop.trf.xlu0
        %v1462 = vpop.trf.xlu0
        %v1463 = vpop.trf.xlu0
        %v1464 = vpop.trf.xlu0
        %v1465 = vpop.trf.xlu0
        %v1466 = vpop.trf.xlu0
        %v1467 = vpop.trf.xlu0
        %v1468 = vpop.trf.xlu0
        %v1469 = vpop.trf.xlu0
        %v1470 = vpop.trf.xlu0
        %v1471 = vpop.trf.xlu0
        %v1472 = vpop.trf.xlu0
        %v1473 = vpop.trf.xlu0
        %v1474 = vpop.trf.xlu0
        %v1475 = vpop.trf.xlu0
        %v1476 = vpop.trf.xlu0
        %1477 = vxpose.xlu0.b32.start [1/16] %v1375, 128
        %1478 = vxpose.xlu0.b32.cont [2/16] %v1378, 128
        %1479 = vxpose.xlu0.b32.cont [3/16] 0.0, 128
        %1480 = vxpose.xlu0.b32.cont [4/16] 0.0, 128
        %1481 = vxpose.xlu0.b32.cont [5/16] 0.0, 128
        %1482 = vxpose.xlu0.b32.cont [6/16] 0.0, 128
        %1483 = vxpose.xlu0.b32.cont [7/16] 0.0, 128
        %1484 = vxpose.xlu0.b32.cont [8/16] 0.0, 128
        %1485 = vxpose.xlu0.b32.cont [9/16] 0.0, 128
        %1486 = vxpose.xlu0.b32.cont [10/16] 0.0, 128
        %1487 = vxpose.xlu0.b32.cont [11/16] 0.0, 128
        %1488 = vxpose.xlu0.b32.cont [12/16] 0.0, 128
        %1489 = vxpose.xlu0.b32.cont [13/16] 0.0, 128
        %1490 = vxpose.xlu0.b32.cont [14/16] 0.0, 128
        %1491 = vxpose.xlu0.b32.cont [15/16] 0.0, 128
        %1492 = vxpose.xlu0.b32.end [16/16] 0.0, 128
        %v1493 = vpop.trf.xlu0
        %v1494 = vpop.trf.xlu0
        %v1495 = vpop.trf.xlu0
        %v1496 = vpop.trf.xlu0
        %v1497 = vpop.trf.xlu0
        %v1498 = vpop.trf.xlu0
        %v1499 = vpop.trf.xlu0
        %v1500 = vpop.trf.xlu0
        %v1501 = vpop.trf.xlu0
        %v1502 = vpop.trf.xlu0
        %v1503 = vpop.trf.xlu0
        %v1504 = vpop.trf.xlu0
        %v1505 = vpop.trf.xlu0
        %v1506 = vpop.trf.xlu0
        %v1507 = vpop.trf.xlu0
        %v1508 = vpop.trf.xlu0
        %v1509 = vcombine.low %v1397, %v1461
        %v1510 = vcombine.high %v1397, %v1461
        %v1512 = vunpack.c.l.s4 1983009808
        %v1513 = vunpack.c.0.s8 %v1512
        %v1514 = vlaneseq
        %v1515 = vshrl.u32 %v1514, 7
        %v1516 = vsub.s32 %v1513, %v1515
        %v1517 = vrot.slane %v1509, %v1516
        %v1519 = vunpack.c.l.s4 1983009808
        %v1520 = vunpack.c.0.s8 %v1519
        %v1521 = vlaneseq
        %v1522 = vshrl.u32 %v1521, 7
        %v1523 = vsub.s32 %v1520, %v1522
        %v1524 = vrot.slane %v1510, %v1523
        %v1525 = vcombine.low %v1429, %v1493
        %v1526 = vcombine.high %v1429, %v1493
        %v1528 = vunpack.c.l.s4 1983009808
        %v1529 = vunpack.c.0.s8 %v1528
        %v1530 = vlaneseq
        %v1531 = vshrl.u32 %v1530, 7
        %v1532 = vsub.s32 %v1529, %v1531
        %v1533 = vrot.slane %v1525, %v1532
        %v1535 = vunpack.c.l.s4 1983009808
        %v1536 = vunpack.c.0.s8 %v1535
        %v1537 = vlaneseq
        %v1538 = vshrl.u32 %v1537, 7
        %v1539 = vsub.s32 %v1536, %v1538
        %v1540 = vrot.slane %v1526, %v1539
        %v1541 = vcombine.low %v1517, %v1533
        %v1542 = vcombine.high %v1517, %v1533
        %v1544 = vunpack.c.l.s4 1934713408
        %v1545 = vunpack.c.0.s8 %v1544
        %v1546 = vlaneseq
        %v1547 = vshrl.u32 %v1546, 7
        %v1548 = vsub.s32 %v1545, %v1547
        %v1549 = vrot.slane %v1541, %v1548
        %v1551 = vunpack.c.l.s4 1934713408
        %v1552 = vunpack.c.0.s8 %v1551
        %v1553 = vlaneseq
        %v1554 = vshrl.u32 %v1553, 7
        %v1555 = vsub.s32 %v1552, %v1554
        %v1556 = vrot.slane %v1542, %v1555
        %v1557 = vcombine.low %v1524, %v1540
        %v1558 = vcombine.high %v1524, %v1540
        %v1560 = vunpack.c.l.s4 1934713408
        %v1561 = vunpack.c.0.s8 %v1560
        %v1562 = vlaneseq
        %v1563 = vshrl.u32 %v1562, 7
        %v1564 = vsub.s32 %v1561, %v1563
        %v1565 = vrot.slane %v1557, %v1564
        %v1567 = vunpack.c.l.s4 1934713408
        %v1568 = vunpack.c.0.s8 %v1567
        %v1569 = vlaneseq
        %v1570 = vshrl.u32 %v1569, 7
        %v1571 = vsub.s32 %v1568, %v1570
        %v1572 = vrot.slane %v1558, %v1571
        %v1573 = vcombine.high %v1549, 0.0
        %v1574 = vcombine.high %v1556, 0.0
        %v1575 = vcombine.high %v1565, 0.0
        %v1576 = vcombine.high %v1572, 0.0
        %v1577 = vcombine.low %v1398, %v1462
        %v1578 = vcombine.high %v1398, %v1462
        %v1580 = vunpack.c.l.s4 1983009808
        %v1581 = vunpack.c.0.s8 %v1580
        %v1582 = vlaneseq
        %v1583 = vshrl.u32 %v1582, 7
        %v1584 = vsub.s32 %v1581, %v1583
        %v1585 = vrot.slane %v1577, %v1584
        %v1587 = vunpack.c.l.s4 1983009808
        %v1588 = vunpack.c.0.s8 %v1587
        %v1589 = vlaneseq
        %v1590 = vshrl.u32 %v1589, 7
        %v1591 = vsub.s32 %v1588, %v1590
        %v1592 = vrot.slane %v1578, %v1591
        %v1593 = vcombine.low %v1430, %v1494
        %v1594 = vcombine.high %v1430, %v1494
        %v1596 = vunpack.c.l.s4 1983009808
        %v1597 = vunpack.c.0.s8 %v1596
        %v1598 = vlaneseq
        %v1599 = vshrl.u32 %v1598, 7
        %v1600 = vsub.s32 %v1597, %v1599
        %v1601 = vrot.slane %v1593, %v1600
        %v1603 = vunpack.c.l.s4 1983009808
        %v1604 = vunpack.c.0.s8 %v1603
        %v1605 = vlaneseq
        %v1606 = vshrl.u32 %v1605, 7
        %v1607 = vsub.s32 %v1604, %v1606
        %v1608 = vrot.slane %v1594, %v1607
        %v1609 = vcombine.low %v1585, %v1601
        %v1610 = vcombine.high %v1585, %v1601
        %v1612 = vunpack.c.l.s4 1934713408
        %v1613 = vunpack.c.0.s8 %v1612
        %v1614 = vlaneseq
        %v1615 = vshrl.u32 %v1614, 7
        %v1616 = vsub.s32 %v1613, %v1615
        %v1617 = vrot.slane %v1609, %v1616
        %v1619 = vunpack.c.l.s4 1934713408
        %v1620 = vunpack.c.0.s8 %v1619
        %v1621 = vlaneseq
        %v1622 = vshrl.u32 %v1621, 7
        %v1623 = vsub.s32 %v1620, %v1622
        %v1624 = vrot.slane %v1610, %v1623
        %v1625 = vcombine.low %v1592, %v1608
        %v1626 = vcombine.high %v1592, %v1608
        %v1628 = vunpack.c.l.s4 1934713408
        %v1629 = vunpack.c.0.s8 %v1628
        %v1630 = vlaneseq
        %v1631 = vshrl.u32 %v1630, 7
        %v1632 = vsub.s32 %v1629, %v1631
        %v1633 = vrot.slane %v1625, %v1632
        %v1635 = vunpack.c.l.s4 1934713408
        %v1636 = vunpack.c.0.s8 %v1635
        %v1637 = vlaneseq
        %v1638 = vshrl.u32 %v1637, 7
        %v1639 = vsub.s32 %v1636, %v1638
        %v1640 = vrot.slane %v1626, %v1639
        %v1641 = vcombine.high %v1617, 0.0
        %v1642 = vcombine.high %v1624, 0.0
        %v1643 = vcombine.high %v1633, 0.0
        %v1644 = vcombine.high %v1640, 0.0
        %v1645 = vcombine.low %v1549, %v1556
        %v1647 = vunpack.c.l.s4 1983009808
        %v1648 = vunpack.c.0.s8 %v1647
        %v1649 = vlaneseq
        %v1650 = vshrl.u32 %v1649, 7
        %v1651 = vsub.s32 %v1648, %v1650
        %v1652 = vrot.slane %v1645, %v1651
        %v1653 = vcombine.low %v1573, %v1574
        %v1655 = vunpack.c.l.s4 1983009808
        %v1656 = vunpack.c.0.s8 %v1655
        %v1657 = vlaneseq
        %v1658 = vshrl.u32 %v1657, 7
        %v1659 = vsub.s32 %v1656, %v1658
        %v1660 = vrot.slane %v1653, %v1659
        %v1661 = vcombine.low %v1565, %v1572
        %v1663 = vunpack.c.l.s4 1983009808
        %v1664 = vunpack.c.0.s8 %v1663
        %v1665 = vlaneseq
        %v1666 = vshrl.u32 %v1665, 7
        %v1667 = vsub.s32 %v1664, %v1666
        %v1668 = vrot.slane %v1661, %v1667
        %v1669 = vcombine.low %v1575, %v1576
        %v1671 = vunpack.c.l.s4 1983009808
        %v1672 = vunpack.c.0.s8 %v1671
        %v1673 = vlaneseq
        %v1674 = vshrl.u32 %v1673, 7
        %v1675 = vsub.s32 %v1672, %v1674
        %v1676 = vrot.slane %v1669, %v1675
        %v1677 = vcombine.low %v1652, %v1660
        %v1678 = vcombine.high %v1652, %v1660
        %v1680 = vunpack.c.l.s4 1934713408
        %v1681 = vunpack.c.0.s8 %v1680
        %v1682 = vlaneseq
        %v1683 = vshrl.u32 %v1682, 7
        %v1684 = vsub.s32 %v1681, %v1683
        %v1685 = vrot.slane %v1677, %v1684
        %v1687 = vunpack.c.l.s4 1934713408
        %v1688 = vunpack.c.0.s8 %v1687
        %v1689 = vlaneseq
        %v1690 = vshrl.u32 %v1689, 7
        %v1691 = vsub.s32 %v1688, %v1690
        %v1692 = vrot.slane %v1678, %v1691
        %v1693 = vcombine.low %v1668, %v1676
        %v1694 = vcombine.high %v1668, %v1676
        %v1696 = vunpack.c.l.s4 1934713408
        %v1697 = vunpack.c.0.s8 %v1696
        %v1698 = vlaneseq
        %v1699 = vshrl.u32 %v1698, 7
        %v1700 = vsub.s32 %v1697, %v1699
        %v1701 = vrot.slane %v1693, %v1700
        %v1703 = vunpack.c.l.s4 1934713408
        %v1704 = vunpack.c.0.s8 %v1703
        %v1705 = vlaneseq
        %v1706 = vshrl.u32 %v1705, 7
        %v1707 = vsub.s32 %v1704, %v1706
        %v1708 = vrot.slane %v1694, %v1707
        %v1709 = vcombine.low %v1685, %v1701
        %v1710 = vcombine.high %v1685, %v1701
        %v1711 = vcombine.low %v1692, %v1708
        %v1712 = vcombine.high %v1692, %v1708
        %v1713 = vcombine.low %v1617, %v1624
        %v1715 = vunpack.c.l.s4 1983009808
        %v1716 = vunpack.c.0.s8 %v1715
        %v1717 = vlaneseq
        %v1718 = vshrl.u32 %v1717, 7
        %v1719 = vsub.s32 %v1716, %v1718
        %v1720 = vrot.slane %v1713, %v1719
        %v1721 = vcombine.low %v1641, %v1642
        %v1723 = vunpack.c.l.s4 1983009808
        %v1724 = vunpack.c.0.s8 %v1723
        %v1725 = vlaneseq
        %v1726 = vshrl.u32 %v1725, 7
        %v1727 = vsub.s32 %v1724, %v1726
        %v1728 = vrot.slane %v1721, %v1727
        %v1729 = vcombine.low %v1633, %v1640
        %v1731 = vunpack.c.l.s4 1983009808
        %v1732 = vunpack.c.0.s8 %v1731
        %v1733 = vlaneseq
        %v1734 = vshrl.u32 %v1733, 7
        %v1735 = vsub.s32 %v1732, %v1734
        %v1736 = vrot.slane %v1729, %v1735
        %v1737 = vcombine.low %v1643, %v1644
        %v1739 = vunpack.c.l.s4 1983009808
        %v1740 = vunpack.c.0.s8 %v1739
        %v1741 = vlaneseq
        %v1742 = vshrl.u32 %v1741, 7
        %v1743 = vsub.s32 %v1740, %v1742
        %v1744 = vrot.slane %v1737, %v1743
        %v1745 = vcombine.low %v1720, %v1728
        %v1746 = vcombine.high %v1720, %v1728
        %v1748 = vunpack.c.l.s4 1934713408
        %v1749 = vunpack.c.0.s8 %v1748
        %v1750 = vlaneseq
        %v1751 = vshrl.u32 %v1750, 7
        %v1752 = vsub.s32 %v1749, %v1751
        %v1753 = vrot.slane %v1745, %v1752
        %v1755 = vunpack.c.l.s4 1934713408
        %v1756 = vunpack.c.0.s8 %v1755
        %v1757 = vlaneseq
        %v1758 = vshrl.u32 %v1757, 7
        %v1759 = vsub.s32 %v1756, %v1758
        %v1760 = vrot.slane %v1746, %v1759
        %v1761 = vcombine.low %v1736, %v1744
        %v1762 = vcombine.high %v1736, %v1744
        %v1764 = vunpack.c.l.s4 1934713408
        %v1765 = vunpack.c.0.s8 %v1764
        %v1766 = vlaneseq
        %v1767 = vshrl.u32 %v1766, 7
        %v1768 = vsub.s32 %v1765, %v1767
        %v1769 = vrot.slane %v1761, %v1768
        %v1771 = vunpack.c.l.s4 1934713408
        %v1772 = vunpack.c.0.s8 %v1771
        %v1773 = vlaneseq
        %v1774 = vshrl.u32 %v1773, 7
        %v1775 = vsub.s32 %v1772, %v1774
        %v1776 = vrot.slane %v1762, %v1775
        %v1777 = vcombine.low %v1753, %v1769
        %v1778 = vcombine.high %v1753, %v1769
        %v1779 = vcombine.low %v1760, %v1776
        %v1780 = vcombine.high %v1760, %v1776
        %1783 = vrot.lane.b32.xlu0 %v1710, 16
        %v1784 = vpop.permute.xlu0 %1783
        %1785 = vrot.lane.b32.xlu0 %v1778, 16
        %v1786 = vpop.permute.xlu0 %1785
        %1791 = vrot.lane.b32.xlu0 %v1711, 32
        %v1792 = vpop.permute.xlu0 %1791
        %1793 = vrot.lane.b32.xlu0 %v1779, 32
        %v1794 = vpop.permute.xlu0 %1793
        %1799 = vrot.lane.b32.xlu0 %v1712, 48
        %v1800 = vpop.permute.xlu0 %1799
        %1801 = vrot.lane.b32.xlu0 %v1780, 48
        %v1802 = vpop.permute.xlu0 %1801
        %v1805 = vsel %vm860, %v1709, %v1784
        %v1806 = vsel %vm860, %v1777, %v1786
        %vm1807 = vcmask 261120
        %v1808 = vsel %vm1807, %v1805, %v1792
        %v1809 = vsel %vm1807, %v1806, %v1794
        %vm1810 = vcmask 392192
        %v1811 = vsel %vm1810, %v1808, %v1800
        %v1812 = vsel %vm1810, %v1809, %v1802
        %v1813 = vpack.c.bf16 %v1812, %v1811
        %v1814 = vld [vmem:[#allocation5] sm:$0xf]
        %v1815 = vld [vmem:[#allocation5 + $0x4] sm:$0xf]
        %v1816 = vld [vmem:[#allocation5 + $0x8] sm:$0xf]
        %v1817 = vld [vmem:[#allocation5 + $0xc] sm:$0xf]
        %v1818 = vld [vmem:[#allocation5 + $0x10] sm:$0xf]
        %v1819 = vld [vmem:[#allocation5 + $0x14] sm:$0xf]
        %v1820 = vld [vmem:[#allocation5 + $0x18] sm:$0xf]
        %v1821 = vld [vmem:[#allocation5 + $0x1c] sm:$0xf]
        %v1822 = vld [vmem:[%s7] sm:$0x1]
        %v1824 = vlaneseq
        %v1825 = vshrl.u32 %v1824, 7
        %v1826 = vsub.s32 0, %v1825
        %v1827 = vrot.slane %v1822, %v1826
        %v1837 = vunpack.c.l.b16 %v1814
        %v1838 = vunpack.c.l.b16 %v1815
        %v1839 = vunpack.c.l.b16 %v1816
        %v1840 = vunpack.c.l.b16 %v1817
        %v1841 = vunpack.c.l.b16 %v1818
        %v1842 = vunpack.c.l.b16 %v1819
        %v1843 = vunpack.c.l.b16 %v1820
        %v1844 = vunpack.c.l.b16 %v1821
        %v1845 = vpack.c.b16 %v1838, %v1837
        %v1846 = vpack.c.b16 %v1840, %v1839
        %v1847 = vpack.c.b16 %v1842, %v1841
        %v1848 = vpack.c.b16 %v1844, %v1843
        %v1854 = vsel %vm499, %v1813, 0
        %1856 = vmatprep.subr.bf16.mxu0 0
        %1857 = vmatpush1.bf16.msra.mxu0 0
        %1858 = vmatprep.subr.bf16.mxu0 0
        %1859 = vmatpush1.bf16.msra.mxu0 0
        %1860 = vmatprep.subr.bf16.mxu0 0
        %1861 = vmatpush1.bf16.msra.mxu0 0
        %1862 = vmatprep.subr.bf16.mxu0 0
        %1863 = vmatpush1.bf16.msra.mxu0 0
        %1864 = vmatprep.subr.bf16.mxu0 0
        %1865 = vmatpush1.bf16.msra.mxu0 %v1848
        %1866 = vmatprep.subr.bf16.mxu0 0
        %1867 = vmatpush1.bf16.msra.mxu0 %v1847
        %1868 = vmatprep.subr.bf16.mxu0 0
        %1869 = vmatpush1.bf16.msra.mxu0 %v1846
        %1870 = vmatprep.subr.bf16.mxu0 0
        %1871 = vmatpush1.bf16.msra.mxu0 %v1845
        %1872 = vmatprep.subr.bf16.mxu0 0
        %1873 = vmatpush2.bf16.msra.mxu0 0
        %1874 = vmatprep.subr.bf16.mxu0 0
        %1875 = vmatpush2.bf16.msra.mxu0 0
        %1876 = vmatprep.subr.bf16.mxu0 0
        %1877 = vmatpush2.bf16.msra.mxu0 0
        %1878 = vmatprep.subr.bf16.mxu0 0
        %1879 = vmatpush2.bf16.msra.mxu0 0
        %1880 = vmatprep.subr.bf16.mxu0 0
        %1881 = vmatpush2.bf16.msra.mxu0 0
        %1882 = vmatprep.subr.bf16.mxu0 0
        %1883 = vmatpush2.bf16.msra.mxu0 0
        %1884 = vmatprep.subr.bf16.mxu0 0
        %1885 = vmatpush2.bf16.msra.mxu0 0
        %1886 = vmatprep.subr.bf16.mxu0 0
        %1887 = vmatpush2.bf16.msra.mxu0 0
        %1888 = vmatprep.mubr.bf16.mxu0 0
        %1889 = vmatmul.mubr.bf16.gmra.mxu0 %v1854
        %v1890 = vpop.f32.mrf.mxu0
        %v1891 = vadd.f32 %v1827, %v1890
        %v1892 = vpop.f32.mrf.mxu0
        %v1893 = vpop.f32.mrf.mxu0
        %v1894 = vadd.f32 %v1827, %v1893
        %v1895 = vpop.f32.mrf.mxu0
        %1896 = vdwg.mxu0
        %v1897 = vadd.f32 %v495, %v1891
        %v1898 = vadd.f32 %v496, %v1894
        %v1899 = vld [vmem:[%s8] sm:$0x1]
        %v1900 = vld [vmem:[%s9] sm:$0x1]
        %v1901 = vsel %vm499, %v1897, 0.0
        %1902 = vadd.xlane.f32.xlu0 %v1901
        %v1903 = vpop.xlane.xlu0 %1902
        %v1904 = vsel %vm499, %v1898, 0.0
        %1905 = vadd.xlane.f32.xlu0 %v1904
        %v1906 = vpop.xlane.xlu0 %1905
        %v1907 = vmul.f32 %v1903, %v506
        %v1908 = vmul.f32 %v1906, %v506
        %v1909 = vsub.f32 %v1897, %v1907
        %v1910 = vsub.f32 %v1898, %v1908
        %v1911 = vmul.f32 %v1909, %v1909
        %v1912 = vmul.f32 %v1910, %v1910
        %v1913 = vsel %vm499, %v1911, 0.0
        %1914 = vadd.xlane.f32.xlu0 %v1913
        %v1915 = vpop.xlane.xlu0 %1914
        %v1916 = vsel %vm499, %v1912, 0.0
        %1917 = vadd.xlane.f32.xlu0 %v1916
        %v1918 = vpop.xlane.xlu0 %1917
        %v1919 = vmul.f32 %v1915, %v506
        %v1920 = vmul.f32 %v1918, %v506
        %v1921 = vadd.f32 %v1919, 1e-05
        %v1922 = vadd.f32 %v1920, 1e-05
        %v1923 = vrsqrt.pop %v1921
        %v1924 = vrsqrt.pop %v1922
        %v1925 = vmul.f32 %v1909, %v1923
        %v1926 = vmul.f32 %v1910, %v1924
        %v1928 = vlaneseq
        %v1929 = vshrl.u32 %v1928, 7
        %v1930 = vsub.s32 0, %v1929
        %v1931 = vrot.slane %v1899, %v1930
        %v1933 = vmul.f32 %v1925, %v1931
        %v1934 = vmul.f32 %v1926, %v1931
        %v1936 = vlaneseq
        %v1937 = vshrl.u32 %v1936, 7
        %v1938 = vsub.s32 0, %v1937
        %v1939 = vrot.slane %v1900, %v1938
        %v1941 = vadd.f32 %v1933, %v1939
        %v1942 = vadd.f32 %v1934, %v1939
        %v1943 = vpack.c.bf16 %v1942, %v1941
        %v1944 = vld [vmem:[%s10] sm:$0xff]
        %v1945 = vld [vmem:[%s10 + $0x8] sm:$0xff]
        %v1946 = vld [vmem:[%s10 + $0x10] sm:$0xff]
        %v1947 = vld [vmem:[%s10 + $0x18] sm:$0xff]
        %v1948 = vld [vmem:[%s10 + $0x20] sm:$0xff]
        %v1949 = vld [vmem:[%s10 + $0x28] sm:$0xff]
        %v1950 = vld [vmem:[%s10 + $0x30] sm:$0xff]
        %v1951 = vld [vmem:[%s10 + $0x38] sm:$0xff]
        %v1952 = vld [vmem:[%s11] sm:$0x3]
        %v1954 = vlaneseq
        %v1955 = vshrl.u32 %v1954, 7
        %v1956 = vsub.s32 0, %v1955
        %v1957 = vrot.slane %v1952, %v1956
        %v1958 = vlaneseq
        %v1959 = vshrl.u32 %v1958, 7
        %v1960 = vsub.s32 1, %v1959
        %v1961 = vrot.slane %v1952, %v1960
        %v1972 = vunpack.c.l.b16 %v1944
        %v1973 = vunpack.c.h.b16 %v1944
        %v1974 = vunpack.c.l.b16 %v1945
        %v1975 = vunpack.c.h.b16 %v1945
        %v1976 = vunpack.c.l.b16 %v1946
        %v1977 = vunpack.c.h.b16 %v1946
        %v1978 = vunpack.c.l.b16 %v1947
        %v1979 = vunpack.c.h.b16 %v1947
        %v1980 = vunpack.c.l.b16 %v1948
        %v1981 = vunpack.c.h.b16 %v1948
        %v1982 = vunpack.c.l.b16 %v1949
        %v1983 = vunpack.c.h.b16 %v1949
        %v1984 = vunpack.c.l.b16 %v1950
        %v1985 = vunpack.c.h.b16 %v1950
        %v1986 = vunpack.c.l.b16 %v1951
        %v1987 = vunpack.c.h.b16 %v1951
        %v1988 = vpack.c.b16 %v1974, %v1972
        %v1989 = vpack.c.b16 %v1975, %v1973
        %v1990 = vpack.c.b16 %v1978, %v1976
        %v1991 = vpack.c.b16 %v1979, %v1977
        %v1992 = vpack.c.b16 %v1982, %v1980
        %v1993 = vpack.c.b16 %v1983, %v1981
        %v1994 = vpack.c.b16 %v1986, %v1984
        %v1995 = vpack.c.b16 %v1987, %v1985
        %v2005 = vsel %vm499, %v1943, 0
        %2007 = vmatprep.subr.bf16.mxu0 0
        %2008 = vmatpush1.bf16.msra.mxu0 0
        %2009 = vmatprep.subr.bf16.mxu0 0
        %2010 = vmatpush1.bf16.msra.mxu0 0
        %2011 = vmatprep.subr.bf16.mxu0 0
        %2012 = vmatpush1.bf16.msra.mxu0 0
        %2013 = vmatprep.subr.bf16.mxu0 0
        %2014 = vmatpush1.bf16.msra.mxu0 0
        %2015 = vmatprep.subr.bf16.mxu0 %v1995
        %2016 = vmatpush1.bf16.msra.mxu0 %v1994
        %2017 = vmatprep.subr.bf16.mxu0 %v1993
        %2018 = vmatpush1.bf16.msra.mxu0 %v1992
        %2019 = vmatprep.subr.bf16.mxu0 %v1991
        %2020 = vmatpush1.bf16.msra.mxu0 %v1990
        %2021 = vmatprep.subr.bf16.mxu0 %v1989
        %2022 = vmatpush1.bf16.msra.mxu0 %v1988
        %2023 = vmatprep.subr.bf16.mxu0 0
        %2024 = vmatpush2.bf16.msra.mxu0 0
        %2025 = vmatprep.subr.bf16.mxu0 0
        %2026 = vmatpush2.bf16.msra.mxu0 0
        %2027 = vmatprep.subr.bf16.mxu0 0
        %2028 = vmatpush2.bf16.msra.mxu0 0
        %2029 = vmatprep.subr.bf16.mxu0 0
        %2030 = vmatpush2.bf16.msra.mxu0 0
        %2031 = vmatprep.subr.bf16.mxu0 0
        %2032 = vmatpush2.bf16.msra.mxu0 0
        %2033 = vmatprep.subr.bf16.mxu0 0
        %2034 = vmatpush2.bf16.msra.mxu0 0
        %2035 = vmatprep.subr.bf16.mxu0 0
        %2036 = vmatpush2.bf16.msra.mxu0 0
        %2037 = vmatprep.subr.bf16.mxu0 0
        %2038 = vmatpush2.bf16.msra.mxu0 0
        %2039 = vmatprep.mubr.bf16.mxu0 0
        %2040 = vmatmul.mubr.bf16.gmra.mxu0 %v2005
        %v2041 = vpop.f32.mrf.mxu0
        %v2042 = vadd.f32 %v1957, %v2041
        %v2043 = vpop.f32.mrf.mxu0
        %v2044 = vadd.f32 %v1961, %v2043
        %v2045 = vpop.f32.mrf.mxu0
        %v2046 = vadd.f32 %v1957, %v2045
        %v2047 = vpop.f32.mrf.mxu0
        %v2048 = vadd.f32 %v1961, %v2047
        %2049 = vdwg.mxu0
        %v2050 = vmul.f32 %v2042, 0.5
        %v2051 = vmul.f32 %v2044, 0.5
        %v2052 = vmul.f32 %v2046, 0.5
        %v2053 = vmul.f32 %v2048, 0.5
        %v2054 = vmul.f32 %v2042, 0.70710677
        %v2055 = vmul.f32 %v2044, 0.70710677
        %v2056 = vmul.f32 %v2046, 0.70710677
        %v2057 = vmul.f32 %v2048, 0.70710677
        %v2058 = verf.f32.pop %v2054
        %v2059 = verf.f32.pop %v2055
        %v2060 = verf.f32.pop %v2056
        %v2061 = verf.f32.pop %v2057
        %v2062 = vadd.f32 %v2058, 1.0
        %v2063 = vadd.f32 %v2059, 1.0
        %v2064 = vadd.f32 %v2060, 1.0
        %v2065 = vadd.f32 %v2061, 1.0
        %v2066 = vmul.f32 %v2050, %v2062
        %v2067 = vmul.f32 %v2051, %v2063
        %v2068 = vmul.f32 %v2052, %v2064
        %v2069 = vmul.f32 %v2053, %v2065
        %v2070 = vpack.c.bf16 %v2068, %v2066
        %v2071 = vpack.c.bf16 %v2069, %v2067
        %v2072 = vld [vmem:[%s12] sm:$0xf]
        %v2073 = vld [vmem:[%s12 + $0x4] sm:$0xf]
        %v2074 = vld [vmem:[%s12 + $0x8] sm:$0xf]
        %v2075 = vld [vmem:[%s12 + $0xc] sm:$0xf]
        %v2076 = vld [vmem:[%s12 + $0x10] sm:$0xf]
        %v2077 = vld [vmem:[%s12 + $0x14] sm:$0xf]
        %v2078 = vld [vmem:[%s12 + $0x18] sm:$0xf]
        %v2079 = vld [vmem:[%s12 + $0x1c] sm:$0xf]
        %v2080 = vld [vmem:[%s12 + $0x20] sm:$0xf]
        %v2081 = vld [vmem:[%s12 + $0x24] sm:$0xf]
        %v2082 = vld [vmem:[%s12 + $0x28] sm:$0xf]
        %v2083 = vld [vmem:[%s12 + $0x2c] sm:$0xf]
        %v2084 = vld [vmem:[%s12 + $0x30] sm:$0xf]
        %v2085 = vld [vmem:[%s12 + $0x34] sm:$0xf]
        %v2086 = vld [vmem:[%s12 + $0x38] sm:$0xf]
        %v2087 = vld [vmem:[%s12 + $0x3c] sm:$0xf]
        %v2088 = vld [vmem:[%s12 + $0x40] sm:$0xf]
        %v2089 = vld [vmem:[%s12 + $0x44] sm:$0xf]
        %v2090 = vld [vmem:[%s12 + $0x48] sm:$0xf]
        %v2091 = vld [vmem:[%s12 + $0x4c] sm:$0xf]
        %v2092 = vld [vmem:[%s12 + $0x50] sm:$0xf]
        %v2093 = vld [vmem:[%s12 + $0x54] sm:$0xf]
        %v2094 = vld [vmem:[%s12 + $0x58] sm:$0xf]
        %v2095 = vld [vmem:[%s12 + $0x5c] sm:$0xf]
        %v2096 = vld [vmem:[%s12 + $0x60] sm:$0xf]
        %v2097 = vld [vmem:[%s12 + $0x64] sm:$0xf]
        %v2098 = vld [vmem:[%s12 + $0x68] sm:$0xf]
        %v2099 = vld [vmem:[%s12 + $0x6c] sm:$0xf]
        %v2100 = vld [vmem:[%s12 + $0x70] sm:$0xf]
        %v2101 = vld [vmem:[%s12 + $0x74] sm:$0xf]
        %v2102 = vld [vmem:[%s12 + $0x78] sm:$0xf]
        %v2103 = vld [vmem:[%s12 + $0x7c] sm:$0xf]
        %v2104 = vld [vmem:[%s13] sm:$0x1]
        %v2106 = vlaneseq
        %v2107 = vshrl.u32 %v2106, 7
        %v2108 = vsub.s32 0, %v2107
        %v2109 = vrot.slane %v2104, %v2108
        %v2143 = vunpack.c.l.b16 %v2072
        %v2144 = vunpack.c.l.b16 %v2073
        %v2145 = vunpack.c.l.b16 %v2074
        %v2146 = vunpack.c.l.b16 %v2075
        %v2147 = vunpack.c.l.b16 %v2076
        %v2148 = vunpack.c.l.b16 %v2077
        %v2149 = vunpack.c.l.b16 %v2078
        %v2150 = vunpack.c.l.b16 %v2079
        %v2151 = vunpack.c.l.b16 %v2080
        %v2152 = vunpack.c.l.b16 %v2081
        %v2153 = vunpack.c.l.b16 %v2082
        %v2154 = vunpack.c.l.b16 %v2083
        %v2155 = vunpack.c.l.b16 %v2084
        %v2156 = vunpack.c.l.b16 %v2085
        %v2157 = vunpack.c.l.b16 %v2086
        %v2158 = vunpack.c.l.b16 %v2087
        %v2159 = vunpack.c.l.b16 %v2088
        %v2160 = vunpack.c.l.b16 %v2089
        %v2161 = vunpack.c.l.b16 %v2090
        %v2162 = vunpack.c.l.b16 %v2091
        %v2163 = vunpack.c.l.b16 %v2092
        %v2164 = vunpack.c.l.b16 %v2093
        %v2165 = vunpack.c.l.b16 %v2094
        %v2166 = vunpack.c.l.b16 %v2095
        %v2167 = vunpack.c.l.b16 %v2096
        %v2168 = vunpack.c.l.b16 %v2097
        %v2169 = vunpack.c.l.b16 %v2098
        %v2170 = vunpack.c.l.b16 %v2099
        %v2171 = vunpack.c.l.b16 %v2100
        %v2172 = vunpack.c.l.b16 %v2101
        %v2173 = vunpack.c.l.b16 %v2102
        %v2174 = vunpack.c.l.b16 %v2103
        %v2175 = vpack.c.b16 %v2144, %v2143
        %v2176 = vpack.c.b16 %v2146, %v2145
        %v2177 = vpack.c.b16 %v2148, %v2147
        %v2178 = vpack.c.b16 %v2150, %v2149
        %v2179 = vpack.c.b16 %v2152, %v2151
        %v2180 = vpack.c.b16 %v2154, %v2153
        %v2181 = vpack.c.b16 %v2156, %v2155
        %v2182 = vpack.c.b16 %v2158, %v2157
        %v2183 = vpack.c.b16 %v2160, %v2159
        %v2184 = vpack.c.b16 %v2162, %v2161
        %v2185 = vpack.c.b16 %v2164, %v2163
        %v2186 = vpack.c.b16 %v2166, %v2165
        %v2187 = vpack.c.b16 %v2168, %v2167
        %v2188 = vpack.c.b16 %v2170, %v2169
        %v2189 = vpack.c.b16 %v2172, %v2171
        %v2190 = vpack.c.b16 %v2174, %v2173
        %2207 = vmatprep.subr.bf16.mxu0 0
        %2208 = vmatpush1.bf16.msra.mxu0 %v2182
        %2209 = vmatprep.subr.bf16.mxu0 0
        %2210 = vmatpush1.bf16.msra.mxu0 %v2181
        %2211 = vmatprep.subr.bf16.mxu0 0
        %2212 = vmatpush1.bf16.msra.mxu0 %v2180
        %2213 = vmatprep.subr.bf16.mxu0 0
        %2214 = vmatpush1.bf16.msra.mxu0 %v2179
        %2215 = vmatprep.subr.bf16.mxu0 0
        %2216 = vmatpush1.bf16.msra.mxu0 %v2178
        %2217 = vmatprep.subr.bf16.mxu0 0
        %2218 = vmatpush1.bf16.msra.mxu0 %v2177
        %2219 = vmatprep.subr.bf16.mxu0 0
        %2220 = vmatpush1.bf16.msra.mxu0 %v2176
        %2221 = vmatprep.subr.bf16.mxu0 0
        %2222 = vmatpush1.bf16.msra.mxu0 %v2175
        %2223 = vmatprep.subr.bf16.mxu0 0
        %2224 = vmatpush2.bf16.msra.mxu0 %v2190
        %2225 = vmatprep.subr.bf16.mxu0 0
        %2226 = vmatpush2.bf16.msra.mxu0 %v2189
        %2227 = vmatprep.subr.bf16.mxu0 0
        %2228 = vmatpush2.bf16.msra.mxu0 %v2188
        %2229 = vmatprep.subr.bf16.mxu0 0
        %2230 = vmatpush2.bf16.msra.mxu0 %v2187
        %2231 = vmatprep.subr.bf16.mxu0 0
        %2232 = vmatpush2.bf16.msra.mxu0 %v2186
        %2233 = vmatprep.subr.bf16.mxu0 0
        %2234 = vmatpush2.bf16.msra.mxu0 %v2185
        %2235 = vmatprep.subr.bf16.mxu0 0
        %2236 = vmatpush2.bf16.msra.mxu0 %v2184
        %2237 = vmatprep.subr.bf16.mxu0 0
        %2238 = vmatpush2.bf16.msra.mxu0 %v2183
        %2239 = vmatprep.mubr.bf16.mxu0 %v2071
        %2240 = vmatmul.mubr.bf16.gmra.mxu0 %v2070
        %v2241 = vpop.f32.mrf.mxu0
        %v2242 = vadd.f32 %v2109, %v2241
        %v2243 = vpop.f32.mrf.mxu0
        %v2244 = vpop.f32.mrf.mxu0
        %v2245 = vadd.f32 %v2109, %v2244
        %v2246 = vpop.f32.mrf.mxu0
        %2247 = vdwg.mxu0
        %v2248 = vadd.f32 %v1897, %v2242
        %v2249 = vadd.f32 %v1898, %v2245
        %2250 = vst.msk [vmem:[%s488] sm:$0xff] %vm499, %v2248
        %2251 = vst.msk [vmem:[%s488 + $0x8] sm:$0xff] %vm499, %v2249
        %s2252 = sand.u32 %s337, 1
        %s2253 = scalar_lea.sflag [#allocation4], %s2252
        %s2254 = sand.u32 %s337, 1
        %s2255 = smul.addr %s2254, 16
        %s2256 = scalar_lea.vmem [#allocation7], %s2255
        // Predicated region
        $region85: #{tpu_custom_call.1} parent=75 // pred_check
          %p2257 = pneg %p347
        $region86: #{tpu_custom_call.1} parent=75 // pred_check_branch
          %2259 = sbr.rel (%p2257) target = $region88
        $region87: #{tpu_custom_call.1} parent=75 // pred_region
          %s2261 = ssub.s32 256, 256
          %2262 = vsyncadd %s2253, %s2261
          %s2263 = smul.addr %s30, 2
          %s2264 = smul.addr %s2263, 128
          %s2265 = scalar_lea.hbm %s14, %s2264
          %s2266 = sshll.u32 %s2256, 4
          %s2267 = int_to_ptr.vmem [resolvable:$true] %s2266
          %2272 = dma.vmem_to_hbm [thread:$0]  %s2267, 256, %s2265, %s2253, 128, 128, 8
        $region88: #{tpu_custom_call.1} parent=75 // pred_fallthru
          _
      $region76: #{tpu_custom_call.1} parent=5 // pred_fallthru
        _
      %p2273 = scmp.le.s32.totalorder 2, %s25
      // Predicated region
      $region89: #{tpu_custom_call.1} parent=5 // pred_check
        %p2274 = pneg %p2273
      $region90: #{tpu_custom_call.1} parent=5 // pred_check_branch
        %2276 = sbr.rel (%p2274) target = $region92
      $region91: #{tpu_custom_call.1} parent=5 // pred_region
        %s2277 = ssub.s32 %s25, 2
        // Predicated region
        $region93: #{tpu_custom_call.1} parent=91 // pred_check
          %p2278 = pneg %p353
        $region94: #{tpu_custom_call.1} parent=91 // pred_check_branch
          %2280 = sbr.rel (%p2278) target = $region96
        $region95: #{tpu_custom_call.1} parent=91 // pred_region
          %s2281 = sand.u32 %s338, 1
          %s2282 = scalar_lea.sflag [#allocation4], %s2281
          %s2283 = sand.u32 %s338, 1
          %s2284 = smul.addr %s2283, 16
          %s2285 = scalar_lea.vmem [#allocation7], %s2284
          %2286 = dma.done %s2282, 256
        $region96: #{tpu_custom_call.1} parent=91 // pred_fallthru
          _
      $region92: #{tpu_custom_call.1} parent=5 // pred_fallthru
        _
    $region6: #{tpu_custom_call.1} parent=1 // loop_footer
      %s29 = sadd.s32 1, %s25
    $region7: #{tpu_custom_call.1} parent=1 // loop_footer_branch
      %24 = sbr.rel target = $region3
    $region8: #{tpu_custom_call.1} parent=1 // loop_exit
      _
    %2287 = vsyncpa [#allocation3], 1
    %s2288 = scalar_lea.sflag [#allocation3], 1
    %2289 = vsyncpa %s2288, 1
    %2290 = vsyncpa [#allocation6], 1
    %2291 = vsyncpa [#allocation4], 1
    %s2292 = scalar_lea.sflag [#allocation4], 1
    %2293 = vsyncpa %s2292, 1

// kernel: tpu_custom_call.1
$region0: #{tpu_custom_call.1}
  #allocation0 [shape = 'u32[]', space=smem, size = 0x4, offset = 0x4, fixed_abs, tag = 'smem constant byte address 0x4 - core index']
  #allocation1 [shape = 'u32[144,128]{1,0:T(1,128)}', space=vmem, size = 0x12000, scoped, tag = 'internal scratch']
  %s0 = inlined_call_operand.vmem [shape: f32[2,16,64], index: 0, kind: input, shape index: {}]
  %s1 = inlined_call_operand.hbm [shape: f32[1,64], index: 1, kind: input, shape index: {}]
  %s2 = inlined_call_operand.vmem [shape: f32[1,64], index: 2, kind: input, shape index: {}]
  %s3 = inlined_call_operand.vmem [shape: bf16[64,64], index: 3, kind: input, shape index: {}]
  %s4 = inlined_call_operand.vmem [shape: bf16[64,64], index: 4, kind: input, shape index: {}]
  %s5 = inlined_call_operand.vmem [shape: bf16[64,64], index: 5, kind: input, shape index: {}]
  %s6 = inlined_call_operand.hbm [shape: bf16[64,64], index: 6, kind: input, shape index: {}]
  %s7 = inlined_call_operand.vmem [shape: f32[1,64], index: 7, kind: input, shape index: {}]
  %s8 = inlined_call_operand.vmem [shape: f32[1,64], index: 8, kind: input, shape index: {}]
  %s9 = inlined_call_operand.vmem [shape: f32[1,64], index: 9, kind: input, shape index: {}]
  %s10 = inlined_call_operand.vmem [shape: bf16[64,256], index: 10, kind: input, shape index: {}]
  %s11 = inlined_call_operand.vmem [shape: f32[1,256], index: 11, kind: input, shape index: {}]
  %s12 = inlined_call_operand.vmem [shape: bf16[256,64], index: 12, kind: input, shape index: {}]
  %s13 = inlined_call_operand.vmem [shape: f32[1,64], index: 13, kind: input, shape index: {}]
  %s14 = inlined_call_operand.hbm [shape: f32[2,16,64], index: 14, kind: output, shape index: {}]
  %s15 = sld [smem:[#allocation0]]
  $region97: #{tpu_custom_call.1} parent=0
    _
  %s17 = ssub.s32 1, %s15
  %s18 = scalar_select 0, %s17, %s15
  $region1: #{tpu_custom_call.1} parent=0
    #allocation2 [shape = 'u8[512]{0}', space=vmem, size = 0x400, scoped, tag = 'input window, operand 1, single buffered']
    #allocation3 [shape = 's32[2]{0}', space=sflag, size = 0x8, scoped, tag = 'scoped memory for tpu_custom_call.1']
    #allocation4 [shape = 's32[2]{0}', space=sflag, size = 0x8, scoped, tag = 'scoped memory for tpu_custom_call.1']
    #allocation5 [shape = 'u8[16384]{0}', space=vmem, size = 0x4000, scoped, tag = 'input window, operand 6, single buffered']
    #allocation6 [shape = 's32[1]{0}', space=sflag, size = 0x4, scoped, tag = 'scoped memory for tpu_custom_call.1']
    #allocation7 [shape = 'u8[16384]{0}', space=vmem, size = 0x4000, scoped, tag = 'output window, operand 0']
    %19 = vsyncpa [#allocation3], 0
    %20 = vsyncpa [#allocation6], 0
    %21 = vsyncpa [#allocation4], 0
    %s22 = scalar_lea.sflag [#allocation4], 1
    %23 = vsyncpa %s22, 0
    loop: start=0, step=1, limit=4
    $region2: #{tpu_custom_call.1} parent=1 // loop_pre_header
      _
    $region3: #{tpu_custom_call.1} parent=1 // loop_header
      %s25 = sphi 0, %s29
      %p26 = scmp.ge.s32.totalorder %s25, 4
      %s35 = sphi 0, %s37
      %s38 = sphi 0, %s35
      %s39 = sphi 0, %s38
      %s55 = sphi 0, %s39
      %s59 = sphi 0, %s59
      %s61 = sphi 0, %s59
      %s62 = sphi 0, %s61
      %s76 = sphi 0, %s62
      %s80 = sphi 0, %s80
      %s82 = sphi 0, %s80
      %s83 = sphi 0, %s82
      %s97 = sphi 0, %s83
      %s101 = sphi 0, %s101
      %s103 = sphi 0, %s101
      %s104 = sphi 0, %s103
      %s118 = sphi 0, %s104
      %s122 = sphi 0, %s122
      %s124 = sphi 0, %s122
      %s125 = sphi 0, %s124
      %s139 = sphi 0, %s125
      %s143 = sphi 0, %s143
      %s145 = sphi 0, %s143
      %s146 = sphi 0, %s145
      %s160 = sphi 0, %s146
      %s164 = sphi 0, %s164
      %s166 = sphi 0, %s164
      %s167 = sphi 0, %s166
      %s181 = sphi 0, %s167
      %s185 = sphi 0, %s185
      %s187 = sphi 0, %s185
      %s188 = sphi 0, %s187
      %s202 = sphi 0, %s188
      %s206 = sphi 0, %s206
      %s208 = sphi 0, %s206
      %s209 = sphi 0, %s208
      %s223 = sphi 0, %s209
      %s227 = sphi 0, %s227
      %s229 = sphi 0, %s227
      %s230 = sphi 0, %s229
      %s244 = sphi 0, %s230
      %s248 = sphi 0, %s248
      %s250 = sphi 0, %s248
      %s251 = sphi 0, %s250
      %s265 = sphi 0, %s251
      %s269 = sphi 0, %s269
      %s271 = sphi 0, %s269
      %s272 = sphi 0, %s271
      %s286 = sphi 0, %s272
      %s290 = sphi 0, %s290
      %s292 = sphi 0, %s290
      %s293 = sphi 0, %s292
      %s307 = sphi 0, %s293
      %s311 = sphi 0, %s311
      %s313 = sphi 0, %s311
      %s314 = sphi 0, %s313
      %s328 = sphi 0, %s314
      %s334 = sphi 0, %s336
      %s337 = sphi 0, %s334
      %s338 = sphi 0, %s337
      %s354 = sphi 0, %s338
    $region4: #{tpu_custom_call.1} parent=1 // loop_header_branch
      %28 = sbr.rel (%p26) target = $region8
    $region5: #{tpu_custom_call.1} parent=1 // loop_body
      %s30 = ssub.s32 %s25, 1
      %s31 = ssub.s32 %s25, 2
      %s32 = sadd.s32 %s25, 1
      %s33 = ssub.s32 %s25, %s32
      %p34 = scmp.eq.s32.totalorder %s33, 0
      %s36 = sadd.s32 %s35, 1
      %s37 = scalar_select %p34, %s35, %s36
      %p40 = pneg %p34
      %p41 = scmp.eq.s32.totalorder %s25, 1
      %p42 = por %p40, %p41
      %p43 = scmp.ne.s32.totalorder %s35, %s38
      %p44 = scmp.eq.s32.totalorder %s25, 0
      %p45 = por %p43, %p44
      %p46 = scmp.ne.s32.totalorder %s35, %s38
      %p47 = scmp.eq.s32.totalorder %s30, 1
      %p48 = por %p46, %p47
      %p49 = scmp.ne.s32.totalorder %s38, %s39
      %p50 = scmp.eq.s32.totalorder %s30, 0
      %p51 = por %p49, %p50
      %p52 = scmp.ne.s32.totalorder %s38, %s39
      %p53 = scmp.eq.s32.totalorder %s31, 1
      %p54 = por %p52, %p53
      %p56 = scmp.ne.s32.totalorder %s39, %s55
      %p57 = scmp.eq.s32.totalorder %s31, 0
      %p58 = por %p56, %p57
      %s60 = sadd.s32 %s59, 1
      %p63 = scmp.eq.s32.totalorder %s25, 1
      %p64 = scmp.ne.s32.totalorder %s59, %s61
      %p65 = scmp.eq.s32.totalorder %s25, 0
      %p66 = por %p64, %p65
      %p67 = scmp.ne.s32.totalorder %s59, %s61
      %p68 = scmp.eq.s32.totalorder %s30, 1
      %p69 = por %p67, %p68
      %p70 = scmp.ne.s32.totalorder %s61, %s62
      %p71 = scmp.eq.s32.totalorder %s30, 0
      %p72 = por %p70, %p71
      %p73 = scmp.ne.s32.totalorder %s61, %s62
      %p74 = scmp.eq.s32.totalorder %s31, 1
      %p75 = por %p73, %p74
      %p77 = scmp.ne.s32.totalorder %s62, %s76
      %p78 = scmp.eq.s32.totalorder %s31, 0
      %p79 = por %p77, %p78
      %s81 = sadd.s32 %s80, 1
      %p84 = scmp.eq.s32.totalorder %s25, 1
      %p85 = scmp.ne.s32.totalorder %s80, %s82
      %p86 = scmp.eq.s32.totalorder %s25, 0
      %p87 = por %p85, %p86
      %p88 = scmp.ne.s32.totalorder %s80, %s82
      %p89 = scmp.eq.s32.totalorder %s30, 1
      %p90 = por %p88, %p89
      %p91 = scmp.ne.s32.totalorder %s82, %s83
      %p92 = scmp.eq.s32.totalorder %s30, 0
      %p93 = por %p91, %p92
      %p94 = scmp.ne.s32.totalorder %s82, %s83
      %p95 = scmp.eq.s32.totalorder %s31, 1
      %p96 = por %p94, %p95
      %p98 = scmp.ne.s32.totalorder %s83, %s97
      %p99 = scmp.eq.s32.totalorder %s31, 0
      %p100 = por %p98, %p99
      %s102 = sadd.s32 %s101, 1
      %p105 = scmp.eq.s32.totalorder %s25, 1
      %p106 = scmp.ne.s32.totalorder %s101, %s103
      %p107 = scmp.eq.s32.totalorder %s25, 0
      %p108 = por %p106, %p107
      %p109 = scmp.ne.s32.totalorder %s101, %s103
      %p110 = scmp.eq.s32.totalorder %s30, 1
      %p111 = por %p109, %p110
      %p112 = scmp.ne.s32.totalorder %s103, %s104
      %p113 = scmp.eq.s32.totalorder %s30, 0
      %p114 = por %p112, %p113
      %p115 = scmp.ne.s32.totalorder %s103, %s104
      %p116 = scmp.eq.s32.totalorder %s31, 1
      %p117 = por %p115, %p116
      %p119 = scmp.ne.s32.totalorder %s104, %s118
      %p120 = scmp.eq.s32.totalorder %s31, 0
      %p121 = por %p119, %p120
      %s123 = sadd.s32 %s122, 1
      %p126 = scmp.eq.s32.totalorder %s25, 1
      %p127 = scmp.ne.s32.totalorder %s122, %s124
      %p128 = scmp.eq.s32.totalorder %s25, 0
      %p129 = por %p127, %p128
      %p130 = scmp.ne.s32.totalorder %s122, %s124
      %p131 = scmp.eq.s32.totalorder %s30, 1
      %p132 = por %p130, %p131
      %p133 = scmp.ne.s32.totalorder %s124, %s125
      %p134 = scmp.eq.s32.totalorder %s30, 0
      %p135 = por %p133, %p134
      %p136 = scmp.ne.s32.totalorder %s124, %s125
      %p137 = scmp.eq.s32.totalorder %s31, 1
      %p138 = por %p136, %p137
      %p140 = scmp.ne.s32.totalorder %s125, %s139
      %p141 = scmp.eq.s32.totalorder %s31, 0
      %p142 = por %p140, %p141
      %s144 = sadd.s32 %s143, 1
      %p147 = scmp.eq.s32.totalorder %s25, 1
      %p148 = scmp.ne.s32.totalorder %s143, %s145
      %p149 = scmp.eq.s32.totalorder %s25, 0
      %p150 = por %p148, %p149
      %p151 = scmp.ne.s32.totalorder %s143, %s145
      %p152 = scmp.eq.s32.totalorder %s30, 1
      %p153 = por %p151, %p152
      %p154 = scmp.ne.s32.totalorder %s145, %s146
      %p155 = scmp.eq.s32.totalorder %s30, 0
      %p156 = por %p154, %p155
      %p157 = scmp.ne.s32.totalorder %s145, %s146
      %p158 = scmp.eq.s32.totalorder %s31, 1
      %p159 = por %p157, %p158
      %p161 = scmp.ne.s32.totalorder %s146, %s160
      %p162 = scmp.eq.s32.totalorder %s31, 0
      %p163 = por %p161, %p162
      %s165 = sadd.s32 %s164, 1
      %p168 = scmp.eq.s32.totalorder %s25, 1
      %p169 = scmp.ne.s32.totalorder %s164, %s166
      %p170 = scmp.eq.s32.totalorder %s25, 0
      %p171 = por %p169, %p170
      %p172 = scmp.ne.s32.totalorder %s164, %s166
      %p173 = scmp.eq.s32.totalorder %s30, 1
      %p174 = por %p172, %p173
      %p175 = scmp.ne.s32.totalorder %s166, %s167
      %p176 = scmp.eq.s32.totalorder %s30, 0
      %p177 = por %p175, %p176
      %p178 = scmp.ne.s32.totalorder %s166, %s167
      %p179 = scmp.eq.s32.totalorder %s31, 1
      %p180 = por %p178, %p179
      %p182 = scmp.ne.s32.totalorder %s167, %s181
      %p183 = scmp.eq.s32.totalorder %s31, 0
      %p184 = por %p182, %p183
      %s186 = sadd.s32 %s185, 1
      %p189 = scmp.eq.s32.totalorder %s25, 1
      %p190 = scmp.ne.s32.totalorder %s185, %s187
      %p191 = scmp.eq.s32.totalorder %s25, 0
      %p192 = por %p190, %p191
      %p193 = scmp.ne.s32.totalorder %s185, %s187
      %p194 = scmp.eq.s32.totalorder %s30, 1
      %p195 = por %p193, %p194
      %p196 = scmp.ne.s32.totalorder %s187, %s188
      %p197 = scmp.eq.s32.totalorder %s30, 0
      %p198 = por %p196, %p197
      %p199 = scmp.ne.s32.totalorder %s187, %s188
      %p200 = scmp.eq.s32.totalorder %s31, 1
      %p201 = por %p199, %p200
      %p203 = scmp.ne.s32.totalorder %s188, %s202
      %p204 = scmp.eq.s32.totalorder %s31, 0
      %p205 = por %p203, %p204
      %s207 = sadd.s32 %s206, 1
      %p210 = scmp.eq.s32.totalorder %s25, 1
      %p211 = scmp.ne.s32.totalorder %s206, %s208
      %p212 = scmp.eq.s32.totalorder %s25, 0
      %p213 = por %p211, %p212
      %p214 = scmp.ne.s32.totalorder %s206, %s208
      %p215 = scmp.eq.s32.totalorder %s30, 1
      %p216 = por %p214, %p215
      %p217 = scmp.ne.s32.totalorder %s208, %s209
      %p218 = scmp.eq.s32.totalorder %s30, 0
      %p219 = por %p217, %p218
      %p220 = scmp.ne.s32.totalorder %s208, %s209
      %p221 = scmp.eq.s32.totalorder %s31, 1
      %p222 = por %p220, %p221
      %p224 = scmp.ne.s32.totalorder %s209, %s223
      %p225 = scmp.eq.s32.totalorder %s31, 0
      %p226 = por %p224, %p225
      %s228 = sadd.s32 %s227, 1
      %p231 = scmp.eq.s32.totalorder %s25, 1
      %p232 = scmp.ne.s32.totalorder %s227, %s229
      %p233 = scmp.eq.s32.totalorder %s25, 0
      %p234 = por %p232, %p233
      %p235 = scmp.ne.s32.totalorder %s227, %s229
      %p236 = scmp.eq.s32.totalorder %s30, 1
      %p237 = por %p235, %p236
      %p238 = scmp.ne.s32.totalorder %s229, %s230
      %p239 = scmp.eq.s32.totalorder %s30, 0
      %p240 = por %p238, %p239
      %p241 = scmp.ne.s32.totalorder %s229, %s230
      %p242 = scmp.eq.s32.totalorder %s31, 1
      %p243 = por %p241, %p242
      %p245 = scmp.ne.s32.totalorder %s230, %s244
      %p246 = scmp.eq.s32.totalorder %s31, 0
      %p247 = por %p245, %p246
      %s249 = sadd.s32 %s248, 1
      %p252 = scmp.eq.s32.totalorder %s25, 1
      %p253 = scmp.ne.s32.totalorder %s248, %s250
      %p254 = scmp.eq.s32.totalorder %s25, 0
      %p255 = por %p253, %p254
      %p256 = scmp.ne.s32.totalorder %s248, %s250
      %p257 = scmp.eq.s32.totalorder %s30, 1
      %p258 = por %p256, %p257
      %p259 = scmp.ne.s32.totalorder %s250, %s251
      %p260 = scmp.eq.s32.totalorder %s30, 0
      %p261 = por %p259, %p260
      %p262 = scmp.ne.s32.totalorder %s250, %s251
      %p263 = scmp.eq.s32.totalorder %s31, 1
      %p264 = por %p262, %p263
      %p266 = scmp.ne.s32.totalorder %s251, %s265
      %p267 = scmp.eq.s32.totalorder %s31, 0
      %p268 = por %p266, %p267
      %s270 = sadd.s32 %s269, 1
      %p273 = scmp.eq.s32.totalorder %s25, 1
      %p274 = scmp.ne.s32.totalorder %s269, %s271
      %p275 = scmp.eq.s32.totalorder %s25, 0
      %p276 = por %p274, %p275
      %p277 = scmp.ne.s32.totalorder %s269, %s271
      %p278 = scmp.eq.s32.totalorder %s30, 1
      %p279 = por %p277, %p278
      %p280 = scmp.ne.s32.totalorder %s271, %s272
      %p281 = scmp.eq.s32.totalorder %s30, 0
      %p282 = por %p280, %p281
      %p283 = scmp.ne.s32.totalorder %s271, %s272
      %p284 = scmp.eq.s32.totalorder %s31, 1
      %p285 = por %p283, %p284
      %p287 = scmp.ne.s32.totalorder %s272, %s286
      %p288 = scmp.eq.s32.totalorder %s31, 0
      %p289 = por %p287, %p288
      %s291 = sadd.s32 %s290, 1
      %p294 = scmp.eq.s32.totalorder %s25, 1
      %p295 = scmp.ne.s32.totalorder %s290, %s292
      %p296 = scmp.eq.s32.totalorder %s25, 0
      %p297 = por %p295, %p296
      %p298 = scmp.ne.s32.totalorder %s290, %s292
      %p299 = scmp.eq.s32.totalorder %s30, 1
      %p300 = por %p298, %p299
      %p301 = scmp.ne.s32.totalorder %s292, %s293
      %p302 = scmp.eq.s32.totalorder %s30, 0
      %p303 = por %p301, %p302
      %p304 = scmp.ne.s32.totalorder %s292, %s293
      %p305 = scmp.eq.s32.totalorder %s31, 1
      %p306 = por %p304, %p305
      %p308 = scmp.ne.s32.totalorder %s293, %s307
      %p309 = scmp.eq.s32.totalorder %s31, 0
      %p310 = por %p308, %p309
      %s312 = sadd.s32 %s311, 1
      %p315 = scmp.eq.s32.totalorder %s25, 1
      %p316 = scmp.ne.s32.totalorder %s311, %s313
      %p317 = scmp.eq.s32.totalorder %s25, 0
      %p318 = por %p316, %p317
      %p319 = scmp.ne.s32.totalorder %s311, %s313
      %p320 = scmp.eq.s32.totalorder %s30, 1
      %p321 = por %p319, %p320
      %p322 = scmp.ne.s32.totalorder %s313, %s314
      %p323 = scmp.eq.s32.totalorder %s30, 0
      %p324 = por %p322, %p323
      %p325 = scmp.ne.s32.totalorder %s313, %s314
      %p326 = scmp.eq.s32.totalorder %s31, 1
      %p327 = por %p325, %p326
      %p329 = scmp.ne.s32.totalorder %s314, %s328
      %p330 = scmp.eq.s32.totalorder %s31, 0
      %p331 = por %p329, %p330
      %s332 = ssub.s32 %s25, %s32
      %p333 = scmp.eq.s32.totalorder %s332, 0
      %s335 = sadd.s32 %s334, 1
      %s336 = scalar_select %p333, %s334, %s335
      %p339 = pneg %p333
      %p340 = scmp.eq.s32.totalorder %s25, 1
      %p341 = por %p339, %p340
      %p342 = scmp.ne.s32.totalorder %s334, %s337
      %p343 = scmp.eq.s32.totalorder %s25, 0
      %p344 = por %p342, %p343
      %p345 = scmp.ne.s32.totalorder %s334, %s337
      %p346 = scmp.eq.s32.totalorder %s30, 1
      %p347 = por %p345, %p346
      %p348 = scmp.ne.s32.totalorder %s337, %s338
      %p349 = scmp.eq.s32.totalorder %s30, 0
      %p350 = por %p348, %p349
      %p351 = scmp.ne.s32.totalorder %s337, %s338
      %p352 = scmp.eq.s32.totalorder %s31, 1
      %p353 = por %p351, %p352
      %p355 = scmp.ne.s32.totalorder %s338, %s354
      %p356 = scmp.eq.s32.totalorder %s31, 0
      %p357 = por %p355, %p356
      %p358 = scmp.le.s32.totalorder 1, %s25
      %p359 = scmp.lt.s32.totalorder %s25, 3
      %p360 = pnand %p358, %p359
      %p361 = pneg %p360
      // Predicated region
      $region9: #{tpu_custom_call.1} parent=5 // pred_check
        _
      $region10: #{tpu_custom_call.1} parent=5 // pred_check_branch
        %363 = sbr.rel (%p360) target = $region12
      $region11: #{tpu_custom_call.1} parent=5 // pred_region
        %s364 = ssub.s32 %s25, 1
        // Predicated region
        $region13: #{tpu_custom_call.1} parent=11 // pred_check
          %p365 = pneg %p72
        $region14: #{tpu_custom_call.1} parent=11 // pred_check_branch
          %367 = sbr.rel (%p365) target = $region16
        $region15: #{tpu_custom_call.1} parent=11 // pred_region
          %s369 = ssub.s32 16, 16
          %370 = vsyncadd [#allocation3], %s369
          %s372 = sshll.u32 [#allocation2], 4
          %s373 = int_to_ptr.vmem [resolvable:$true] %s372
          %375 = dma.hbm_to_vmem [thread:$0]  %s1, 16, %s373, [#allocation3]
        $region16: #{tpu_custom_call.1} parent=11 // pred_fallthru
          _
        // Predicated region
        $region17: #{tpu_custom_call.1} parent=11 // pred_check
          %p376 = pneg %p93
        $region18: #{tpu_custom_call.1} parent=11 // pred_check_branch
          %378 = sbr.rel (%p376) target = $region20
        $region19: #{tpu_custom_call.1} parent=11 // pred_region
          _
        $region20: #{tpu_custom_call.1} parent=11 // pred_fallthru
          _
        // Predicated region
        $region21: #{tpu_custom_call.1} parent=11 // pred_check
          %p379 = pneg %p114
        $region22: #{tpu_custom_call.1} parent=11 // pred_check_branch
          %381 = sbr.rel (%p379) target = $region24
        $region23: #{tpu_custom_call.1} parent=11 // pred_region
          _
        $region24: #{tpu_custom_call.1} parent=11 // pred_fallthru
          _
        // Predicated region
        $region25: #{tpu_custom_call.1} parent=11 // pred_check
          %p382 = pneg %p135
        $region26: #{tpu_custom_call.1} parent=11 // pred_check_branch
          %384 = sbr.rel (%p382) target = $region28
        $region27: #{tpu_custom_call.1} parent=11 // pred_region
          _
        $region28: #{tpu_custom_call.1} parent=11 // pred_fallthru
          _
        // Predicated region
        $region29: #{tpu_custom_call.1} parent=11 // pred_check
          %p385 = pneg %p156
        $region30: #{tpu_custom_call.1} parent=11 // pred_check_branch
          %387 = sbr.rel (%p385) target = $region32
        $region31: #{tpu_custom_call.1} parent=11 // pred_region
          _
        $region32: #{tpu_custom_call.1} parent=11 // pred_fallthru
          _
        // Predicated region
        $region33: #{tpu_custom_call.1} parent=11 // pred_check
          %p388 = pneg %p177
        $region34: #{tpu_custom_call.1} parent=11 // pred_check_branch
          %390 = sbr.rel (%p388) target = $region36
        $region35: #{tpu_custom_call.1} parent=11 // pred_region
          %s392 = ssub.s32 512, 512
          %393 = vsyncadd [#allocation6], %s392
          %s394 = sshll.u32 [#allocation5], 4
          %s395 = int_to_ptr.vmem [resolvable:$true] %s394
          %400 = dma.hbm_to_vmem [thread:$0]  %s6, 512, %s395, [#allocation6], 64, 64, 4
        $region36: #{tpu_custom_call.1} parent=11 // pred_fallthru
          _
        // Predicated region
        $region37: #{tpu_custom_call.1} parent=11 // pred_check
          %p401 = pneg %p198
        $region38: #{tpu_custom_call.1} parent=11 // pred_check_branch
          %403 = sbr.rel (%p401) target = $region40
        $region39: #{tpu_custom_call.1} parent=11 // pred_region
          _
        $region40: #{tpu_custom_call.1} parent=11 // pred_fallthru
          _
        // Predicated region
        $region41: #{tpu_custom_call.1} parent=11 // pred_check
          %p404 = pneg %p219
        $region42: #{tpu_custom_call.1} parent=11 // pred_check_branch
          %406 = sbr.rel (%p404) target = $region44
        $region43: #{tpu_custom_call.1} parent=11 // pred_region
          _
        $region44: #{tpu_custom_call.1} parent=11 // pred_fallthru
          _
        // Predicated region
        $region45: #{tpu_custom_call.1} parent=11 // pred_check
          %p407 = pneg %p240
        $region46: #{tpu_custom_call.1} parent=11 // pred_check_branch
          %409 = sbr.rel (%p407) target = $region48
        $region47: #{tpu_custom_call.1} parent=11 // pred_region
          _
        $region48: #{tpu_custom_call.1} parent=11 // pred_fallthru
          _
        // Predicated region
        $region49: #{tpu_custom_call.1} parent=11 // pred_check
          %p410 = pneg %p261
        $region50: #{tpu_custom_call.1} parent=11 // pred_check_branch
          %412 = sbr.rel (%p410) target = $region52
        $region51: #{tpu_custom_call.1} parent=11 // pred_region
          _
        $region52: #{tpu_custom_call.1} parent=11 // pred_fallthru
          _
        // Predicated region
        $region53: #{tpu_custom_call.1} parent=11 // pred_check
          %p413 = pneg %p282
        $region54: #{tpu_custom_call.1} parent=11 // pred_check_branch
          %415 = sbr.rel (%p413) target = $region56
        $region55: #{tpu_custom_call.1} parent=11 // pred_region
          _
        $region56: #{tpu_custom_call.1} parent=11 // pred_fallthru
          _
        // Predicated region
        $region57: #{tpu_custom_call.1} parent=11 // pred_check
          %p416 = pneg %p303
        $region58: #{tpu_custom_call.1} parent=11 // pred_check_branch
          %418 = sbr.rel (%p416) target = $region60
        $region59: #{tpu_custom_call.1} parent=11 // pred_region
          _
        $region60: #{tpu_custom_call.1} parent=11 // pred_fallthru
          _
        // Predicated region
        $region61: #{tpu_custom_call.1} parent=11 // pred_check
          %p419 = pneg %p324
        $region62: #{tpu_custom_call.1} parent=11 // pred_check_branch
          %421 = sbr.rel (%p419) target = $region64
        $region63: #{tpu_custom_call.1} parent=11 // pred_region
          _
        $region64: #{tpu_custom_call.1} parent=11 // pred_fallthru
          _
      $region12: #{tpu_custom_call.1} parent=5 // pred_fallthru
        _
      %p422 = scmp.lt.s32.totalorder %s25, 2
      // Predicated region
      $region65: #{tpu_custom_call.1} parent=5 // pred_check
        %p423 = pneg %p422
      $region66: #{tpu_custom_call.1} parent=5 // pred_check_branch
        %425 = sbr.rel (%p423) target = $region68
      $region67: #{tpu_custom_call.1} parent=5 // pred_region
        // Predicated region
        $region69: #{tpu_custom_call.1} parent=67 // pred_check
          %p426 = pneg %p45
        $region70: #{tpu_custom_call.1} parent=67 // pred_check_branch
          %428 = sbr.rel (%p426) target = $region72
        $region71: #{tpu_custom_call.1} parent=67 // pred_region
          %p429 = scmp.lt.s32.totalorder %s25, 1
          %s430 = scalar_select %p429, %s25, 1
          %s431 = smul.addr %s430, 2
          %s432 = smul.addr %s431, 8
          %s433 = scalar_lea.vmem %s0, %s432
        $region72: #{tpu_custom_call.1} parent=67 // pred_fallthru
          _
      $region68: #{tpu_custom_call.1} parent=5 // pred_fallthru
        _
      %p434 = scmp.le.s32.totalorder 1, %s25
      %p435 = scmp.lt.s32.totalorder %s25, 3
      %p436 = pnand %p434, %p435
      %p437 = pneg %p436
      // Predicated region
      $region73: #{tpu_custom_call.1} parent=5 // pred_check
        _
      $region74: #{tpu_custom_call.1} parent=5 // pred_check_branch
        %439 = sbr.rel (%p436) target = $region76
      $region75: #{tpu_custom_call.1} parent=5 // pred_region
        %s440 = ssub.s32 %s25, 1
        // Predicated region
        $region77: #{tpu_custom_call.1} parent=75 // pred_check
          %p441 = pneg %p72
        $region78: #{tpu_custom_call.1} parent=75 // pred_check_branch
          %443 = sbr.rel (%p441) target = $region80
        $region79: #{tpu_custom_call.1} parent=75 // pred_region
          %444 = dma.done [#allocation3], 16
        $region80: #{tpu_custom_call.1} parent=75 // pred_fallthru
          _
        // Predicated region
        $region81: #{tpu_custom_call.1} parent=75 // pred_check
          %p445 = pneg %p177
        $region82: #{tpu_custom_call.1} parent=75 // pred_check_branch
          %447 = sbr.rel (%p445) target = $region84
        $region83: #{tpu_custom_call.1} parent=75 // pred_region
          %448 = dma.done [#allocation6], 512
        $region84: #{tpu_custom_call.1} parent=75 // pred_fallthru
          _
        %p449 = scmp.lt.s32.totalorder %s30, 1
        %s450 = scalar_select %p449, %s30, 1
        %s451 = smul.addr %s450, 2
        %s452 = smul.addr %s451, 8
        %s453 = scalar_lea.vmem %s0, %s452
        %p454 = pneg %p51
        %p455 = pneg %p48
        %p456 = pneg %p72
        %p457 = pneg %p69
        %p458 = pneg %p93
        %p459 = pneg %p90
        %p460 = pneg %p114
        %p461 = pneg %p111
        %p462 = pneg %p135
        %p463 = pneg %p132
        %p464 = pneg %p156
        %p465 = pneg %p153
        %p466 = pneg %p177
        %p467 = pneg %p174
        %p468 = pneg %p198
        %p469 = pneg %p195
        %p470 = pneg %p219
        %p471 = pneg %p216
        %p472 = pneg %p240
        %p473 = pneg %p237
        %p474 = pneg %p261
        %p475 = pneg %p258
        %p476 = pneg %p282
        %p477 = pneg %p279
        %p478 = pneg %p303
        %p479 = pneg %p300
        %p480 = pneg %p324
        %p481 = pneg %p321
        %p482 = pneg %p350
        %p483 = pneg %p347
        %s484 = sand.u32 %s337, 1
        %s485 = scalar_lea.sflag [#allocation4], %s484
        %s486 = sand.u32 %s337, 1
        %s487 = smul.addr %s486, 16
        %s488 = scalar_lea.vmem [#allocation7], %s487
        %p489 = scmp.lt.s32.totalorder %s30, 1
        %s490 = scalar_select %p489, %s30, 1
        %s491 = smul.addr %s490, 2
        %s492 = smul.addr %s491, 8
        %s493 = scalar_lea.vmem %s0, %s492
        %v495 = vld [vmem:[%s493] sm:$0xff]
        %v496 = vld [vmem:[%s493 + $0x8] sm:$0xff]
        %v497 = vld [vmem:[#allocation2] sm:$0x1]
        %v498 = vld [vmem:[%s2] sm:$0x1]
        %vm499 = vcmask 523264
        %v500 = vsel %vm499, %v495, 0.0
        %501 = vadd.xlane.f32.xlu0 %v500
        %v502 = vpop.xlane.xlu0 %501
        %v503 = vsel %vm499, %v496, 0.0
        %504 = vadd.xlane.f32.xlu0 %v503
        %v505 = vpop.xlane.xlu0 %504
        %v506 = vrcp.pop 64.0
        %v507 = vmul.f32 %v502, %v506
        %v508 = vmul.f32 %v505, %v506
        %v509 = vsub.f32 %v495, %v507
        %v510 = vsub.f32 %v496, %v508
        %v511 = vmul.f32 %v509, %v509
        %v512 = vmul.f32 %v510, %v510
        %v513 = vsel %vm499, %v511, 0.0
        %514 = vadd.xlane.f32.xlu0 %v513
        %v515 = vpop.xlane.xlu0 %514
        %v516 = vsel %vm499, %v512, 0.0
        %517 = vadd.xlane.f32.xlu0 %v516
        %v518 = vpop.xlane.xlu0 %517
        %v519 = vmul.f32 %v515, %v506
        %v520 = vmul.f32 %v518, %v506
        %v521 = vadd.f32 %v519, 1e-05
        %v522 = vadd.f32 %v520, 1e-05
        %v523 = vrsqrt.pop %v521
        %v524 = vrsqrt.pop %v522
        %v525 = vmul.f32 %v509, %v523
        %v526 = vmul.f32 %v510, %v524
        %v528 = vlaneseq
        %v529 = vshrl.u32 %v528, 7
        %v530 = vsub.s32 0, %v529
        %v531 = vrot.slane %v497, %v530
        %v533 = vmul.f32 %v525, %v531
        %v534 = vmul.f32 %v526, %v531
        %v536 = vlaneseq
        %v537 = vshrl.u32 %v536, 7
        %v538 = vsub.s32 0, %v537
        %v539 = vrot.slane %v498, %v538
        %v541 = vadd.f32 %v533, %v539
        %v542 = vadd.f32 %v534, %v539
        %v543 = vpack.c.bf16 %v542, %v541
        %v544 = vld [vmem:[%s3] sm:$0xf]
        %v545 = vld [vmem:[%s3 + $0x4] sm:$0xf]
        %v546 = vld [vmem:[%s3 + $0x8] sm:$0xf]
        %v547 = vld [vmem:[%s3 + $0xc] sm:$0xf]
        %v548 = vld [vmem:[%s3 + $0x10] sm:$0xf]
        %v549 = vld [vmem:[%s3 + $0x14] sm:$0xf]
        %v550 = vld [vmem:[%s3 + $0x18] sm:$0xf]
        %v551 = vld [vmem:[%s3 + $0x1c] sm:$0xf]
        %v560 = vunpack.c.l.b16 %v544
        %v561 = vunpack.c.l.b16 %v545
        %v562 = vunpack.c.l.b16 %v546
        %v563 = vunpack.c.l.b16 %v547
        %v564 = vunpack.c.l.b16 %v548
        %v565 = vunpack.c.l.b16 %v549
        %v566 = vunpack.c.l.b16 %v550
        %v567 = vunpack.c.l.b16 %v551
        %v568 = vpack.c.b16 %v561, %v560
        %v569 = vpack.c.b16 %v563, %v562
        %v570 = vpack.c.b16 %v565, %v564
        %v571 = vpack.c.b16 %v567, %v566
        %v577 = vsel %vm499, %v543, 0
        %579 = vmatprep.subr.bf16.mxu0 0
        %580 = vmatpush1.bf16.msra.mxu0 0
        %581 = vmatprep.subr.bf16.mxu0 0
        %582 = vmatpush1.bf16.msra.mxu0 0
        %583 = vmatprep.subr.bf16.mxu0 0
        %584 = vmatpush1.bf16.msra.mxu0 0
        %585 = vmatprep.subr.bf16.mxu0 0
        %586 = vmatpush1.bf16.msra.mxu0 0
        %587 = vmatprep.subr.bf16.mxu0 0
        %588 = vmatpush1.bf16.msra.mxu0 %v571
        %589 = vmatprep.subr.bf16.mxu0 0
        %590 = vmatpush1.bf16.msra.mxu0 %v570
        %591 = vmatprep.subr.bf16.mxu0 0
        %592 = vmatpush1.bf16.msra.mxu0 %v569
        %593 = vmatprep.subr.bf16.mxu0 0
        %594 = vmatpush1.bf16.msra.mxu0 %v568
        %595 = vmatprep.subr.bf16.mxu0 0
        %596 = vmatpush2.bf16.msra.mxu0 0
        %597 = vmatprep.subr.bf16.mxu0 0
        %598 = vmatpush2.bf16.msra.mxu0 0
        %599 = vmatprep.subr.bf16.mxu0 0
        %600 = vmatpush2.bf16.msra.mxu0 0
        %601 = vmatprep.subr.bf16.mxu0 0
        %602 = vmatpush2.bf16.msra.mxu0 0
        %603 = vmatprep.subr.bf16.mxu0 0
        %604 = vmatpush2.bf16.msra.mxu0 0
        %605 = vmatprep.subr.bf16.mxu0 0
        %606 = vmatpush2.bf16.msra.mxu0 0
        %607 = vmatprep.subr.bf16.mxu0 0
        %608 = vmatpush2.bf16.msra.mxu0 0
        %609 = vmatprep.subr.bf16.mxu0 0
        %610 = vmatpush2.bf16.msra.mxu0 0
        %611 = vmatprep.mubr.bf16.mxu0 0
        %612 = vmatmul.mubr.bf16.gmra.mxu0 %v577
        %v613 = vpop.f32.mrf.mxu0
        %v614 = vadd.f32 0.0, %v613
        %v615 = vpop.f32.mrf.mxu0
        %v616 = vpop.f32.mrf.mxu0
        %v617 = vadd.f32 0.0, %v616
        %v618 = vpop.f32.mrf.mxu0
        %619 = vdwg.mxu0
        %v620 = vld [vmem:[%s4] sm:$0xf]
        %v621 = vld [vmem:[%s4 + $0x4] sm:$0xf]
        %v622 = vld [vmem:[%s4 + $0x8] sm:$0xf]
        %v623 = vld [vmem:[%s4 + $0xc] sm:$0xf]
        %v624 = vld [vmem:[%s4 + $0x10] sm:$0xf]
        %v625 = vld [vmem:[%s4 + $0x14] sm:$0xf]
        %v626 = vld [vmem:[%s4 + $0x18] sm:$0xf]
        %v627 = vld [vmem:[%s4 + $0x1c] sm:$0xf]
        %v636 = vunpack.c.l.b16 %v620
        %v637 = vunpack.c.l.b16 %v621
        %v638 = vunpack.c.l.b16 %v622
        %v639 = vunpack.c.l.b16 %v623
        %v640 = vunpack.c.l.b16 %v624
        %v641 = vunpack.c.l.b16 %v625
        %v642 = vunpack.c.l.b16 %v626
        %v643 = vunpack.c.l.b16 %v627
        %v644 = vpack.c.b16 %v637, %v636
        %v645 = vpack.c.b16 %v639, %v638
        %v646 = vpack.c.b16 %v641, %v640
        %v647 = vpack.c.b16 %v643, %v642
        %652 = vmatprep.subr.bf16.mxu0 0
        %653 = vmatpush1.bf16.msra.mxu0 0
        %654 = vmatprep.subr.bf16.mxu0 0
        %655 = vmatpush1.bf16.msra.mxu0 0
        %656 = vmatprep.subr.bf16.mxu0 0
        %657 = vmatpush1.bf16.msra.mxu0 0
        %658 = vmatprep.subr.bf16.mxu0 0
        %659 = vmatpush1.bf16.msra.mxu0 0
        %660 = vmatprep.subr.bf16.mxu0 0
        %661 = vmatpush1.bf16.msra.mxu0 %v647
        %662 = vmatprep.subr.bf16.mxu0 0
        %663 = vmatpush1.bf16.msra.mxu0 %v646
        %664 = vmatprep.subr.bf16.mxu0 0
        %665 = vmatpush1.bf16.msra.mxu0 %v645
        %666 = vmatprep.subr.bf16.mxu0 0
        %667 = vmatpush1.bf16.msra.mxu0 %v644
        %668 = vmatprep.subr.bf16.mxu0 0
        %669 = vmatpush2.bf16.msra.mxu0 0
        %670 = vmatprep.subr.bf16.mxu0 0
        %671 = vmatpush2.bf16.msra.mxu0 0
        %672 = vmatprep.subr.bf16.mxu0 0
        %673 = vmatpush2.bf16.msra.mxu0 0
        %674 = vmatprep.subr.bf16.mxu0 0
        %675 = vmatpush2.bf16.msra.mxu0 0
        %676 = vmatprep.subr.bf16.mxu0 0
        %677 = vmatpush2.bf16.msra.mxu0 0
        %678 = vmatprep.subr.bf16.mxu0 0
        %679 = vmatpush2.bf16.msra.mxu0 0
        %680 = vmatprep.subr.bf16.mxu0 0
        %681 = vmatpush2.bf16.msra.mxu0 0
        %682 = vmatprep.subr.bf16.mxu0 0
        %683 = vmatpush2.bf16.msra.mxu0 0
        %684 = vmatprep.mubr.bf16.mxu0 0
        %685 = vmatmul.mubr.bf16.gmra.mxu0 %v577
        %v686 = vpop.f32.mrf.mxu0
        %v687 = vadd.f32 0.0, %v686
        %v688 = vpop.f32.mrf.mxu0
        %v689 = vpop.f32.mrf.mxu0
        %v690 = vadd.f32 0.0, %v689
        %v691 = vpop.f32.mrf.mxu0
        %692 = vdwg.mxu0
        %v693 = vld [vmem:[%s5] sm:$0xf]
        %v694 = vld [vmem:[%s5 + $0x4] sm:$0xf]
        %v695 = vld [vmem:[%s5 + $0x8] sm:$0xf]
        %v696 = vld [vmem:[%s5 + $0xc] sm:$0xf]
        %v697 = vld [vmem:[%s5 + $0x10] sm:$0xf]
        %v698 = vld [vmem:[%s5 + $0x14] sm:$0xf]
        %v699 = vld [vmem:[%s5 + $0x18] sm:$0xf]
        %v700 = vld [vmem:[%s5 + $0x1c] sm:$0xf]
        %v709 = vunpack.c.l.b16 %v693
        %v710 = vunpack.c.l.b16 %v694
        %v711 = vunpack.c.l.b16 %v695
        %v712 = vunpack.c.l.b16 %v696
        %v713 = vunpack.c.l.b16 %v697
        %v714 = vunpack.c.l.b16 %v698
        %v715 = vunpack.c.l.b16 %v699
        %v716 = vunpack.c.l.b16 %v700
        %v717 = vpack.c.b16 %v710, %v709
        %v718 = vpack.c.b16 %v712, %v711
        %v719 = vpack.c.b16 %v714, %v713
        %v720 = vpack.c.b16 %v716, %v715
        %725 = vmatprep.subr.bf16.mxu0 0
        %726 = vmatpush1.bf16.msra.mxu0 0
        %727 = vmatprep.subr.bf16.mxu0 0
        %728 = vmatpush1.bf16.msra.mxu0 0
        %729 = vmatprep.subr.bf16.mxu0 0
        %730 = vmatpush1.bf16.msra.mxu0 0
        %731 = vmatprep.subr.bf16.mxu0 0
        %732 = vmatpush1.bf16.msra.mxu0 0
        %733 = vmatprep.subr.bf16.mxu0 0
        %734 = vmatpush1.bf16.msra.mxu0 %v720
        %735 = vmatprep.subr.bf16.mxu0 0
        %736 = vmatpush1.bf16.msra.mxu0 %v719
        %737 = vmatprep.subr.bf16.mxu0 0
        %738 = vmatpush1.bf16.msra.mxu0 %v718
        %739 = vmatprep.subr.bf16.mxu0 0
        %740 = vmatpush1.bf16.msra.mxu0 %v717
        %741 = vmatprep.subr.bf16.mxu0 0
        %742 = vmatpush2.bf16.msra.mxu0 0
        %743 = vmatprep.subr.bf16.mxu0 0
        %744 = vmatpush2.bf16.msra.mxu0 0
        %745 = vmatprep.subr.bf16.mxu0 0
        %746 = vmatpush2.bf16.msra.mxu0 0
        %747 = vmatprep.subr.bf16.mxu0 0
        %748 = vmatpush2.bf16.msra.mxu0 0
        %749 = vmatprep.subr.bf16.mxu0 0
        %750 = vmatpush2.bf16.msra.mxu0 0
        %751 = vmatprep.subr.bf16.mxu0 0
        %752 = vmatpush2.bf16.msra.mxu0 0
        %753 = vmatprep.subr.bf16.mxu0 0
        %754 = vmatpush2.bf16.msra.mxu0 0
        %755 = vmatprep.subr.bf16.mxu0 0
        %756 = vmatpush2.bf16.msra.mxu0 0
        %757 = vmatprep.mubr.bf16.mxu0 0
        %758 = vmatmul.mubr.bf16.gmra.mxu0 %v577
        %v759 = vpop.f32.mrf.mxu0
        %v760 = vadd.f32 0.0, %v759
        %v761 = vpop.f32.mrf.mxu0
        %v762 = vpop.f32.mrf.mxu0
        %v763 = vadd.f32 0.0, %v762
        %v764 = vpop.f32.mrf.mxu0
        %765 = vdwg.mxu0
        %v766 = vpack.c.bf16 %v617, %v614
        %768 = vrot.lane.b32.xlu0 %v766, 112
        %v769 = vpop.permute.xlu0 %768
        %770 = vrot.lane.b32.xlu0 %v766, 96
        %v771 = vpop.permute.xlu0 %770
        %772 = vrot.lane.b32.xlu0 %v766, 80
        %v773 = vpop.permute.xlu0 %772
        %v774 = vpack.c.bf16 %v690, %v687
        %776 = vrot.lane.b32.xlu0 %v774, 112
        %v777 = vpop.permute.xlu0 %776
        %779 = vrot.lane.b32.xlu0 %v774, 96
        %v780 = vpop.permute.xlu0 %779
        %782 = vrot.lane.b32.xlu0 %v774, 80
        %v783 = vpop.permute.xlu0 %782
        %v785 = vpack.c.bf16 %v763, %v760
        %787 = vrot.lane.b32.xlu0 %v785, 112
        %v788 = vpop.permute.xlu0 %787
        %790 = vrot.lane.b32.xlu0 %v785, 96
        %v791 = vpop.permute.xlu0 %790
        %793 = vrot.lane.b32.xlu0 %v785, 80
        %v794 = vpop.permute.xlu0 %793
        %796 = vxpose.xlu0.c.b16.start [1/8] %v774, 128
        %797 = vxpose.xlu0.c.b16.cont [2/8] 0, 128
        %798 = vxpose.xlu0.c.b16.cont [3/8] 0, 128
        %799 = vxpose.xlu0.c.b16.cont [4/8] 0, 128
        %800 = vxpose.xlu0.c.b16.cont [5/8] 0, 128
        %801 = vxpose.xlu0.c.b16.cont [6/8] 0, 128
        %802 = vxpose.xlu0.c.b16.cont [7/8] 0, 128
        %803 = vxpose.xlu0.c.b16.end [8/8] 0, 128
        %v804 = vpop.trf.xlu0
        %v805 = vpop.trf.xlu0
        %v806 = vpop.trf.xlu0
        %v807 = vpop.trf.xlu0
        %v808 = vpop.trf.xlu0
        %v809 = vpop.trf.xlu0
        %v810 = vpop.trf.xlu0
        %v811 = vpop.trf.xlu0
        %812 = vxpose.xlu0.c.b16.start [1/8] %v777, 128
        %813 = vxpose.xlu0.c.b16.cont [2/8] 0, 128
        %814 = vxpose.xlu0.c.b16.cont [3/8] 0, 128
        %815 = vxpose.xlu0.c.b16.cont [4/8] 0, 128
        %816 = vxpose.xlu0.c.b16.cont [5/8] 0, 128
        %817 = vxpose.xlu0.c.b16.cont [6/8] 0, 128
        %818 = vxpose.xlu0.c.b16.cont [7/8] 0, 128
        %819 = vxpose.xlu0.c.b16.end [8/8] 0, 128
        %v820 = vpop.trf.xlu0
        %v821 = vpop.trf.xlu0
        %v822 = vpop.trf.xlu0
        %v823 = vpop.trf.xlu0
        %v824 = vpop.trf.xlu0
        %v825 = vpop.trf.xlu0
        %v826 = vpop.trf.xlu0
        %v827 = vpop.trf.xlu0
        %828 = vxpose.xlu0.c.b16.start [1/8] %v780, 128
        %829 = vxpose.xlu0.c.b16.cont [2/8] 0, 128
        %830 = vxpose.xlu0.c.b16.cont [3/8] 0, 128
        %831 = vxpose.xlu0.c.b16.cont [4/8] 0, 128
        %832 = vxpose.xlu0.c.b16.cont [5/8] 0, 128
        %833 = vxpose.xlu0.c.b16.cont [6/8] 0, 128
        %834 = vxpose.xlu0.c.b16.cont [7/8] 0, 128
        %835 = vxpose.xlu0.c.b16.end [8/8] 0, 128
        %v836 = vpop.trf.xlu0
        %v837 = vpop.trf.xlu0
        %v838 = vpop.trf.xlu0
        %v839 = vpop.trf.xlu0
        %v840 = vpop.trf.xlu0
        %v841 = vpop.trf.xlu0
        %v842 = vpop.trf.xlu0
        %v843 = vpop.trf.xlu0
        %844 = vxpose.xlu0.c.b16.start [1/8] %v783, 128
        %845 = vxpose.xlu0.c.b16.cont [2/8] 0, 128
        %846 = vxpose.xlu0.c.b16.cont [3/8] 0, 128
        %847 = vxpose.xlu0.c.b16.cont [4/8] 0, 128
        %848 = vxpose.xlu0.c.b16.cont [5/8] 0, 128
        %849 = vxpose.xlu0.c.b16.cont [6/8] 0, 128
        %850 = vxpose.xlu0.c.b16.cont [7/8] 0, 128
        %851 = vxpose.xlu0.c.b16.end [8/8] 0, 128
        %v852 = vpop.trf.xlu0
        %v853 = vpop.trf.xlu0
        %v854 = vpop.trf.xlu0
        %v855 = vpop.trf.xlu0
        %v856 = vpop.trf.xlu0
        %v857 = vpop.trf.xlu0
        %v858 = vpop.trf.xlu0
        %v859 = vpop.trf.xlu0
        %vm860 = vcmask 130048
        %v862 = vsel %vm860, %v766, 0
        %864 = vmatprep.subr.bf16.mxu0 0
        %865 = vmatpush1.bf16.msra.mxu0 0
        %866 = vmatprep.subr.bf16.mxu0 0
        %867 = vmatpush1.bf16.msra.mxu0 0
        %868 = vmatprep.subr.bf16.mxu0 0
        %869 = vmatpush1.bf16.msra.mxu0 0
        %870 = vmatprep.subr.bf16.mxu0 0
        %871 = vmatpush1.bf16.msra.mxu0 0
        %872 = vmatprep.subr.bf16.mxu0 0
        %873 = vmatpush1.bf16.msra.mxu0 0
        %874 = vmatprep.subr.bf16.mxu0 0
        %875 = vmatpush1.bf16.msra.mxu0 0
        %876 = vmatprep.subr.bf16.mxu0 0
        %877 = vmatpush1.bf16.msra.mxu0 0
        %878 = vmatprep.subr.bf16.mxu0 0
        %879 = vmatpush1.bf16.msra.mxu0 %v804
        %880 = vmatprep.subr.bf16.mxu0 0
        %881 = vmatpush2.bf16.msra.mxu0 0
        %882 = vmatprep.subr.bf16.mxu0 0
        %883 = vmatpush2.bf16.msra.mxu0 0
        %884 = vmatprep.subr.bf16.mxu0 0
        %885 = vmatpush2.bf16.msra.mxu0 0
        %886 = vmatprep.subr.bf16.mxu0 0
        %887 = vmatpush2.bf16.msra.mxu0 0
        %888 = vmatprep.subr.bf16.mxu0 0
        %889 = vmatpush2.bf16.msra.mxu0 0
        %890 = vmatprep.subr.bf16.mxu0 0
        %891 = vmatpush2.bf16.msra.mxu0 0
        %892 = vmatprep.subr.bf16.mxu0 0
        %893 = vmatpush2.bf16.msra.mxu0 0
        %894 = vmatprep.subr.bf16.mxu0 0
        %895 = vmatpush2.bf16.msra.mxu0 0
        %896 = vmatprep.mubr.bf16.mxu0 0
        %897 = vmatmul.mubr.bf16.gmra.mxu0 %v862
        %v898 = vpop.f32.mrf.mxu0
        %v899 = vadd.f32 0.0, %v898
        %v900 = vpop.f32.mrf.mxu0
        %v901 = vpop.f32.mrf.mxu0
        %v902 = vadd.f32 0.0, %v901
        %v903 = vpop.f32.mrf.mxu0
        %904 = vdwg.mxu0
        %v906 = vsel %vm860, %v769, 0
        %908 = vmatprep.subr.bf16.mxu0 0
        %909 = vmatpush1.bf16.msra.mxu0 0
        %910 = vmatprep.subr.bf16.mxu0 0
        %911 = vmatpush1.bf16.msra.mxu0 0
        %912 = vmatprep.subr.bf16.mxu0 0
        %913 = vmatpush1.bf16.msra.mxu0 0
        %914 = vmatprep.subr.bf16.mxu0 0
        %915 = vmatpush1.bf16.msra.mxu0 0
        %916 = vmatprep.subr.bf16.mxu0 0
        %917 = vmatpush1.bf16.msra.mxu0 0
        %918 = vmatprep.subr.bf16.mxu0 0
        %919 = vmatpush1.bf16.msra.mxu0 0
        %920 = vmatprep.subr.bf16.mxu0 0
        %921 = vmatpush1.bf16.msra.mxu0 0
        %922 = vmatprep.subr.bf16.mxu0 0
        %923 = vmatpush1.bf16.msra.mxu0 %v820
        %924 = vmatprep.subr.bf16.mxu0 0
        %925 = vmatpush2.bf16.msra.mxu0 0
        %926 = vmatprep.subr.bf16.mxu0 0
        %927 = vmatpush2.bf16.msra.mxu0 0
        %928 = vmatprep.subr.bf16.mxu0 0
        %929 = vmatpush2.bf16.msra.mxu0 0
        %930 = vmatprep.subr.bf16.mxu0 0
        %931 = vmatpush2.bf16.msra.mxu0 0
        %932 = vmatprep.subr.bf16.mxu0 0
        %933 = vmatpush2.bf16.msra.mxu0 0
        %934 = vmatprep.subr.bf16.mxu0 0
        %935 = vmatpush2.bf16.msra.mxu0 0
        %936 = vmatprep.subr.bf16.mxu0 0
        %937 = vmatpush2.bf16.msra.mxu0 0
        %938 = vmatprep.subr.bf16.mxu0 0
        %939 = vmatpush2.bf16.msra.mxu0 0
        %940 = vmatprep.mubr.bf16.mxu0 0
        %941 = vmatmul.mubr.bf16.gmra.mxu0 %v906
        %v942 = vpop.f32.mrf.mxu0
        %v943 = vadd.f32 0.0, %v942
        %v944 = vpop.f32.mrf.mxu0
        %v945 = vpop.f32.mrf.mxu0
        %v946 = vadd.f32 0.0, %v945
        %v947 = vpop.f32.mrf.mxu0
        %948 = vdwg.mxu0
        %v950 = vsel %vm860, %v771, 0
        %952 = vmatprep.subr.bf16.mxu0 0
        %953 = vmatpush1.bf16.msra.mxu0 0
        %954 = vmatprep.subr.bf16.mxu0 0
        %955 = vmatpush1.bf16.msra.mxu0 0
        %956 = vmatprep.subr.bf16.mxu0 0
        %957 = vmatpush1.bf16.msra.mxu0 0
        %958 = vmatprep.subr.bf16.mxu0 0
        %959 = vmatpush1.bf16.msra.mxu0 0
        %960 = vmatprep.subr.bf16.mxu0 0
        %961 = vmatpush1.bf16.msra.mxu0 0
        %962 = vmatprep.subr.bf16.mxu0 0
        %963 = vmatpush1.bf16.msra.mxu0 0
        %964 = vmatprep.subr.bf16.mxu0 0
        %965 = vmatpush1.bf16.msra.mxu0 0
        %966 = vmatprep.subr.bf16.mxu0 0
        %967 = vmatpush1.bf16.msra.mxu0 %v836
        %968 = vmatprep.subr.bf16.mxu0 0
        %969 = vmatpush2.bf16.msra.mxu0 0
        %970 = vmatprep.subr.bf16.mxu0 0
        %971 = vmatpush2.bf16.msra.mxu0 0
        %972 = vmatprep.subr.bf16.mxu0 0
        %973 = vmatpush2.bf16.msra.mxu0 0
        %974 = vmatprep.subr.bf16.mxu0 0
        %975 = vmatpush2.bf16.msra.mxu0 0
        %976 = vmatprep.subr.bf16.mxu0 0
        %977 = vmatpush2.bf16.msra.mxu0 0
        %978 = vmatprep.subr.bf16.mxu0 0
        %979 = vmatpush2.bf16.msra.mxu0 0
        %980 = vmatprep.subr.bf16.mxu0 0
        %981 = vmatpush2.bf16.msra.mxu0 0
        %982 = vmatprep.subr.bf16.mxu0 0
        %983 = vmatpush2.bf16.msra.mxu0 0
        %984 = vmatprep.mubr.bf16.mxu0 0
        %985 = vmatmul.mubr.bf16.gmra.mxu0 %v950
        %v986 = vpop.f32.mrf.mxu0
        %v987 = vadd.f32 0.0, %v986
        %v988 = vpop.f32.mrf.mxu0
        %v989 = vpop.f32.mrf.mxu0
        %v990 = vadd.f32 0.0, %v989
        %v991 = vpop.f32.mrf.mxu0
        %992 = vdwg.mxu0
        %v994 = vsel %vm860, %v773, 0
        %996 = vmatprep.subr.bf16.mxu0 0
        %997 = vmatpush1.bf16.msra.mxu0 0
        %998 = vmatprep.subr.bf16.mxu0 0
        %999 = vmatpush1.bf16.msra.mxu0 0
        %1000 = vmatprep.subr.bf16.mxu0 0
        %1001 = vmatpush1.bf16.msra.mxu0 0
        %1002 = vmatprep.subr.bf16.mxu0 0
        %1003 = vmatpush1.bf16.msra.mxu0 0
        %1004 = vmatprep.subr.bf16.mxu0 0
        %1005 = vmatpush1.bf16.msra.mxu0 0
        %1006 = vmatprep.subr.bf16.mxu0 0
        %1007 = vmatpush1.bf16.msra.mxu0 0
        %1008 = vmatprep.subr.bf16.mxu0 0
        %1009 = vmatpush1.bf16.msra.mxu0 0
        %1010 = vmatprep.subr.bf16.mxu0 0
        %1011 = vmatpush1.bf16.msra.mxu0 %v852
        %1012 = vmatprep.subr.bf16.mxu0 0
        %1013 = vmatpush2.bf16.msra.mxu0 0
        %1014 = vmatprep.subr.bf16.mxu0 0
        %1015 = vmatpush2.bf16.msra.mxu0 0
        %1016 = vmatprep.subr.bf16.mxu0 0
        %1017 = vmatpush2.bf16.msra.mxu0 0
        %1018 = vmatprep.subr.bf16.mxu0 0
        %1019 = vmatpush2.bf16.msra.mxu0 0
        %1020 = vmatprep.subr.bf16.mxu0 0
        %1021 = vmatpush2.bf16.msra.mxu0 0
        %1022 = vmatprep.subr.bf16.mxu0 0
        %1023 = vmatpush2.bf16.msra.mxu0 0
        %1024 = vmatprep.subr.bf16.mxu0 0
        %1025 = vmatpush2.bf16.msra.mxu0 0
        %1026 = vmatprep.subr.bf16.mxu0 0
        %1027 = vmatpush2.bf16.msra.mxu0 0
        %1028 = vmatprep.mubr.bf16.mxu0 0
        %1029 = vmatmul.mubr.bf16.gmra.mxu0 %v994
        %v1030 = vpop.f32.mrf.mxu0
        %v1031 = vadd.f32 0.0, %v1030
        %v1032 = vpop.f32.mrf.mxu0
        %v1033 = vpop.f32.mrf.mxu0
        %v1034 = vadd.f32 0.0, %v1033
        %v1035 = vpop.f32.mrf.mxu0
        %1036 = vdwg.mxu0
        %v1037 = vsel %vm860, %v899, -inf
        %1038 = vmax.xlane.f32.xlu0 %v1037
        %v1039 = vpop.xlane.xlu0 %1038
        %v1040 = vsel %vm860, %v902, -inf
        %1041 = vmax.xlane.f32.xlu0 %v1040
        %v1042 = vpop.xlane.xlu0 %1041
        %v1043 = vsel %vm860, %v943, -inf
        %1044 = vmax.xlane.f32.xlu0 %v1043
        %v1045 = vpop.xlane.xlu0 %1044
        %v1046 = vsel %vm860, %v946, -inf
        %1047 = vmax.xlane.f32.xlu0 %v1046
        %v1048 = vpop.xlane.xlu0 %1047
        %v1049 = vsel %vm860, %v987, -inf
        %1050 = vmax.xlane.f32.xlu0 %v1049
        %v1051 = vpop.xlane.xlu0 %1050
        %v1052 = vsel %vm860, %v990, -inf
        %1053 = vmax.xlane.f32.xlu0 %v1052
        %v1054 = vpop.xlane.xlu0 %1053
        %v1055 = vsel %vm860, %v1031, -inf
        %1056 = vmax.xlane.f32.xlu0 %v1055
        %v1057 = vpop.xlane.xlu0 %1056
        %v1058 = vsel %vm860, %v1034, -inf
        %1059 = vmax.xlane.f32.xlu0 %v1058
        %v1060 = vpop.xlane.xlu0 %1059
        %v1061 = vsub.f32 %v899, %v1039
        %v1062 = vsub.f32 %v902, %v1042
        %v1063 = vsub.f32 %v943, %v1045
        %v1064 = vsub.f32 %v946, %v1048
        %v1065 = vsub.f32 %v987, %v1051
        %v1066 = vsub.f32 %v990, %v1054
        %v1067 = vsub.f32 %v1031, %v1057
        %v1068 = vsub.f32 %v1034, %v1060
        %v1069 = vmul.f32 %v1061, 1.442695
        %v1070 = vpow.pop %v1069
        %v1071 = vmul.f32 %v1062, 1.442695
        %v1072 = vpow.pop %v1071
        %v1073 = vmul.f32 %v1063, 1.442695
        %v1074 = vpow.pop %v1073
        %v1075 = vmul.f32 %v1064, 1.442695
        %v1076 = vpow.pop %v1075
        %v1077 = vmul.f32 %v1065, 1.442695
        %v1078 = vpow.pop %v1077
        %v1079 = vmul.f32 %v1066, 1.442695
        %v1080 = vpow.pop %v1079
        %v1081 = vmul.f32 %v1067, 1.442695
        %v1082 = vpow.pop %v1081
        %v1083 = vmul.f32 %v1068, 1.442695
        %v1084 = vpow.pop %v1083
        %v1085 = vsel %vm860, %v1070, 0.0
        %1086 = vadd.xlane.f32.xlu0 %v1085
        %v1087 = vpop.xlane.xlu0 %1086
        %v1088 = vsel %vm860, %v1072, 0.0
        %1089 = vadd.xlane.f32.xlu0 %v1088
        %v1090 = vpop.xlane.xlu0 %1089
        %v1091 = vsel %vm860, %v1074, 0.0
        %1092 = vadd.xlane.f32.xlu0 %v1091
        %v1093 = vpop.xlane.xlu0 %1092
        %v1094 = vsel %vm860, %v1076, 0.0
        %1095 = vadd.xlane.f32.xlu0 %v1094
        %v1096 = vpop.xlane.xlu0 %1095
        %v1097 = vsel %vm860, %v1078, 0.0
        %1098 = vadd.xlane.f32.xlu0 %v1097
        %v1099 = vpop.xlane.xlu0 %1098
        %v1100 = vsel %vm860, %v1080, 0.0
        %1101 = vadd.xlane.f32.xlu0 %v1100
        %v1102 = vpop.xlane.xlu0 %1101
        %v1103 = vsel %vm860, %v1082, 0.0
        %1104 = vadd.xlane.f32.xlu0 %v1103
        %v1105 = vpop.xlane.xlu0 %1104
        %v1106 = vsel %vm860, %v1084, 0.0
        %1107 = vadd.xlane.f32.xlu0 %v1106
        %v1108 = vpop.xlane.xlu0 %1107
        %v1109 = vrcp.pop %v1087
        %v1110 = vrcp.pop %v1090
        %v1111 = vrcp.pop %v1093
        %v1112 = vrcp.pop %v1096
        %v1113 = vrcp.pop %v1099
        %v1114 = vrcp.pop %v1102
        %v1115 = vrcp.pop %v1105
        %v1116 = vrcp.pop %v1108
        %v1117 = vmul.f32 %v1070, %v1109
        %v1118 = vmul.f32 %v1072, %v1110
        %v1119 = vmul.f32 %v1074, %v1111
        %v1120 = vmul.f32 %v1076, %v1112
        %v1121 = vmul.f32 %v1078, %v1113
        %v1122 = vmul.f32 %v1080, %v1114
        %v1123 = vmul.f32 %v1082, %v1115
        %v1124 = vmul.f32 %v1084, %v1116
        %v1125 = vpack.c.bf16 %v1118, %v1117
        %v1126 = vpack.c.bf16 %v1120, %v1119
        %v1127 = vpack.c.bf16 %v1122, %v1121
        %v1128 = vpack.c.bf16 %v1124, %v1123
        %1129 = vxpose.xlu0.c.b16.start [1/8] %v785, 128
        %1130 = vxpose.xlu0.c.b16.cont [2/8] 0, 128
        %1131 = vxpose.xlu0.c.b16.cont [3/8] 0, 128
        %1132 = vxpose.xlu0.c.b16.cont [4/8] 0, 128
        %1133 = vxpose.xlu0.c.b16.cont [5/8] 0, 128
        %1134 = vxpose.xlu0.c.b16.cont [6/8] 0, 128
        %1135 = vxpose.xlu0.c.b16.cont [7/8] 0, 128
        %1136 = vxpose.xlu0.c.b16.end [8/8] 0, 128
        %v1137 = vpop.trf.xlu0
        %v1138 = vpop.trf.xlu0
        %v1139 = vpop.trf.xlu0
        %v1140 = vpop.trf.xlu0
        %v1141 = vpop.trf.xlu0
        %v1142 = vpop.trf.xlu0
        %v1143 = vpop.trf.xlu0
        %v1144 = vpop.trf.xlu0
        %1145 = vxpose.xlu0.c.b16.start [1/8] %v788, 128
        %1146 = vxpose.xlu0.c.b16.cont [2/8] 0, 128
        %1147 = vxpose.xlu0.c.b16.cont [3/8] 0, 128
        %1148 = vxpose.xlu0.c.b16.cont [4/8] 0, 128
        %1149 = vxpose.xlu0.c.b16.cont [5/8] 0, 128
        %1150 = vxpose.xlu0.c.b16.cont [6/8] 0, 128
        %1151 = vxpose.xlu0.c.b16.cont [7/8] 0, 128
        %1152 = vxpose.xlu0.c.b16.end [8/8] 0, 128
        %v1153 = vpop.trf.xlu0
        %v1154 = vpop.trf.xlu0
        %v1155 = vpop.trf.xlu0
        %v1156 = vpop.trf.xlu0
        %v1157 = vpop.trf.xlu0
        %v1158 = vpop.trf.xlu0
        %v1159 = vpop.trf.xlu0
        %v1160 = vpop.trf.xlu0
        %1161 = vxpose.xlu0.c.b16.start [1/8] %v791, 128
        %1162 = vxpose.xlu0.c.b16.cont [2/8] 0, 128
        %1163 = vxpose.xlu0.c.b16.cont [3/8] 0, 128
        %1164 = vxpose.xlu0.c.b16.cont [4/8] 0, 128
        %1165 = vxpose.xlu0.c.b16.cont [5/8] 0, 128
        %1166 = vxpose.xlu0.c.b16.cont [6/8] 0, 128
        %1167 = vxpose.xlu0.c.b16.cont [7/8] 0, 128
        %1168 = vxpose.xlu0.c.b16.end [8/8] 0, 128
        %v1169 = vpop.trf.xlu0
        %v1170 = vpop.trf.xlu0
        %v1171 = vpop.trf.xlu0
        %v1172 = vpop.trf.xlu0
        %v1173 = vpop.trf.xlu0
        %v1174 = vpop.trf.xlu0
        %v1175 = vpop.trf.xlu0
        %v1176 = vpop.trf.xlu0
        %1177 = vxpose.xlu0.c.b16.start [1/8] %v794, 128
        %1178 = vxpose.xlu0.c.b16.cont [2/8] 0, 128
        %1179 = vxpose.xlu0.c.b16.cont [3/8] 0, 128
        %1180 = vxpose.xlu0.c.b16.cont [4/8] 0, 128
        %1181 = vxpose.xlu0.c.b16.cont [5/8] 0, 128
        %1182 = vxpose.xlu0.c.b16.cont [6/8] 0, 128
        %1183 = vxpose.xlu0.c.b16.cont [7/8] 0, 128
        %1184 = vxpose.xlu0.c.b16.end [8/8] 0, 128
        %v1185 = vpop.trf.xlu0
        %v1186 = vpop.trf.xlu0
        %v1187 = vpop.trf.xlu0
        %v1188 = vpop.trf.xlu0
        %v1189 = vpop.trf.xlu0
        %v1190 = vpop.trf.xlu0
        %v1191 = vpop.trf.xlu0
        %v1192 = vpop.trf.xlu0
        %v1194 = vsel %vm860, %v1137, 0
        %v1197 = vsel %vm860, %v1125, 0
        %1199 = vmatprep.subr.bf16.mxu0 0
        %1200 = vmatpush1.bf16.xpose.msra.mxu0 0
        %1201 = vmatprep.subr.bf16.mxu0 0
        %1202 = vmatpush1.bf16.xpose.msra.mxu0 0
        %1203 = vmatprep.subr.bf16.mxu0 0
        %1204 = vmatpush1.bf16.xpose.msra.mxu0 0
        %1205 = vmatprep.subr.bf16.mxu0 0
        %1206 = vmatpush1.bf16.xpose.msra.mxu0 0
        %1207 = vmatprep.subr.bf16.mxu0 0
        %1208 = vmatpush1.bf16.xpose.msra.mxu0 0
        %1209 = vmatprep.subr.bf16.mxu0 0
        %1210 = vmatpush1.bf16.xpose.msra.mxu0 0
        %1211 = vmatprep.subr.bf16.mxu0 0
        %1212 = vmatpush1.bf16.xpose.msra.mxu0 0
        %1213 = vmatprep.subr.bf16.mxu0 0
        %1214 = vmatpush1.bf16.xpose.msra.mxu0 %v1197
        %1215 = vmatprep.subr.bf16.mxu0 0
        %1216 = vmatpush2.bf16.xpose.msra.mxu0 0
        %1217 = vmatprep.subr.bf16.mxu0 0
        %1218 = vmatpush2.bf16.xpose.msra.mxu0 0
        %1219 = vmatprep.subr.bf16.mxu0 0
        %1220 = vmatpush2.bf16.xpose.msra.mxu0 0
        %1221 = vmatprep.subr.bf16.mxu0 0
        %1222 = vmatpush2.bf16.xpose.msra.mxu0 0
        %1223 = vmatprep.subr.bf16.mxu0 0
        %1224 = vmatpush2.bf16.xpose.msra.mxu0 0
        %1225 = vmatprep.subr.bf16.mxu0 0
        %1226 = vmatpush2.bf16.xpose.msra.mxu0 0
        %1227 = vmatprep.subr.bf16.mxu0 0
        %1228 = vmatpush2.bf16.xpose.msra.mxu0 0
        %1229 = vmatprep.subr.bf16.mxu0 0
        %1230 = vmatpush2.bf16.xpose.msra.mxu0 0
        %1231 = vmatprep.mubr.bf16.mxu0 0
        %1232 = vmatmul.mubr.bf16.gmra.mxu0 %v1194
        %v1233 = vpop.f32.mrf.mxu0
        %v1234 = vadd.f32 0.0, %v1233
        %v1235 = vpop.f32.mrf.mxu0
        %v1236 = vpop.f32.mrf.mxu0
        %v1237 = vadd.f32 0.0, %v1236
        %v1238 = vpop.f32.mrf.mxu0
        %1239 = vdwg.mxu0
        %v1241 = vsel %vm860, %v1153, 0
        %v1244 = vsel %vm860, %v1126, 0
        %1246 = vmatprep.subr.bf16.mxu0 0
        %1247 = vmatpush1.bf16.xpose.msra.mxu0 0
        %1248 = vmatprep.subr.bf16.mxu0 0
        %1249 = vmatpush1.bf16.xpose.msra.mxu0 0
        %1250 = vmatprep.subr.bf16.mxu0 0
        %1251 = vmatpush1.bf16.xpose.msra.mxu0 0
        %1252 = vmatprep.subr.bf16.mxu0 0
        %1253 = vmatpush1.bf16.xpose.msra.mxu0 0
        %1254 = vmatprep.subr.bf16.mxu0 0
        %1255 = vmatpush1.bf16.xpose.msra.mxu0 0
        %1256 = vmatprep.subr.bf16.mxu0 0
        %1257 = vmatpush1.bf16.xpose.msra.mxu0 0
        %1258 = vmatprep.subr.bf16.mxu0 0
        %1259 = vmatpush1.bf16.xpose.msra.mxu0 0
        %1260 = vmatprep.subr.bf16.mxu0 0
        %1261 = vmatpush1.bf16.xpose.msra.mxu0 %v1244
        %1262 = vmatprep.subr.bf16.mxu0 0
        %1263 = vmatpush2.bf16.xpose.msra.mxu0 0
        %1264 = vmatprep.subr.bf16.mxu0 0
        %1265 = vmatpush2.bf16.xpose.msra.mxu0 0
        %1266 = vmatprep.subr.bf16.mxu0 0
        %1267 = vmatpush2.bf16.xpose.msra.mxu0 0
        %1268 = vmatprep.subr.bf16.mxu0 0
        %1269 = vmatpush2.bf16.xpose.msra.mxu0 0
        %1270 = vmatprep.subr.bf16.mxu0 0
        %1271 = vmatpush2.bf16.xpose.msra.mxu0 0
        %1272 = vmatprep.subr.bf16.mxu0 0
        %1273 = vmatpush2.bf16.xpose.msra.mxu0 0
        %1274 = vmatprep.subr.bf16.mxu0 0
        %1275 = vmatpush2.bf16.xpose.msra.mxu0 0
        %1276 = vmatprep.subr.bf16.mxu0 0
        %1277 = vmatpush2.bf16.xpose.msra.mxu0 0
        %1278 = vmatprep.mubr.bf16.mxu0 0
        %1279 = vmatmul.mubr.bf16.gmra.mxu0 %v1241
        %v1280 = vpop.f32.mrf.mxu0
        %v1281 = vadd.f32 0.0, %v1280
        %v1282 = vpop.f32.mrf.mxu0
        %v1283 = vpop.f32.mrf.mxu0
        %v1284 = vadd.f32 0.0, %v1283
        %v1285 = vpop.f32.mrf.mxu0
        %1286 = vdwg.mxu0
        %v1288 = vsel %vm860, %v1169, 0
        %v1291 = vsel %vm860, %v1127, 0
        %1293 = vmatprep.subr.bf16.mxu0 0
        %1294 = vmatpush1.bf16.xpose.msra.mxu0 0
        %1295 = vmatprep.subr.bf16.mxu0 0
        %1296 = vmatpush1.bf16.xpose.msra.mxu0 0
        %1297 = vmatprep.subr.bf16.mxu0 0
        %1298 = vmatpush1.bf16.xpose.msra.mxu0 0
        %1299 = vmatprep.subr.bf16.mxu0 0
        %1300 = vmatpush1.bf16.xpose.msra.mxu0 0
        %1301 = vmatprep.subr.bf16.mxu0 0
        %1302 = vmatpush1.bf16.xpose.msra.mxu0 0
        %1303 = vmatprep.subr.bf16.mxu0 0
        %1304 = vmatpush1.bf16.xpose.msra.mxu0 0
        %1305 = vmatprep.subr.bf16.mxu0 0
        %1306 = vmatpush1.bf16.xpose.msra.mxu0 0
        %1307 = vmatprep.subr.bf16.mxu0 0
        %1308 = vmatpush1.bf16.xpose.msra.mxu0 %v1291
        %1309 = vmatprep.subr.bf16.mxu0 0
        %1310 = vmatpush2.bf16.xpose.msra.mxu0 0
        %1311 = vmatprep.subr.bf16.mxu0 0
        %1312 = vmatpush2.bf16.xpose.msra.mxu0 0
        %1313 = vmatprep.subr.bf16.mxu0 0
        %1314 = vmatpush2.bf16.xpose.msra.mxu0 0
        %1315 = vmatprep.subr.bf16.mxu0 0
        %1316 = vmatpush2.bf16.xpose.msra.mxu0 0
        %1317 = vmatprep.subr.bf16.mxu0 0
        %1318 = vmatpush2.bf16.xpose.msra.mxu0 0
        %1319 = vmatprep.subr.bf16.mxu0 0
        %1320 = vmatpush2.bf16.xpose.msra.mxu0 0
        %1321 = vmatprep.subr.bf16.mxu0 0
        %1322 = vmatpush2.bf16.xpose.msra.mxu0 0
        %1323 = vmatprep.subr.bf16.mxu0 0
        %1324 = vmatpush2.bf16.xpose.msra.mxu0 0
        %1325 = vmatprep.mubr.bf16.mxu0 0
        %1326 = vmatmul.mubr.bf16.gmra.mxu0 %v1288
        %v1327 = vpop.f32.mrf.mxu0
        %v1328 = vadd.f32 0.0, %v1327
        %v1329 = vpop.f32.mrf.mxu0
        %v1330 = vpop.f32.mrf.mxu0
        %v1331 = vadd.f32 0.0, %v1330
        %v1332 = vpop.f32.mrf.mxu0
        %1333 = vdwg.mxu0
        %v1335 = vsel %vm860, %v1185, 0
        %v1338 = vsel %vm860, %v1128, 0
        %1340 = vmatprep.subr.bf16.mxu0 0
        %1341 = vmatpush1.bf16.xpose.msra.mxu0 0
        %1342 = vmatprep.subr.bf16.mxu0 0
        %1343 = vmatpush1.bf16.xpose.msra.mxu0 0
        %1344 = vmatprep.subr.bf16.mxu0 0
        %1345 = vmatpush1.bf16.xpose.msra.mxu0 0
        %1346 = vmatprep.subr.bf16.mxu0 0
        %1347 = vmatpush1.bf16.xpose.msra.mxu0 0
        %1348 = vmatprep.subr.bf16.mxu0 0
        %1349 = vmatpush1.bf16.xpose.msra.mxu0 0
        %1350 = vmatprep.subr.bf16.mxu0 0
        %1351 = vmatpush1.bf16.xpose.msra.mxu0 0
        %1352 = vmatprep.subr.bf16.mxu0 0
        %1353 = vmatpush1.bf16.xpose.msra.mxu0 0
        %1354 = vmatprep.subr.bf16.mxu0 0
        %1355 = vmatpush1.bf16.xpose.msra.mxu0 %v1338
        %1356 = vmatprep.subr.bf16.mxu0 0
        %1357 = vmatpush2.bf16.xpose.msra.mxu0 0
        %1358 = vmatprep.subr.bf16.mxu0 0
        %1359 = vmatpush2.bf16.xpose.msra.mxu0 0
        %1360 = vmatprep.subr.bf16.mxu0 0
        %1361 = vmatpush2.bf16.xpose.msra.mxu0 0
        %1362 = vmatprep.subr.bf16.mxu0 0
        %1363 = vmatpush2.bf16.xpose.msra.mxu0 0
        %1364 = vmatprep.subr.bf16.mxu0 0
        %1365 = vmatpush2.bf16.xpose.msra.mxu0 0
        %1366 = vmatprep.subr.bf16.mxu0 0
        %1367 = vmatpush2.bf16.xpose.msra.mxu0 0
        %1368 = vmatprep.subr.bf16.mxu0 0
        %1369 = vmatpush2.bf16.xpose.msra.mxu0 0
        %1370 = vmatprep.subr.bf16.mxu0 0
        %1371 = vmatpush2.bf16.xpose.msra.mxu0 0
        %1372 = vmatprep.mubr.bf16.mxu0 0
        %1373 = vmatmul.mubr.bf16.gmra.mxu0 %v1335
        %v1374 = vpop.f32.mrf.mxu0
        %v1375 = vadd.f32 0.0, %v1374
        %v1376 = vpop.f32.mrf.mxu0
        %v1377 = vpop.f32.mrf.mxu0
        %v1378 = vadd.f32 0.0, %v1377
        %v1379 = vpop.f32.mrf.mxu0
        %1380 = vdwg.mxu0
        %1381 = vxpose.xlu0.b32.start [1/16] %v1234, 128
        %1382 = vxpose.xlu0.b32.cont [2/16] %v1237, 128
        %1383 = vxpose.xlu0.b32.cont [3/16] 0.0, 128
        %1384 = vxpose.xlu0.b32.cont [4/16] 0.0, 128
        %1385 = vxpose.xlu0.b32.cont [5/16] 0.0, 128
        %1386 = vxpose.xlu0.b32.cont [6/16] 0.0, 128
        %1387 = vxpose.xlu0.b32.cont [7/16] 0.0, 128
        %1388 = vxpose.xlu0.b32.cont [8/16] 0.0, 128
        %1389 = vxpose.xlu0.b32.cont [9/16] 0.0, 128
        %1390 = vxpose.xlu0.b32.cont [10/16] 0.0, 128
        %1391 = vxpose.xlu0.b32.cont [11/16] 0.0, 128
        %1392 = vxpose.xlu0.b32.cont [12/16] 0.0, 128
        %1393 = vxpose.xlu0.b32.cont [13/16] 0.0, 128
        %1394 = vxpose.xlu0.b32.cont [14/16] 0.0, 128
        %1395 = vxpose.xlu0.b32.cont [15/16] 0.0, 128
        %1396 = vxpose.xlu0.b32.end [16/16] 0.0, 128
        %v1397 = vpop.trf.xlu0
        %v1398 = vpop.trf.xlu0
        %v1399 = vpop.trf.xlu0
        %v1400 = vpop.trf.xlu0
        %v1401 = vpop.trf.xlu0
        %v1402 = vpop.trf.xlu0
        %v1403 = vpop.trf.xlu0
        %v1404 = vpop.trf.xlu0
        %v1405 = vpop.trf.xlu0
        %v1406 = vpop.trf.xlu0
        %v1407 = vpop.trf.xlu0
        %v1408 = vpop.trf.xlu0
        %v1409 = vpop.trf.xlu0
        %v1410 = vpop.trf.xlu0
        %v1411 = vpop.trf.xlu0
        %v1412 = vpop.trf.xlu0
        %1413 = vxpose.xlu0.b32.start [1/16] %v1281, 128
        %1414 = vxpose.xlu0.b32.cont [2/16] %v1284, 128
        %1415 = vxpose.xlu0.b32.cont [3/16] 0.0, 128
        %1416 = vxpose.xlu0.b32.cont [4/16] 0.0, 128
        %1417 = vxpose.xlu0.b32.cont [5/16] 0.0, 128
        %1418 = vxpose.xlu0.b32.cont [6/16] 0.0, 128
        %1419 = vxpose.xlu0.b32.cont [7/16] 0.0, 128
        %1420 = vxpose.xlu0.b32.cont [8/16] 0.0, 128
        %1421 = vxpose.xlu0.b32.cont [9/16] 0.0, 128
        %1422 = vxpose.xlu0.b32.cont [10/16] 0.0, 128
        %1423 = vxpose.xlu0.b32.cont [11/16] 0.0, 128
        %1424 = vxpose.xlu0.b32.cont [12/16] 0.0, 128
        %1425 = vxpose.xlu0.b32.cont [13/16] 0.0, 128
        %1426 = vxpose.xlu0.b32.cont [14/16] 0.0, 128
        %1427 = vxpose.xlu0.b32.cont [15/16] 0.0, 128
        %1428 = vxpose.xlu0.b32.end [16/16] 0.0, 128
        %v1429 = vpop.trf.xlu0
        %v1430 = vpop.trf.xlu0
        %v1431 = vpop.trf.xlu0
        %v1432 = vpop.trf.xlu0
        %v1433 = vpop.trf.xlu0
        %v1434 = vpop.trf.xlu0
        %v1435 = vpop.trf.xlu0
        %v1436 = vpop.trf.xlu0
        %v1437 = vpop.trf.xlu0
        %v1438 = vpop.trf.xlu0
        %v1439 = vpop.trf.xlu0
        %v1440 = vpop.trf.xlu0
        %v1441 = vpop.trf.xlu0
        %v1442 = vpop.trf.xlu0
        %v1443 = vpop.trf.xlu0
        %v1444 = vpop.trf.xlu0
        %1445 = vxpose.xlu0.b32.start [1/16] %v1328, 128
        %1446 = vxpose.xlu0.b32.cont [2/16] %v1331, 128
        %1447 = vxpose.xlu0.b32.cont [3/16] 0.0, 128
        %1448 = vxpose.xlu0.b32.cont [4/16] 0.0, 128
        %1449 = vxpose.xlu0.b32.cont [5/16] 0.0, 128
        %1450 = vxpose.xlu0.b32.cont [6/16] 0.0, 128
        %1451 = vxpose.xlu0.b32.cont [7/16] 0.0, 128
        %1452 = vxpose.xlu0.b32.cont [8/16] 0.0, 128
        %1453 = vxpose.xlu0.b32.cont [9/16] 0.0, 128
        %1454 = vxpose.xlu0.b32.cont [10/16] 0.0, 128
        %1455 = vxpose.xlu0.b32.cont [11/16] 0.0, 128
        %1456 = vxpose.xlu0.b32.cont [12/16] 0.0, 128
        %1457 = vxpose.xlu0.b32.cont [13/16] 0.0, 128
        %1458 = vxpose.xlu0.b32.cont [14/16] 0.0, 128
        %1459 = vxpose.xlu0.b32.cont [15/16] 0.0, 128
        %1460 = vxpose.xlu0.b32.end [16/16] 0.0, 128
        %v1461 = vpop.trf.xlu0
        %v1462 = vpop.trf.xlu0
        %v1463 = vpop.trf.xlu0
        %v1464 = vpop.trf.xlu0
        %v1465 = vpop.trf.xlu0
        %v1466 = vpop.trf.xlu0
        %v1467 = vpop.trf.xlu0
        %v1468 = vpop.trf.xlu0
        %v1469 = vpop.trf.xlu0
        %v1470 = vpop.trf.xlu0
        %v1471 = vpop.trf.xlu0
        %v1472 = vpop.trf.xlu0
        %v1473 = vpop.trf.xlu0
        %v1474 = vpop.trf.xlu0
        %v1475 = vpop.trf.xlu0
        %v1476 = vpop.trf.xlu0
        %1477 = vxpose.xlu0.b32.start [1/16] %v1375, 128
        %1478 = vxpose.xlu0.b32.cont [2/16] %v1378, 128
        %1479 = vxpose.xlu0.b32.cont [3/16] 0.0, 128
        %1480 = vxpose.xlu0.b32.cont [4/16] 0.0, 128
        %1481 = vxpose.xlu0.b32.cont [5/16] 0.0, 128
        %1482 = vxpose.xlu0.b32.cont [6/16] 0.0, 128
        %1483 = vxpose.xlu0.b32.cont [7/16] 0.0, 128
        %1484 = vxpose.xlu0.b32.cont [8/16] 0.0, 128
        %1485 = vxpose.xlu0.b32.cont [9/16] 0.0, 128
        %1486 = vxpose.xlu0.b32.cont [10/16] 0.0, 128
        %1487 = vxpose.xlu0.b32.cont [11/16] 0.0, 128
        %1488 = vxpose.xlu0.b32.cont [12/16] 0.0, 128
        %1489 = vxpose.xlu0.b32.cont [13/16] 0.0, 128
        %1490 = vxpose.xlu0.b32.cont [14/16] 0.0, 128
        %1491 = vxpose.xlu0.b32.cont [15/16] 0.0, 128
        %1492 = vxpose.xlu0.b32.end [16/16] 0.0, 128
        %v1493 = vpop.trf.xlu0
        %v1494 = vpop.trf.xlu0
        %v1495 = vpop.trf.xlu0
        %v1496 = vpop.trf.xlu0
        %v1497 = vpop.trf.xlu0
        %v1498 = vpop.trf.xlu0
        %v1499 = vpop.trf.xlu0
        %v1500 = vpop.trf.xlu0
        %v1501 = vpop.trf.xlu0
        %v1502 = vpop.trf.xlu0
        %v1503 = vpop.trf.xlu0
        %v1504 = vpop.trf.xlu0
        %v1505 = vpop.trf.xlu0
        %v1506 = vpop.trf.xlu0
        %v1507 = vpop.trf.xlu0
        %v1508 = vpop.trf.xlu0
        %v1509 = vcombine.low %v1397, %v1461
        %v1510 = vcombine.high %v1397, %v1461
        %v1512 = vunpack.c.l.s4 1983009808
        %v1513 = vunpack.c.0.s8 %v1512
        %v1514 = vlaneseq
        %v1515 = vshrl.u32 %v1514, 7
        %v1516 = vsub.s32 %v1513, %v1515
        %v1517 = vrot.slane %v1509, %v1516
        %v1519 = vunpack.c.l.s4 1983009808
        %v1520 = vunpack.c.0.s8 %v1519
        %v1521 = vlaneseq
        %v1522 = vshrl.u32 %v1521, 7
        %v1523 = vsub.s32 %v1520, %v1522
        %v1524 = vrot.slane %v1510, %v1523
        %v1525 = vcombine.low %v1429, %v1493
        %v1526 = vcombine.high %v1429, %v1493
        %v1528 = vunpack.c.l.s4 1983009808
        %v1529 = vunpack.c.0.s8 %v1528
        %v1530 = vlaneseq
        %v1531 = vshrl.u32 %v1530, 7
        %v1532 = vsub.s32 %v1529, %v1531
        %v1533 = vrot.slane %v1525, %v1532
        %v1535 = vunpack.c.l.s4 1983009808
        %v1536 = vunpack.c.0.s8 %v1535
        %v1537 = vlaneseq
        %v1538 = vshrl.u32 %v1537, 7
        %v1539 = vsub.s32 %v1536, %v1538
        %v1540 = vrot.slane %v1526, %v1539
        %v1541 = vcombine.low %v1517, %v1533
        %v1542 = vcombine.high %v1517, %v1533
        %v1544 = vunpack.c.l.s4 1934713408
        %v1545 = vunpack.c.0.s8 %v1544
        %v1546 = vlaneseq
        %v1547 = vshrl.u32 %v1546, 7
        %v1548 = vsub.s32 %v1545, %v1547
        %v1549 = vrot.slane %v1541, %v1548
        %v1551 = vunpack.c.l.s4 1934713408
        %v1552 = vunpack.c.0.s8 %v1551
        %v1553 = vlaneseq
        %v1554 = vshrl.u32 %v1553, 7
        %v1555 = vsub.s32 %v1552, %v1554
        %v1556 = vrot.slane %v1542, %v1555
        %v1557 = vcombine.low %v1524, %v1540
        %v1558 = vcombine.high %v1524, %v1540
        %v1560 = vunpack.c.l.s4 1934713408
        %v1561 = vunpack.c.0.s8 %v1560
        %v1562 = vlaneseq
        %v1563 = vshrl.u32 %v1562, 7
        %v1564 = vsub.s32 %v1561, %v1563
        %v1565 = vrot.slane %v1557, %v1564
        %v1567 = vunpack.c.l.s4 1934713408
        %v1568 = vunpack.c.0.s8 %v1567
        %v1569 = vlaneseq
        %v1570 = vshrl.u32 %v1569, 7
        %v1571 = vsub.s32 %v1568, %v1570
        %v1572 = vrot.slane %v1558, %v1571
        %v1573 = vcombine.high %v1549, 0.0
        %v1574 = vcombine.high %v1556, 0.0
        %v1575 = vcombine.high %v1565, 0.0
        %v1576 = vcombine.high %v1572, 0.0
        %v1577 = vcombine.low %v1398, %v1462
        %v1578 = vcombine.high %v1398, %v1462
        %v1580 = vunpack.c.l.s4 1983009808
        %v1581 = vunpack.c.0.s8 %v1580
        %v1582 = vlaneseq
        %v1583 = vshrl.u32 %v1582, 7
        %v1584 = vsub.s32 %v1581, %v1583
        %v1585 = vrot.slane %v1577, %v1584
        %v1587 = vunpack.c.l.s4 1983009808
        %v1588 = vunpack.c.0.s8 %v1587
        %v1589 = vlaneseq
        %v1590 = vshrl.u32 %v1589, 7
        %v1591 = vsub.s32 %v1588, %v1590
        %v1592 = vrot.slane %v1578, %v1591
        %v1593 = vcombine.low %v1430, %v1494
        %v1594 = vcombine.high %v1430, %v1494
        %v1596 = vunpack.c.l.s4 1983009808
        %v1597 = vunpack.c.0.s8 %v1596
        %v1598 = vlaneseq
        %v1599 = vshrl.u32 %v1598, 7
        %v1600 = vsub.s32 %v1597, %v1599
        %v1601 = vrot.slane %v1593, %v1600
        %v1603 = vunpack.c.l.s4 1983009808
        %v1604 = vunpack.c.0.s8 %v1603
        %v1605 = vlaneseq
        %v1606 = vshrl.u32 %v1605, 7
        %v1607 = vsub.s32 %v1604, %v1606
        %v1608 = vrot.slane %v1594, %v1607
        %v1609 = vcombine.low %v1585, %v1601
        %v1610 = vcombine.high %v1585, %v1601
        %v1612 = vunpack.c.l.s4 1934713408
        %v1613 = vunpack.c.0.s8 %v1612
        %v1614 = vlaneseq
        %v1615 = vshrl.u32 %v1614, 7
        %v1616 = vsub.s32 %v1613, %v1615
        %v1617 = vrot.slane %v1609, %v1616
        %v1619 = vunpack.c.l.s4 1934713408
        %v1620 = vunpack.c.0.s8 %v1619
        %v1621 = vlaneseq
        %v1622 = vshrl.u32 %v1621, 7
        %v1623 = vsub.s32 %v1620, %v1622
        %v1624 = vrot.slane %v1610, %v1623
        %v1625 = vcombine.low %v1592, %v1608
        %v1626 = vcombine.high %v1592, %v1608
        %v1628 = vunpack.c.l.s4 1934713408
        %v1629 = vunpack.c.0.s8 %v1628
        %v1630 = vlaneseq
        %v1631 = vshrl.u32 %v1630, 7
        %v1632 = vsub.s32 %v1629, %v1631
        %v1633 = vrot.slane %v1625, %v1632
        %v1635 = vunpack.c.l.s4 1934713408
        %v1636 = vunpack.c.0.s8 %v1635
        %v1637 = vlaneseq
        %v1638 = vshrl.u32 %v1637, 7
        %v1639 = vsub.s32 %v1636, %v1638
        %v1640 = vrot.slane %v1626, %v1639
        %v1641 = vcombine.high %v1617, 0.0
        %v1642 = vcombine.high %v1624, 0.0
        %v1643 = vcombine.high %v1633, 0.0
        %v1644 = vcombine.high %v1640, 0.0
        %v1645 = vcombine.low %v1549, %v1556
        %v1647 = vunpack.c.l.s4 1983009808
        %v1648 = vunpack.c.0.s8 %v1647
        %v1649 = vlaneseq
        %v1650 = vshrl.u32 %v1649, 7
        %v1651 = vsub.s32 %v1648, %v1650
        %v1652 = vrot.slane %v1645, %v1651
        %v1653 = vcombine.low %v1573, %v1574
        %v1655 = vunpack.c.l.s4 1983009808
        %v1656 = vunpack.c.0.s8 %v1655
        %v1657 = vlaneseq
        %v1658 = vshrl.u32 %v1657, 7
        %v1659 = vsub.s32 %v1656, %v1658
        %v1660 = vrot.slane %v1653, %v1659
        %v1661 = vcombine.low %v1565, %v1572
        %v1663 = vunpack.c.l.s4 1983009808
        %v1664 = vunpack.c.0.s8 %v1663
        %v1665 = vlaneseq
        %v1666 = vshrl.u32 %v1665, 7
        %v1667 = vsub.s32 %v1664, %v1666
        %v1668 = vrot.slane %v1661, %v1667
        %v1669 = vcombine.low %v1575, %v1576
        %v1671 = vunpack.c.l.s4 1983009808
        %v1672 = vunpack.c.0.s8 %v1671
        %v1673 = vlaneseq
        %v1674 = vshrl.u32 %v1673, 7
        %v1675 = vsub.s32 %v1672, %v1674
        %v1676 = vrot.slane %v1669, %v1675
        %v1677 = vcombine.low %v1652, %v1660
        %v1678 = vcombine.high %v1652, %v1660
        %v1680 = vunpack.c.l.s4 1934713408
        %v1681 = vunpack.c.0.s8 %v1680
        %v1682 = vlaneseq
        %v1683 = vshrl.u32 %v1682, 7
        %v1684 = vsub.s32 %v1681, %v1683
        %v1685 = vrot.slane %v1677, %v1684
        %v1687 = vunpack.c.l.s4 1934713408
        %v1688 = vunpack.c.0.s8 %v1687
        %v1689 = vlaneseq
        %v1690 = vshrl.u32 %v1689, 7
        %v1691 = vsub.s32 %v1688, %v1690
        %v1692 = vrot.slane %v1678, %v1691
        %v1693 = vcombine.low %v1668, %v1676
        %v1694 = vcombine.high %v1668, %v1676
        %v1696 = vunpack.c.l.s4 1934713408
        %v1697 = vunpack.c.0.s8 %v1696
        %v1698 = vlaneseq
        %v1699 = vshrl.u32 %v1698, 7
        %v1700 = vsub.s32 %v1697, %v1699
        %v1701 = vrot.slane %v1693, %v1700
        %v1703 = vunpack.c.l.s4 1934713408
        %v1704 = vunpack.c.0.s8 %v1703
        %v1705 = vlaneseq
        %v1706 = vshrl.u32 %v1705, 7
        %v1707 = vsub.s32 %v1704, %v1706
        %v1708 = vrot.slane %v1694, %v1707
        %v1709 = vcombine.low %v1685, %v1701
        %v1710 = vcombine.high %v1685, %v1701
        %v1711 = vcombine.low %v1692, %v1708
        %v1712 = vcombine.high %v1692, %v1708
        %v1713 = vcombine.low %v1617, %v1624
        %v1715 = vunpack.c.l.s4 1983009808
        %v1716 = vunpack.c.0.s8 %v1715
        %v1717 = vlaneseq
        %v1718 = vshrl.u32 %v1717, 7
        %v1719 = vsub.s32 %v1716, %v1718
        %v1720 = vrot.slane %v1713, %v1719
        %v1721 = vcombine.low %v1641, %v1642
        %v1723 = vunpack.c.l.s4 1983009808
        %v1724 = vunpack.c.0.s8 %v1723
        %v1725 = vlaneseq
        %v1726 = vshrl.u32 %v1725, 7
        %v1727 = vsub.s32 %v1724, %v1726
        %v1728 = vrot.slane %v1721, %v1727
        %v1729 = vcombine.low %v1633, %v1640
        %v1731 = vunpack.c.l.s4 1983009808
        %v1732 = vunpack.c.0.s8 %v1731
        %v1733 = vlaneseq
        %v1734 = vshrl.u32 %v1733, 7
        %v1735 = vsub.s32 %v1732, %v1734
        %v1736 = vrot.slane %v1729, %v1735
        %v1737 = vcombine.low %v1643, %v1644
        %v1739 = vunpack.c.l.s4 1983009808
        %v1740 = vunpack.c.0.s8 %v1739
        %v1741 = vlaneseq
        %v1742 = vshrl.u32 %v1741, 7
        %v1743 = vsub.s32 %v1740, %v1742
        %v1744 = vrot.slane %v1737, %v1743
        %v1745 = vcombine.low %v1720, %v1728
        %v1746 = vcombine.high %v1720, %v1728
        %v1748 = vunpack.c.l.s4 1934713408
        %v1749 = vunpack.c.0.s8 %v1748
        %v1750 = vlaneseq
        %v1751 = vshrl.u32 %v1750, 7
        %v1752 = vsub.s32 %v1749, %v1751
        %v1753 = vrot.slane %v1745, %v1752
        %v1755 = vunpack.c.l.s4 1934713408
        %v1756 = vunpack.c.0.s8 %v1755
        %v1757 = vlaneseq
        %v1758 = vshrl.u32 %v1757, 7
        %v1759 = vsub.s32 %v1756, %v1758
        %v1760 = vrot.slane %v1746, %v1759
        %v1761 = vcombine.low %v1736, %v1744
        %v1762 = vcombine.high %v1736, %v1744
        %v1764 = vunpack.c.l.s4 1934713408
        %v1765 = vunpack.c.0.s8 %v1764
        %v1766 = vlaneseq
        %v1767 = vshrl.u32 %v1766, 7
        %v1768 = vsub.s32 %v1765, %v1767
        %v1769 = vrot.slane %v1761, %v1768
        %v1771 = vunpack.c.l.s4 1934713408
        %v1772 = vunpack.c.0.s8 %v1771
        %v1773 = vlaneseq
        %v1774 = vshrl.u32 %v1773, 7
        %v1775 = vsub.s32 %v1772, %v1774
        %v1776 = vrot.slane %v1762, %v1775
        %v1777 = vcombine.low %v1753, %v1769
        %v1778 = vcombine.high %v1753, %v1769
        %v1779 = vcombine.low %v1760, %v1776
        %v1780 = vcombine.high %v1760, %v1776
        %1783 = vrot.lane.b32.xlu0 %v1710, 16
        %v1784 = vpop.permute.xlu0 %1783
        %1785 = vrot.lane.b32.xlu0 %v1778, 16
        %v1786 = vpop.permute.xlu0 %1785
        %1791 = vrot.lane.b32.xlu0 %v1711, 32
        %v1792 = vpop.permute.xlu0 %1791
        %1793 = vrot.lane.b32.xlu0 %v1779, 32
        %v1794 = vpop.permute.xlu0 %1793
        %1799 = vrot.lane.b32.xlu0 %v1712, 48
        %v1800 = vpop.permute.xlu0 %1799
        %1801 = vrot.lane.b32.xlu0 %v1780, 48
        %v1802 = vpop.permute.xlu0 %1801
        %v1805 = vsel %vm860, %v1709, %v1784
        %v1806 = vsel %vm860, %v1777, %v1786
        %vm1807 = vcmask 261120
        %v1808 = vsel %vm1807, %v1805, %v1792
        %v1809 = vsel %vm1807, %v1806, %v1794
        %vm1810 = vcmask 392192
        %v1811 = vsel %vm1810, %v1808, %v1800
        %v1812 = vsel %vm1810, %v1809, %v1802
        %v1813 = vpack.c.bf16 %v1812, %v1811
        %v1814 = vld [vmem:[#allocation5] sm:$0xf]
        %v1815 = vld [vmem:[#allocation5 + $0x4] sm:$0xf]
        %v1816 = vld [vmem:[#allocation5 + $0x8] sm:$0xf]
        %v1817 = vld [vmem:[#allocation5 + $0xc] sm:$0xf]
        %v1818 = vld [vmem:[#allocation5 + $0x10] sm:$0xf]
        %v1819 = vld [vmem:[#allocation5 + $0x14] sm:$0xf]
        %v1820 = vld [vmem:[#allocation5 + $0x18] sm:$0xf]
        %v1821 = vld [vmem:[#allocation5 + $0x1c] sm:$0xf]
        %v1822 = vld [vmem:[%s7] sm:$0x1]
        %v1824 = vlaneseq
        %v1825 = vshrl.u32 %v1824, 7
        %v1826 = vsub.s32 0, %v1825
        %v1827 = vrot.slane %v1822, %v1826
        %v1837 = vunpack.c.l.b16 %v1814
        %v1838 = vunpack.c.l.b16 %v1815
        %v1839 = vunpack.c.l.b16 %v1816
        %v1840 = vunpack.c.l.b16 %v1817
        %v1841 = vunpack.c.l.b16 %v1818
        %v1842 = vunpack.c.l.b16 %v1819
        %v1843 = vunpack.c.l.b16 %v1820
        %v1844 = vunpack.c.l.b16 %v1821
        %v1845 = vpack.c.b16 %v1838, %v1837
        %v1846 = vpack.c.b16 %v1840, %v1839
        %v1847 = vpack.c.b16 %v1842, %v1841
        %v1848 = vpack.c.b16 %v1844, %v1843
        %v1854 = vsel %vm499, %v1813, 0
        %1856 = vmatprep.subr.bf16.mxu0 0
        %1857 = vmatpush1.bf16.msra.mxu0 0
        %1858 = vmatprep.subr.bf16.mxu0 0
        %1859 = vmatpush1.bf16.msra.mxu0 0
        %1860 = vmatprep.subr.bf16.mxu0 0
        %1861 = vmatpush1.bf16.msra.mxu0 0
        %1862 = vmatprep.subr.bf16.mxu0 0
        %1863 = vmatpush1.bf16.msra.mxu0 0
        %1864 = vmatprep.subr.bf16.mxu0 0
        %1865 = vmatpush1.bf16.msra.mxu0 %v1848
        %1866 = vmatprep.subr.bf16.mxu0 0
        %1867 = vmatpush1.bf16.msra.mxu0 %v1847
        %1868 = vmatprep.subr.bf16.mxu0 0
        %1869 = vmatpush1.bf16.msra.mxu0 %v1846
        %1870 = vmatprep.subr.bf16.mxu0 0
        %1871 = vmatpush1.bf16.msra.mxu0 %v1845
        %1872 = vmatprep.subr.bf16.mxu0 0
        %1873 = vmatpush2.bf16.msra.mxu0 0
        %1874 = vmatprep.subr.bf16.mxu0 0
        %1875 = vmatpush2.bf16.msra.mxu0 0
        %1876 = vmatprep.subr.bf16.mxu0 0
        %1877 = vmatpush2.bf16.msra.mxu0 0
        %1878 = vmatprep.subr.bf16.mxu0 0
        %1879 = vmatpush2.bf16.msra.mxu0 0
        %1880 = vmatprep.subr.bf16.mxu0 0
        %1881 = vmatpush2.bf16.msra.mxu0 0
        %1882 = vmatprep.subr.bf16.mxu0 0
        %1883 = vmatpush2.bf16.msra.mxu0 0
        %1884 = vmatprep.subr.bf16.mxu0 0
        %1885 = vmatpush2.bf16.msra.mxu0 0
        %1886 = vmatprep.subr.bf16.mxu0 0
        %1887 = vmatpush2.bf16.msra.mxu0 0
        %1888 = vmatprep.mubr.bf16.mxu0 0
        %1889 = vmatmul.mubr.bf16.gmra.mxu0 %v1854
        %v1890 = vpop.f32.mrf.mxu0
        %v1891 = vadd.f32 %v1827, %v1890
        %v1892 = vpop.f32.mrf.mxu0
        %v1893 = vpop.f32.mrf.mxu0
        %v1894 = vadd.f32 %v1827, %v1893
        %v1895 = vpop.f32.mrf.mxu0
        %1896 = vdwg.mxu0
        %v1897 = vadd.f32 %v495, %v1891
        %v1898 = vadd.f32 %v496, %v1894
        %v1899 = vld [vmem:[%s8] sm:$0x1]
        %v1900 = vld [vmem:[%s9] sm:$0x1]
        %v1901 = vsel %vm499, %v1897, 0.0
        %1902 = vadd.xlane.f32.xlu0 %v1901
        %v1903 = vpop.xlane.xlu0 %1902
        %v1904 = vsel %vm499, %v1898, 0.0
        %1905 = vadd.xlane.f32.xlu0 %v1904
        %v1906 = vpop.xlane.xlu0 %1905
        %v1907 = vmul.f32 %v1903, %v506
        %v1908 = vmul.f32 %v1906, %v506
        %v1909 = vsub.f32 %v1897, %v1907
        %v1910 = vsub.f32 %v1898, %v1908
        %v1911 = vmul.f32 %v1909, %v1909
        %v1912 = vmul.f32 %v1910, %v1910
        %v1913 = vsel %vm499, %v1911, 0.0
        %1914 = vadd.xlane.f32.xlu0 %v1913
        %v1915 = vpop.xlane.xlu0 %1914
        %v1916 = vsel %vm499, %v1912, 0.0
        %1917 = vadd.xlane.f32.xlu0 %v1916
        %v1918 = vpop.xlane.xlu0 %1917
        %v1919 = vmul.f32 %v1915, %v506
        %v1920 = vmul.f32 %v1918, %v506
        %v1921 = vadd.f32 %v1919, 1e-05
        %v1922 = vadd.f32 %v1920, 1e-05
        %v1923 = vrsqrt.pop %v1921
        %v1924 = vrsqrt.pop %v1922
        %v1925 = vmul.f32 %v1909, %v1923
        %v1926 = vmul.f32 %v1910, %v1924
        %v1928 = vlaneseq
        %v1929 = vshrl.u32 %v1928, 7
        %v1930 = vsub.s32 0, %v1929
        %v1931 = vrot.slane %v1899, %v1930
        %v1933 = vmul.f32 %v1925, %v1931
        %v1934 = vmul.f32 %v1926, %v1931
        %v1936 = vlaneseq
        %v1937 = vshrl.u32 %v1936, 7
        %v1938 = vsub.s32 0, %v1937
        %v1939 = vrot.slane %v1900, %v1938
        %v1941 = vadd.f32 %v1933, %v1939
        %v1942 = vadd.f32 %v1934, %v1939
        %v1943 = vpack.c.bf16 %v1942, %v1941
        %v1944 = vld [vmem:[%s10] sm:$0xff]
        %v1945 = vld [vmem:[%s10 + $0x8] sm:$0xff]
        %v1946 = vld [vmem:[%s10 + $0x10] sm:$0xff]
        %v1947 = vld [vmem:[%s10 + $0x18] sm:$0xff]
        %v1948 = vld [vmem:[%s10 + $0x20] sm:$0xff]
        %v1949 = vld [vmem:[%s10 + $0x28] sm:$0xff]
        %v1950 = vld [vmem:[%s10 + $0x30] sm:$0xff]
        %v1951 = vld [vmem:[%s10 + $0x38] sm:$0xff]
        %v1952 = vld [vmem:[%s11] sm:$0x3]
        %v1954 = vlaneseq
        %v1955 = vshrl.u32 %v1954, 7
        %v1956 = vsub.s32 0, %v1955
        %v1957 = vrot.slane %v1952, %v1956
        %v1958 = vlaneseq
        %v1959 = vshrl.u32 %v1958, 7
        %v1960 = vsub.s32 1, %v1959
        %v1961 = vrot.slane %v1952, %v1960
        %v1972 = vunpack.c.l.b16 %v1944
        %v1973 = vunpack.c.h.b16 %v1944
        %v1974 = vunpack.c.l.b16 %v1945
        %v1975 = vunpack.c.h.b16 %v1945
        %v1976 = vunpack.c.l.b16 %v1946
        %v1977 = vunpack.c.h.b16 %v1946
        %v1978 = vunpack.c.l.b16 %v1947
        %v1979 = vunpack.c.h.b16 %v1947
        %v1980 = vunpack.c.l.b16 %v1948
        %v1981 = vunpack.c.h.b16 %v1948
        %v1982 = vunpack.c.l.b16 %v1949
        %v1983 = vunpack.c.h.b16 %v1949
        %v1984 = vunpack.c.l.b16 %v1950
        %v1985 = vunpack.c.h.b16 %v1950
        %v1986 = vunpack.c.l.b16 %v1951
        %v1987 = vunpack.c.h.b16 %v1951
        %v1988 = vpack.c.b16 %v1974, %v1972
        %v1989 = vpack.c.b16 %v1975, %v1973
        %v1990 = vpack.c.b16 %v1978, %v1976
        %v1991 = vpack.c.b16 %v1979, %v1977
        %v1992 = vpack.c.b16 %v1982, %v1980
        %v1993 = vpack.c.b16 %v1983, %v1981
        %v1994 = vpack.c.b16 %v1986, %v1984
        %v1995 = vpack.c.b16 %v1987, %v1985
        %v2005 = vsel %vm499, %v1943, 0
        %2007 = vmatprep.subr.bf16.mxu0 0
        %2008 = vmatpush1.bf16.msra.mxu0 0
        %2009 = vmatprep.subr.bf16.mxu0 0
        %2010 = vmatpush1.bf16.msra.mxu0 0
        %2011 = vmatprep.subr.bf16.mxu0 0
        %2012 = vmatpush1.bf16.msra.mxu0 0
        %2013 = vmatprep.subr.bf16.mxu0 0
        %2014 = vmatpush1.bf16.msra.mxu0 0
        %2015 = vmatprep.subr.bf16.mxu0 %v1995
        %2016 = vmatpush1.bf16.msra.mxu0 %v1994
        %2017 = vmatprep.subr.bf16.mxu0 %v1993
        %2018 = vmatpush1.bf16.msra.mxu0 %v1992
        %2019 = vmatprep.subr.bf16.mxu0 %v1991
        %2020 = vmatpush1.bf16.msra.mxu0 %v1990
        %2021 = vmatprep.subr.bf16.mxu0 %v1989
        %2022 = vmatpush1.bf16.msra.mxu0 %v1988
        %2023 = vmatprep.subr.bf16.mxu0 0
        %2024 = vmatpush2.bf16.msra.mxu0 0
        %2025 = vmatprep.subr.bf16.mxu0 0
        %2026 = vmatpush2.bf16.msra.mxu0 0
        %2027 = vmatprep.subr.bf16.mxu0 0
        %2028 = vmatpush2.bf16.msra.mxu0 0
        %2029 = vmatprep.subr.bf16.mxu0 0
        %2030 = vmatpush2.bf16.msra.mxu0 0
        %2031 = vmatprep.subr.bf16.mxu0 0
        %2032 = vmatpush2.bf16.msra.mxu0 0
        %2033 = vmatprep.subr.bf16.mxu0 0
        %2034 = vmatpush2.bf16.msra.mxu0 0
        %2035 = vmatprep.subr.bf16.mxu0 0
        %2036 = vmatpush2.bf16.msra.mxu0 0
        %2037 = vmatprep.subr.bf16.mxu0 0
        %2038 = vmatpush2.bf16.msra.mxu0 0
        %2039 = vmatprep.mubr.bf16.mxu0 0
        %2040 = vmatmul.mubr.bf16.gmra.mxu0 %v2005
        %v2041 = vpop.f32.mrf.mxu0
        %v2042 = vadd.f32 %v1957, %v2041
        %v2043 = vpop.f32.mrf.mxu0
        %v2044 = vadd.f32 %v1961, %v2043
        %v2045 = vpop.f32.mrf.mxu0
        %v2046 = vadd.f32 %v1957, %v2045
        %v2047 = vpop.f32.mrf.mxu0
        %v2048 = vadd.f32 %v1961, %v2047
        %2049 = vdwg.mxu0
        %v2050 = vmul.f32 %v2042, 0.5
        %v2051 = vmul.f32 %v2044, 0.5
        %v2052 = vmul.f32 %v2046, 0.5
        %v2053 = vmul.f32 %v2048, 0.5
        %v2054 = vmul.f32 %v2042, 0.70710677
        %v2055 = vmul.f32 %v2044, 0.70710677
        %v2056 = vmul.f32 %v2046, 0.70710677
        %v2057 = vmul.f32 %v2048, 0.70710677
        %v2058 = verf.f32.pop %v2054
        %v2059 = verf.f32.pop %v2055
        %v2060 = verf.f32.pop %v2056
        %v2061 = verf.f32.pop %v2057
        %v2062 = vadd.f32 %v2058, 1.0
        %v2063 = vadd.f32 %v2059, 1.0
        %v2064 = vadd.f32 %v2060, 1.0
        %v2065 = vadd.f32 %v2061, 1.0
        %v2066 = vmul.f32 %v2050, %v2062
        %v2067 = vmul.f32 %v2051, %v2063
        %v2068 = vmul.f32 %v2052, %v2064
        %v2069 = vmul.f32 %v2053, %v2065
        %v2070 = vpack.c.bf16 %v2068, %v2066
        %v2071 = vpack.c.bf16 %v2069, %v2067
        %v2072 = vld [vmem:[%s12] sm:$0xf]
        %v2073 = vld [vmem:[%s12 + $0x4] sm:$0xf]
        %v2074 = vld [vmem:[%s12 + $0x8] sm:$0xf]
        %v2075 = vld [vmem:[%s12 + $0xc] sm:$0xf]
        %v2076 = vld [vmem:[%s12 + $0x10] sm:$0xf]
        %v2077 = vld [vmem:[%s12 + $0x14] sm:$0xf]
        %v2078 = vld [vmem:[%s12 + $0x18] sm:$0xf]
        %v2079 = vld [vmem:[%s12 + $0x1c] sm:$0xf]
        %v2080 = vld [vmem:[%s12 + $0x20] sm:$0xf]
        %v2081 = vld [vmem:[%s12 + $0x24] sm:$0xf]
        %v2082 = vld [vmem:[%s12 + $0x28] sm:$0xf]
        %v2083 = vld [vmem:[%s12 + $0x2c] sm:$0xf]
        %v2084 = vld [vmem:[%s12 + $0x30] sm:$0xf]
        %v2085 = vld [vmem:[%s12 + $0x34] sm:$0xf]
        %v2086 = vld [vmem:[%s12 + $0x38] sm:$0xf]
        %v2087 = vld [vmem:[%s12 + $0x3c] sm:$0xf]
        %v2088 = vld [vmem:[%s12 + $0x40] sm:$0xf]
        %v2089 = vld [vmem:[%s12 + $0x44] sm:$0xf]
        %v2090 = vld [vmem:[%s12 + $0x48] sm:$0xf]
        %v2091 = vld [vmem:[%s12 + $0x4c] sm:$0xf]
        %v2092 = vld [vmem:[%s12 + $0x50] sm:$0xf]
        %v2093 = vld [vmem:[%s12 + $0x54] sm:$0xf]
        %v2094 = vld [vmem:[%s12 + $0x58] sm:$0xf]
        %v2095 = vld [vmem:[%s12 + $0x5c] sm:$0xf]
        %v2096 = vld [vmem:[%s12 + $0x60] sm:$0xf]
        %v2097 = vld [vmem:[%s12 + $0x64] sm:$0xf]
        %v2098 = vld [vmem:[%s12 + $0x68] sm:$0xf]
        %v2099 = vld [vmem:[%s12 + $0x6c] sm:$0xf]
        %v2100 = vld [vmem:[%s12 + $0x70] sm:$0xf]
        %v2101 = vld [vmem:[%s12 + $0x74] sm:$0xf]
        %v2102 = vld [vmem:[%s12 + $0x78] sm:$0xf]
        %v2103 = vld [vmem:[%s12 + $0x7c] sm:$0xf]
        %v2104 = vld [vmem:[%s13] sm:$0x1]
        %v2106 = vlaneseq
        %v2107 = vshrl.u32 %v2106, 7
        %v2108 = vsub.s32 0, %v2107
        %v2109 = vrot.slane %v2104, %v2108
        %v2143 = vunpack.c.l.b16 %v2072
        %v2144 = vunpack.c.l.b16 %v2073
        %v2145 = vunpack.c.l.b16 %v2074
        %v2146 = vunpack.c.l.b16 %v2075
        %v2147 = vunpack.c.l.b16 %v2076
        %v2148 = vunpack.c.l.b16 %v2077
        %v2149 = vunpack.c.l.b16 %v2078
        %v2150 = vunpack.c.l.b16 %v2079
        %v2151 = vunpack.c.l.b16 %v2080
        %v2152 = vunpack.c.l.b16 %v2081
        %v2153 = vunpack.c.l.b16 %v2082
        %v2154 = vunpack.c.l.b16 %v2083
        %v2155 = vunpack.c.l.b16 %v2084
        %v2156 = vunpack.c.l.b16 %v2085
        %v2157 = vunpack.c.l.b16 %v2086
        %v2158 = vunpack.c.l.b16 %v2087
        %v2159 = vunpack.c.l.b16 %v2088
        %v2160 = vunpack.c.l.b16 %v2089
        %v2161 = vunpack.c.l.b16 %v2090
        %v2162 = vunpack.c.l.b16 %v2091
        %v2163 = vunpack.c.l.b16 %v2092
        %v2164 = vunpack.c.l.b16 %v2093
        %v2165 = vunpack.c.l.b16 %v2094
        %v2166 = vunpack.c.l.b16 %v2095
        %v2167 = vunpack.c.l.b16 %v2096
        %v2168 = vunpack.c.l.b16 %v2097
        %v2169 = vunpack.c.l.b16 %v2098
        %v2170 = vunpack.c.l.b16 %v2099
        %v2171 = vunpack.c.l.b16 %v2100
        %v2172 = vunpack.c.l.b16 %v2101
        %v2173 = vunpack.c.l.b16 %v2102
        %v2174 = vunpack.c.l.b16 %v2103
        %v2175 = vpack.c.b16 %v2144, %v2143
        %v2176 = vpack.c.b16 %v2146, %v2145
        %v2177 = vpack.c.b16 %v2148, %v2147
        %v2178 = vpack.c.b16 %v2150, %v2149
        %v2179 = vpack.c.b16 %v2152, %v2151
        %v2180 = vpack.c.b16 %v2154, %v2153
        %v2181 = vpack.c.b16 %v2156, %v2155
        %v2182 = vpack.c.b16 %v2158, %v2157
        %v2183 = vpack.c.b16 %v2160, %v2159
        %v2184 = vpack.c.b16 %v2162, %v2161
        %v2185 = vpack.c.b16 %v2164, %v2163
        %v2186 = vpack.c.b16 %v2166, %v2165
        %v2187 = vpack.c.b16 %v2168, %v2167
        %v2188 = vpack.c.b16 %v2170, %v2169
        %v2189 = vpack.c.b16 %v2172, %v2171
        %v2190 = vpack.c.b16 %v2174, %v2173
        %2207 = vmatprep.subr.bf16.mxu0 0
        %2208 = vmatpush1.bf16.msra.mxu0 %v2182
        %2209 = vmatprep.subr.bf16.mxu0 0
        %2210 = vmatpush1.bf16.msra.mxu0 %v2181
        %2211 = vmatprep.subr.bf16.mxu0 0
        %2212 = vmatpush1.bf16.msra.mxu0 %v2180
        %2213 = vmatprep.subr.bf16.mxu0 0
        %2214 = vmatpush1.bf16.msra.mxu0 %v2179
        %2215 = vmatprep.subr.bf16.mxu0 0
        %2216 = vmatpush1.bf16.msra.mxu0 %v2178
        %2217 = vmatprep.subr.bf16.mxu0 0
        %2218 = vmatpush1.bf16.msra.mxu0 %v2177
        %2219 = vmatprep.subr.bf16.mxu0 0
        %2220 = vmatpush1.bf16.msra.mxu0 %v2176
        %2221 = vmatprep.subr.bf16.mxu0 0
        %2222 = vmatpush1.bf16.msra.mxu0 %v2175
        %2223 = vmatprep.subr.bf16.mxu0 0
        %2224 = vmatpush2.bf16.msra.mxu0 %v2190
        %2225 = vmatprep.subr.bf16.mxu0 0
        %2226 = vmatpush2.bf16.msra.mxu0 %v2189
        %2227 = vmatprep.subr.bf16.mxu0 0
        %2228 = vmatpush2.bf16.msra.mxu0 %v2188
        %2229 = vmatprep.subr.bf16.mxu0 0
        %2230 = vmatpush2.bf16.msra.mxu0 %v2187
        %2231 = vmatprep.subr.bf16.mxu0 0
        %2232 = vmatpush2.bf16.msra.mxu0 %v2186
        %2233 = vmatprep.subr.bf16.mxu0 0
        %2234 = vmatpush2.bf16.msra.mxu0 %v2185
        %2235 = vmatprep.subr.bf16.mxu0 0
        %2236 = vmatpush2.bf16.msra.mxu0 %v2184
        %2237 = vmatprep.subr.bf16.mxu0 0
        %2238 = vmatpush2.bf16.msra.mxu0 %v2183
        %2239 = vmatprep.mubr.bf16.mxu0 %v2071
        %2240 = vmatmul.mubr.bf16.gmra.mxu0 %v2070
        %v2241 = vpop.f32.mrf.mxu0
        %v2242 = vadd.f32 %v2109, %v2241
        %v2243 = vpop.f32.mrf.mxu0
        %v2244 = vpop.f32.mrf.mxu0
        %v2245 = vadd.f32 %v2109, %v2244
        %v2246 = vpop.f32.mrf.mxu0
        %2247 = vdwg.mxu0
        %v2248 = vadd.f32 %v1897, %v2242
        %v2249 = vadd.f32 %v1898, %v2245
        %2250 = vst.msk [vmem:[%s488] sm:$0xff] %vm499, %v2248
        %2251 = vst.msk [vmem:[%s488 + $0x8] sm:$0xff] %vm499, %v2249
        %s2252 = sand.u32 %s337, 1
        %s2253 = scalar_lea.sflag [#allocation4], %s2252
        %s2254 = sand.u32 %s337, 1
        %s2255 = smul.addr %s2254, 16
        %s2256 = scalar_lea.vmem [#allocation7], %s2255
        // Predicated region
        $region85: #{tpu_custom_call.1} parent=75 // pred_check
          %p2257 = pneg %p347
        $region86: #{tpu_custom_call.1} parent=75 // pred_check_branch
          %2259 = sbr.rel (%p2257) target = $region88
        $region87: #{tpu_custom_call.1} parent=75 // pred_region
          %s2261 = ssub.s32 256, 256
          %2262 = vsyncadd %s2253, %s2261
          %s2263 = smul.addr %s30, 2
          %s2264 = smul.addr %s2263, 128
          %s2265 = scalar_lea.hbm %s14, %s2264
          %s2266 = sshll.u32 %s2256, 4
          %s2267 = int_to_ptr.vmem [resolvable:$true] %s2266
          %2272 = dma.vmem_to_hbm [thread:$0]  %s2267, 256, %s2265, %s2253, 128, 128, 8
        $region88: #{tpu_custom_call.1} parent=75 // pred_fallthru
          _
      $region76: #{tpu_custom_call.1} parent=5 // pred_fallthru
        _
      %p2273 = scmp.le.s32.totalorder 2, %s25
      // Predicated region
      $region89: #{tpu_custom_call.1} parent=5 // pred_check
        %p2274 = pneg %p2273
      $region90: #{tpu_custom_call.1} parent=5 // pred_check_branch
        %2276 = sbr.rel (%p2274) target = $region92
      $region91: #{tpu_custom_call.1} parent=5 // pred_region
        %s2277 = ssub.s32 %s25, 2
        // Predicated region
        $region93: #{tpu_custom_call.1} parent=91 // pred_check
          %p2278 = pneg %p353
        $region94: #{tpu_custom_call.1} parent=91 // pred_check_branch
          %2280 = sbr.rel (%p2278) target = $region96
        $region95: #{tpu_custom_call.1} parent=91 // pred_region
          %s2281 = sand.u32 %s338, 1
          %s2282 = scalar_lea.sflag [#allocation4], %s2281
          %s2283 = sand.u32 %s338, 1
          %s2284 = smul.addr %s2283, 16
          %s2285 = scalar_lea.vmem [#allocation7], %s2284
          %2286 = dma.done %s2282, 256
        $region96: #{tpu_custom_call.1} parent=91 // pred_fallthru
          _
      $region92: #{tpu_custom_call.1} parent=5 // pred_fallthru
        _
    $region6: #{tpu_custom_call.1} parent=1 // loop_footer
      %s29 = sadd.s32 1, %s25
    $region7: #{tpu_custom_call.1} parent=1 // loop_footer_branch
      %24 = sbr.rel target = $region3
    $region8: #{tpu_custom_call.1} parent=1 // loop_exit
      _
    %2287 = vsyncpa [#allocation3], 1
    %s2288 = scalar_lea.sflag [#allocation3], 1
    %2289 = vsyncpa %s2288, 1
    %2290 = vsyncpa [#allocation6], 1
    %2291 = vsyncpa [#allocation4], 1
    %s2292 = scalar_lea.sflag [#allocation4], 1
    %2293 = vsyncpa %s2292, 1

</llo_original>
